<compile_context>
chip_gen: v7x
topology: tpu7x:2x2x1
jax: 0.10.0
libtpu: 0.0.40
codegen_flags: <defaults>
</compile_context>

<pallas_src>
import functools

import jax
import jax.numpy as jnp
from jax import lax
from jax.experimental import pallas as pl
from jax.experimental.pallas import tpu as pltpu

_NEG_BIG = -1e30  # finite "masked" score: avoids -inf - -inf = NaN on fully-masked rows


def _layer_norm(z, gamma, beta, eps=1e-5):
    mu = jnp.mean(z, axis=-1, keepdims=True)
    var = jnp.mean((z - mu) ** 2, axis=-1, keepdims=True)
    return (z - mu) * lax.rsqrt(var + eps) * gamma + beta


def block_kernel(x_ref,
                 ln1g_ref, ln1b_ref,
                 wqkv_ref,                 # (C, 3C) bf16, Wq columns pre-scaled by C**-0.5
                 wproj_ref, bproj_ref,
                 ln2g_ref, ln2b_ref,
                 w1_ref, b1_ref, w2_ref, b2_ref,
                 o_ref,
                 k_scr, v_scr,
                 *, n_head, q_tile):
    C = x_ref.shape[-1]
    hs = C // n_head
    qt = pl.program_id(1)
    row0 = pl.multiple_of(qt * q_tile, q_tile)

    # ---- Per-tile LN1 + fused QKV (no full-sequence spike, no Q scratch). ----
    x_tile = x_ref[0]                                                      # (tq, C) f32
    h1 = _layer_norm(x_tile, ln1g_ref[0], ln1b_ref[0])
    qkv = jnp.dot(h1.astype(jnp.bfloat16), wqkv_ref[...],
                  preferred_element_type=jnp.float32)                      # (tq, 3C) f32

    # Append this tile's K/V (bf16, head-major) into the per-batch resident scratch.
    # TODO(synk): for hs < 128 this head-major layout half-fills each 128-lane group;
    #             consider packing two heads per lane group or a lane-dense (T, C) slab.
    for hh in range(n_head):
        k_scr[hh, pl.ds(row0, q_tile), :] = (
            qkv[:, C + hh * hs:C + (hh + 1) * hs].astype(jnp.bfloat16))
        v_scr[hh, pl.ds(row0, q_tile), :] = (
            qkv[:, 2 * C + hh * hs:2 * C + (hh + 1) * hs].astype(jnp.bfloat16))

    # Q for this tile only, head-major; 1/sqrt(C) already folded into Wq on the host.
    q_h = jnp.stack([qkv[:, hh * hs:(hh + 1) * hs] for hh in range(n_head)],
                    axis=0).astype(jnp.bfloat16)                           # (H, tq, hs)

    # ---- Causal attention: online softmax over KV chunks 0..qt only. ----
    diag_rows = lax.broadcasted_iota(jnp.int32, (q_tile, q_tile), 0)
    diag_cols = lax.broadcasted_iota(jnp.int32, (q_tile, q_tile), 1)
    diag_mask = diag_cols <= diag_rows                                     # (tq, tq)

    def kv_chunk(j, carry):
        m, l, acc = carry
        col0 = pl.multiple_of(j * q_tile, q_tile)
        k_j = k_scr[:, pl.ds(col0, q_tile), :]                             # (H, tq, hs) bf16
        v_j = v_scr[:, pl.ds(col0, q_tile), :]
        s = jnp.einsum('hqd,hkd->hqk', q_h, k_j,
                       preferred_element_type=jnp.float32)                 # (H, tq, tq)
        # Only the diagonal chunk (j == qt) actually needs the causal mask.
        s = jnp.where((diag_mask | (j < qt))[None], s, _NEG_BIG)
        m_new = jnp.maximum(m, jnp.max(s, axis=-1, keepdims=True))
        alpha = jnp.exp(m - m_new)
        p = jnp.exp(s - m_new)
        l_new = alpha * l + jnp.sum(p, axis=-1, keepdims=True)
        acc_new = alpha * acc + jnp.einsum('hqk,hkd->hqd',
                                           p.astype(jnp.bfloat16), v_j,
                                           preferred_element_type=jnp.float32)
        return m_new, l_new, acc_new

    m0 = jnp.full((n_head, q_tile, 1), _NEG_BIG, jnp.float32)
    l0 = jnp.zeros((n_head, q_tile, 1), jnp.float32)
    acc0 = jnp.zeros((n_head, q_tile, hs), jnp.float32)
    _, l_fin, acc_fin = lax.fori_loop(0, qt + 1, kv_chunk, (m0, l0, acc0))

    # approx reciprocal: EUP slot, ~1e-3 relative error on the denominator (inference-grade).
    ctx = acc_fin * pl.reciprocal(l_fin, approx=True)                      # (H, tq, hs) f32

    # Merge heads (lane concat, no extra VMEM slab) + output projection.
    # TODO(synk): fuse head-merge into a single dot_general contracting (head, hs) once the
    #             Mosaic lowering supports multi-contracting-dim dot_general robustly.
    sa_in = jnp.concatenate([ctx[hh] for hh in range(n_head)], axis=-1)    # (tq, C)
    sa = jnp.dot(sa_in.astype(jnp.bfloat16), wproj_ref[...],
                 preferred_element_type=jnp.float32) + bproj_ref[0]
    # TODO(synk): attention / projection dropout omitted (eval mode, p = 0 semantics).

    x1 = x_tile + sa                                                       # first residual

    # ---- LayerNorm 2 + FeedForward on this tile. ----
    h2 = _layer_norm(x1, ln2g_ref[0], ln2b_ref[0])
    ff = jnp.dot(h2.astype(jnp.bfloat16), w1_ref[...],
                 preferred_element_type=jnp.float32) + b1_ref[0]
    ff = jnp.maximum(ff, 0.0)
    ff = jnp.dot(ff.astype(jnp.bfloat16), w2_ref[...],
                 preferred_element_type=jnp.float32) + b2_ref[0]
    # TODO(synk): FFN dropout omitted (eval mode).

    o_ref[0] = x1 + ff


def transformer_block(x, params, *, n_head, q_tile=None):
    (ln1g, ln1b, wq, wk, wv, wproj, bproj, ln2g, ln2b, w1, b1, w2, b2) = params
    B, T, C = x.shape
    assert C % n_head == 0
    hs = C // n_head
    if q_tile is None:
        q_tile = min(T, 256)
    assert T % q_tile == 0
    # bf16 K/V scratch is tiled (16, 128); dynamic row offsets must be sublane-aligned.
    assert q_tile == T or q_tile % 16 == 0
    nq = T // q_tile

    # Fuse QKV; fold the reference's C**-0.5 score scale into Wq (zero in-kernel cost).
    scale = C ** (-0.5)
    wqkv = jnp.concatenate([wq * scale, wk, wv], axis=1).astype(jnp.bfloat16)
    wproj_b = wproj.astype(jnp.bfloat16)
    w1_b = w1.astype(jnp.bfloat16)
    w2_b = w2.astype(jnp.bfloat16)

    # VMEM budget: ~7/8 of physical capacity, capped at 100 MiB (v5e/v6e: 128 MiB phys,
    # v7x: 64 MiB phys -> ~56 MiB).
    try:
        cap = int(getattr(pltpu.get_tpu_info(), "vmem_capacity_bytes", 64 * 1024 * 1024))
    except Exception:
        cap = 64 * 1024 * 1024
    vmem_limit = int(min(100 * 1024 * 1024, max(32 * 1024 * 1024, (cap * 7) // 8)))

    flops = B * (24 * T * C * C + 2 * T * T * C)          # QKV + proj + FFN + causal attn
    cost = pl.CostEstimate(flops=flops,
                           transcendentals=B * n_head * T * T // 2,
                           bytes_accessed=2 * B * T * C * 4 + 24 * C * C)

    kernel = functools.partial(block_kernel, n_head=n_head, q_tile=q_tile)
    out_shape = jax.ShapeDtypeStruct((B, T, C), jnp.float32)

    def build(single_buffer_weights):
        if single_buffer_weights:
            # Weights/biases/LN params never change across the grid: single-buffer them
            # (halves their resident VMEM -- the difference that fits on v7x's 64 MiB).
            const = lambda shape: pl.BlockSpec(shape, lambda b, qt: (0, 0),
                                               pipeline_mode=pl.Buffered(1))
        else:
            const = lambda shape: pl.BlockSpec(shape, lambda b, qt: (0, 0))

        in_specs = [
            pl.BlockSpec((1, q_tile, C), lambda b, qt: (b, qt, 0)),   # x streamed per tile
            const((1, C)), const((1, C)),                             # ln1 gamma, beta
            const((C, 3 * C)),                                        # fused Wqkv (bf16)
            const((C, C)), const((1, C)),                             # Wproj (bf16), bproj
            const((1, C)), const((1, C)),                             # ln2 gamma, beta
            const((C, 4 * C)), const((1, 4 * C)),                     # W1 (bf16), b1
            const((4 * C, C)), const((1, C)),                         # W2 (bf16), b2
        ]
        # TODO(synk): for C >= 1536, stream W1/W2 through VMEM in tiles (emit_pipeline over
        #             the 4C dimension) instead of keeping them fully resident.
        return pl.pallas_call(
            kernel,
            out_shape=out_shape,
            grid_spec=pltpu.PrefetchScalarGridSpec(
                num_scalar_prefetch=0,
                grid=(B, nq),
                in_specs=in_specs,
                out_specs=pl.BlockSpec((1, q_tile, C), lambda b, qt: (b, qt, 0)),
                scratch_shapes=[
                    pltpu.VMEM((n_head, T, hs), jnp.bfloat16),   # K, head-major, per-batch resident
                    pltpu.VMEM((n_head, T, hs), jnp.bfloat16),   # V, head-major, per-batch resident
                ],
            ),
            compiler_params=pltpu.CompilerParams(
                # qt carries the per-batch K/V scratch -> must stay sequential ("arbitrary").
                # TODO(synk): on v7x with B == 1 add a parallel head-group axis for the 2nd TC.
                dimension_semantics=("parallel", "arbitrary"),
                vmem_limit_bytes=vmem_limit,
            ),
            cost_estimate=cost,
        )(x, ln1g, ln1b, wqkv, wproj_b, bproj, ln2g, ln2b, w1_b, b1, w2_b, b2)

    try:
        return build(single_buffer_weights=True)
    except Exception:
        # TODO(synk): pl.Buffered(1) unsupported on this jax version -> default double-buffering.
        return build(single_buffer_weights=False)


def reference_block(x, params, *, n_head):
    """Pure-JAX f32 reference matching the PyTorch module."""
    (ln1g, ln1b, wq, wk, wv, wproj, bproj, ln2g, ln2b, w1, b1, w2, b2) = params
    B, T, C = x.shape
    hs = C // n_head
    h = _layer_norm(x, ln1g[0], ln1b[0])
    q = h @ wq
    k = h @ wk
    v = h @ wv
    scale = 1.0 / (C ** 0.5)
    mask = jnp.tril(jnp.ones((T, T), dtype=bool))
    outs = []
    for i in range(n_head):
        s = i * hs
        wei = (q[:, :, s:s + hs] @ jnp.swapaxes(k[:, :, s:s + hs], -1, -2)) * scale
        wei = jnp.where(mask, wei, -jnp.inf)
        wei = jax.nn.softmax(wei, axis=-1)
        outs.append(wei @ v[:, :, s:s + hs])
    sa = jnp.concatenate(outs, axis=-1) @ wproj + bproj[0]
    x1 = x + sa
    h2 = _layer_norm(x1, ln2g[0], ln2b[0])
    ff = jnp.maximum(h2 @ w1 + b1[0], 0.0) @ w2 + b2[0]
    return x1 + ff


if __name__ == "__main__":
    # Small shapes; q_tile=16 with T=32 gives a 2-step q-tile axis so the K/V scratch
    # reuse, the online-softmax chunk loop (trip counts 1 and 2) and the causal-mask
    # diagonal-chunk path are all exercised with bf16-tile-aligned row offsets.
    B, T, C, n_head = 2, 32, 32, 4

    key = jax.random.PRNGKey(0)
    keys = jax.random.split(key, 16)

    def init(k, shape, scale=0.1):
        return (scale * jax.random.normal(k, shape)).astype(jnp.float32)

    x = init(keys[0], (B, T, C), scale=1.0)

    params = (
        jnp.ones((1, C), jnp.float32),        # ln1 gamma
        jnp.zeros((1, C), jnp.float32),       # ln1 beta
        init(keys[1], (C, C)),                # Wq  (per-head columns packed)
        init(keys[2], (C, C)),                # Wk
        init(keys[3], (C, C)),                # Wv
        init(keys[4], (C, C)),                # Wproj
        init(keys[5], (1, C)),                # bproj
        jnp.ones((1, C), jnp.float32),        # ln2 gamma
        jnp.zeros((1, C), jnp.float32),       # ln2 beta
        init(keys[6], (C, 4 * C)),            # W1
        init(keys[7], (1, 4 * C)),            # b1
        init(keys[8], (4 * C, C)),            # W2
        init(keys[9], (1, C)),                # b2
    )

    out = transformer_block(x, params, n_head=n_head, q_tile=16)
    out = jax.block_until_ready(out)

    ref = reference_block(x, params, n_head=n_head)
    assert out.shape == (B, T, C)
    # bf16 matmul inputs + approx softmax reciprocal -> tolerance looser than pure-f32.
    assert jnp.allclose(out, ref, atol=3e-2, rtol=3e-2), "mismatch vs pure-JAX reference"

    print("KERNEL_OK")
</pallas_src>

<mosaic_0001>
module attributes {stable_mosaic.version = 11 : i64} {
  func.func @block_kernel(%arg0: i32, %arg1: i32, %arg2: memref<1x16x32xf32, #tpu.memory_space<vmem>>, %arg3: memref<1x32xf32, #tpu.memory_space<vmem>>, %arg4: memref<1x32xf32, #tpu.memory_space<vmem>>, %arg5: memref<32x96xbf16, #tpu.memory_space<vmem>>, %arg6: memref<32x32xbf16, #tpu.memory_space<vmem>>, %arg7: memref<1x32xf32, #tpu.memory_space<vmem>>, %arg8: memref<1x32xf32, #tpu.memory_space<vmem>>, %arg9: memref<1x32xf32, #tpu.memory_space<vmem>>, %arg10: memref<32x128xbf16, #tpu.memory_space<vmem>>, %arg11: memref<1x128xf32, #tpu.memory_space<vmem>>, %arg12: memref<128x32xbf16, #tpu.memory_space<vmem>>, %arg13: memref<1x32xf32, #tpu.memory_space<vmem>>, %arg14: memref<1x16x32xf32, #tpu.memory_space<vmem>>, %arg15: memref<4x32x8xbf16, #tpu.memory_space<vmem>>, %arg16: memref<4x32x8xbf16, #tpu.memory_space<vmem>>) attributes {dimension_semantics = [#tpu.dimension_semantics<parallel>, #tpu.dimension_semantics<arbitrary>], iteration_bounds = array<i64: 2, 2>, scalar_prefetch = 0 : i64, scratch_operands = 2 : i64, tpu.core_type = #tpu.core_type<tc>, window_params = [{transform_indices = @transform_0, window_bounds = array<i64: 1, 16, 32>}, {pipeline_mode = #tpu.pipeline_mode<synchronous>, transform_indices = @transform_1, window_bounds = array<i64: 1, 32>}, {pipeline_mode = #tpu.pipeline_mode<synchronous>, transform_indices = @transform_2, window_bounds = array<i64: 1, 32>}, {pipeline_mode = #tpu.pipeline_mode<synchronous>, transform_indices = @transform_3, window_bounds = array<i64: 32, 96>}, {pipeline_mode = #tpu.pipeline_mode<synchronous>, transform_indices = @transform_4, window_bounds = array<i64: 32, 32>}, {pipeline_mode = #tpu.pipeline_mode<synchronous>, transform_indices = @transform_5, window_bounds = array<i64: 1, 32>}, {pipeline_mode = #tpu.pipeline_mode<synchronous>, transform_indices = @transform_6, window_bounds = array<i64: 1, 32>}, {pipeline_mode = #tpu.pipeline_mode<synchronous>, transform_indices = @transform_7, window_bounds = array<i64: 1, 32>}, {pipeline_mode = #tpu.pipeline_mode<synchronous>, transform_indices = @transform_8, window_bounds = array<i64: 32, 128>}, {pipeline_mode = #tpu.pipeline_mode<synchronous>, transform_indices = @transform_9, window_bounds = array<i64: 1, 128>}, {pipeline_mode = #tpu.pipeline_mode<synchronous>, transform_indices = @transform_10, window_bounds = array<i64: 128, 32>}, {pipeline_mode = #tpu.pipeline_mode<synchronous>, transform_indices = @transform_11, window_bounds = array<i64: 1, 32>}, {transform_indices = @transform_12, window_bounds = array<i64: 1, 16, 32>}]} {
    %c16_i32 = arith.constant 16 : i32
    %0 = arith.muli %arg1, %c16_i32 : i32
    %1 = tpu.assume_multiple %0, 16 : i32
    %c0 = arith.constant 0 : index
    %c0_0 = arith.constant 0 : index
    %c0_1 = arith.constant 0 : index
    %2 = vector.load %arg2[%c0, %c0_0, %c0_1] : memref<1x16x32xf32, #tpu.memory_space<vmem>>, vector<1x16x32xf32>
    %3 = vector.shape_cast %2 : vector<1x16x32xf32> to vector<16x32xf32>
    %c0_2 = arith.constant 0 : index
    %c0_3 = arith.constant 0 : index
    %4 = vector.load %arg3[%c0_2, %c0_3] : memref<1x32xf32, #tpu.memory_space<vmem>>, vector<1x32xf32>
    %5 = vector.shape_cast %4 : vector<1x32xf32> to vector<32xf32>
    %c0_4 = arith.constant 0 : index
    %c0_5 = arith.constant 0 : index
    %6 = vector.load %arg4[%c0_4, %c0_5] : memref<1x32xf32, #tpu.memory_space<vmem>>, vector<1x32xf32>
    %7 = vector.shape_cast %6 : vector<1x32xf32> to vector<32xf32>
    %cst = arith.constant dense<0.000000e+00> : vector<16xf32>
    %8 = vector.multi_reduction <add>, %3, %cst [1] : vector<16x32xf32> to vector<16xf32>
    %9 = vector.shape_cast %8 : vector<16xf32> to vector<16x1xf32>
    %cst_6 = arith.constant 3.200000e+01 : f32
    %10 = vector.broadcast %cst_6 : f32 to vector<16x1xf32>
    %11 = arith.divf %9, %10 : vector<16x1xf32>
    %12 = vector.broadcast %11 : vector<16x1xf32> to vector<16x32xf32>
    %13 = arith.subf %3, %12 : vector<16x32xf32>
    %14 = arith.mulf %13, %13 : vector<16x32xf32>
    %cst_7 = arith.constant dense<0.000000e+00> : vector<16xf32>
    %15 = vector.multi_reduction <add>, %14, %cst_7 [1] : vector<16x32xf32> to vector<16xf32>
    %16 = vector.shape_cast %15 : vector<16xf32> to vector<16x1xf32>
    %cst_8 = arith.constant 3.200000e+01 : f32
    %17 = vector.broadcast %cst_8 : f32 to vector<16x1xf32>
    %18 = arith.divf %16, %17 : vector<16x1xf32>
    %19 = vector.broadcast %11 : vector<16x1xf32> to vector<16x32xf32>
    %20 = arith.subf %3, %19 : vector<16x32xf32>
    %cst_9 = arith.constant 9.99999974E-6 : f32
    %21 = vector.broadcast %cst_9 : f32 to vector<16x1xf32>
    %22 = arith.addf %18, %21 : vector<16x1xf32>
    %23 = math.rsqrt %22 : vector<16x1xf32>
    %24 = vector.broadcast %23 : vector<16x1xf32> to vector<16x32xf32>
    %25 = arith.mulf %20, %24 : vector<16x32xf32>
    %26 = vector.shape_cast %5 : vector<32xf32> to vector<1x32xf32>
    %27 = vector.broadcast %26 : vector<1x32xf32> to vector<16x32xf32>
    %28 = arith.mulf %25, %27 : vector<16x32xf32>
    %29 = vector.shape_cast %7 : vector<32xf32> to vector<1x32xf32>
    %30 = vector.broadcast %29 : vector<1x32xf32> to vector<16x32xf32>
    %31 = arith.addf %28, %30 : vector<16x32xf32>
    %32 = arith.truncf %31 : vector<16x32xf32> to vector<16x32xbf16>
    %c0_10 = arith.constant 0 : index
    %c0_11 = arith.constant 0 : index
    %33 = vector.load %arg5[%c0_10, %c0_11] : memref<32x96xbf16, #tpu.memory_space<vmem>>, vector<32x96xbf16>
    %cst_12 = arith.constant dense<0.000000e+00> : vector<16x96xf32>
    %34 = tpu.matmul %32, %33, %cst_12 {dimension_numbers = #tpu.dot_dimension_numbers<[1], [0], [0], [1], [0, 0, 1, 1], [], []>} : vector<16x32xbf16>, vector<32x96xbf16>, vector<16x96xf32> -> vector<16x96xf32>
    %35 = vector.extract_strided_slice %34 {offsets = [0, 32], sizes = [16, 8], strides = [1, 1]} : vector<16x96xf32> to vector<16x8xf32>
    %36 = arith.truncf %35 : vector<16x8xf32> to vector<16x8xbf16>
    %c0_13 = arith.constant 0 : index
    %37 = arith.index_cast %1 : i32 to index
    %c0_14 = arith.constant 0 : index
    %38 = vector.load %arg15[%c0_13, %37, %c0_14] : memref<4x32x8xbf16, #tpu.memory_space<vmem>>, vector<1x16x8xbf16>
    %39 = vector.shape_cast %38 : vector<1x16x8xbf16> to vector<16x8xbf16>
    %40 = vector.shape_cast %36 : vector<16x8xbf16> to vector<1x16x8xbf16>
    tpu.vector_store %arg15[%c0_13, %37, %c0_14], %40 {strides = array<i32>} : memref<4x32x8xbf16, #tpu.memory_space<vmem>>, vector<1x16x8xbf16>,
    %41 = vector.extract_strided_slice %34 {offsets = [0, 64], sizes = [16, 8], strides = [1, 1]} : vector<16x96xf32> to vector<16x8xf32>
    %42 = arith.truncf %41 : vector<16x8xf32> to vector<16x8xbf16>
    %c0_15 = arith.constant 0 : index
    %43 = arith.index_cast %1 : i32 to index
    %c0_16 = arith.constant 0 : index
    %44 = vector.load %arg16[%c0_15, %43, %c0_16] : memref<4x32x8xbf16, #tpu.memory_space<vmem>>, vector<1x16x8xbf16>
    %45 = vector.shape_cast %44 : vector<1x16x8xbf16> to vector<16x8xbf16>
    %46 = vector.shape_cast %42 : vector<16x8xbf16> to vector<1x16x8xbf16>
    tpu.vector_store %arg16[%c0_15, %43, %c0_16], %46 {strides = array<i32>} : memref<4x32x8xbf16, #tpu.memory_space<vmem>>, vector<1x16x8xbf16>,
    %47 = vector.extract_strided_slice %34 {offsets = [0, 40], sizes = [16, 8], strides = [1, 1]} : vector<16x96xf32> to vector<16x8xf32>
    %48 = arith.truncf %47 : vector<16x8xf32> to vector<16x8xbf16>
    %c1 = arith.constant 1 : index
    %49 = arith.index_cast %1 : i32 to index
    %c0_17 = arith.constant 0 : index
    %50 = vector.load %arg15[%c1, %49, %c0_17] : memref<4x32x8xbf16, #tpu.memory_space<vmem>>, vector<1x16x8xbf16>
    %51 = vector.shape_cast %50 : vector<1x16x8xbf16> to vector<16x8xbf16>
    %52 = vector.shape_cast %48 : vector<16x8xbf16> to vector<1x16x8xbf16>
    tpu.vector_store %arg15[%c1, %49, %c0_17], %52 {strides = array<i32>} : memref<4x32x8xbf16, #tpu.memory_space<vmem>>, vector<1x16x8xbf16>,
    %53 = vector.extract_strided_slice %34 {offsets = [0, 72], sizes = [16, 8], strides = [1, 1]} : vector<16x96xf32> to vector<16x8xf32>
    %54 = arith.truncf %53 : vector<16x8xf32> to vector<16x8xbf16>
    %c1_18 = arith.constant 1 : index
    %55 = arith.index_cast %1 : i32 to index
    %c0_19 = arith.constant 0 : index
    %56 = vector.load %arg16[%c1_18, %55, %c0_19] : memref<4x32x8xbf16, #tpu.memory_space<vmem>>, vector<1x16x8xbf16>
    %57 = vector.shape_cast %56 : vector<1x16x8xbf16> to vector<16x8xbf16>
    %58 = vector.shape_cast %54 : vector<16x8xbf16> to vector<1x16x8xbf16>
    tpu.vector_store %arg16[%c1_18, %55, %c0_19], %58 {strides = array<i32>} : memref<4x32x8xbf16, #tpu.memory_space<vmem>>, vector<1x16x8xbf16>,
    %59 = vector.extract_strided_slice %34 {offsets = [0, 48], sizes = [16, 8], strides = [1, 1]} : vector<16x96xf32> to vector<16x8xf32>
    %60 = arith.truncf %59 : vector<16x8xf32> to vector<16x8xbf16>
    %c2 = arith.constant 2 : index
    %61 = arith.index_cast %1 : i32 to index
    %c0_20 = arith.constant 0 : index
    %62 = vector.load %arg15[%c2, %61, %c0_20] : memref<4x32x8xbf16, #tpu.memory_space<vmem>>, vector<1x16x8xbf16>
    %63 = vector.shape_cast %62 : vector<1x16x8xbf16> to vector<16x8xbf16>
    %64 = vector.shape_cast %60 : vector<16x8xbf16> to vector<1x16x8xbf16>
    tpu.vector_store %arg15[%c2, %61, %c0_20], %64 {strides = array<i32>} : memref<4x32x8xbf16, #tpu.memory_space<vmem>>, vector<1x16x8xbf16>,
    %65 = vector.extract_strided_slice %34 {offsets = [0, 80], sizes = [16, 8], strides = [1, 1]} : vector<16x96xf32> to vector<16x8xf32>
    %66 = arith.truncf %65 : vector<16x8xf32> to vector<16x8xbf16>
    %c2_21 = arith.constant 2 : index
    %67 = arith.index_cast %1 : i32 to index
    %c0_22 = arith.constant 0 : index
    %68 = vector.load %arg16[%c2_21, %67, %c0_22] : memref<4x32x8xbf16, #tpu.memory_space<vmem>>, vector<1x16x8xbf16>
    %69 = vector.shape_cast %68 : vector<1x16x8xbf16> to vector<16x8xbf16>
    %70 = vector.shape_cast %66 : vector<16x8xbf16> to vector<1x16x8xbf16>
    tpu.vector_store %arg16[%c2_21, %67, %c0_22], %70 {strides = array<i32>} : memref<4x32x8xbf16, #tpu.memory_space<vmem>>, vector<1x16x8xbf16>,
    %71 = vector.extract_strided_slice %34 {offsets = [0, 56], sizes = [16, 8], strides = [1, 1]} : vector<16x96xf32> to vector<16x8xf32>
    %72 = arith.truncf %71 : vector<16x8xf32> to vector<16x8xbf16>
    %c3 = arith.constant 3 : index
    %73 = arith.index_cast %1 : i32 to index
    %c0_23 = arith.constant 0 : index
    %74 = vector.load %arg15[%c3, %73, %c0_23] : memref<4x32x8xbf16, #tpu.memory_space<vmem>>, vector<1x16x8xbf16>
    %75 = vector.shape_cast %74 : vector<1x16x8xbf16> to vector<16x8xbf16>
    %76 = vector.shape_cast %72 : vector<16x8xbf16> to vector<1x16x8xbf16>
    tpu.vector_store %arg15[%c3, %73, %c0_23], %76 {strides = array<i32>} : memref<4x32x8xbf16, #tpu.memory_space<vmem>>, vector<1x16x8xbf16>,
    %77 = vector.extract_strided_slice %34 {offsets = [0, 88], sizes = [16, 8], strides = [1, 1]} : vector<16x96xf32> to vector<16x8xf32>
    %78 = arith.truncf %77 : vector<16x8xf32> to vector<16x8xbf16>
    %c3_24 = arith.constant 3 : index
    %79 = arith.index_cast %1 : i32 to index
    %c0_25 = arith.constant 0 : index
    %80 = vector.load %arg16[%c3_24, %79, %c0_25] : memref<4x32x8xbf16, #tpu.memory_space<vmem>>, vector<1x16x8xbf16>
    %81 = vector.shape_cast %80 : vector<1x16x8xbf16> to vector<16x8xbf16>
    %82 = vector.shape_cast %78 : vector<16x8xbf16> to vector<1x16x8xbf16>
    tpu.vector_store %arg16[%c3_24, %79, %c0_25], %82 {strides = array<i32>} : memref<4x32x8xbf16, #tpu.memory_space<vmem>>, vector<1x16x8xbf16>,
    %83 = vector.extract_strided_slice %34 {offsets = [0, 0], sizes = [16, 8], strides = [1, 1]} : vector<16x96xf32> to vector<16x8xf32>
    %84 = vector.extract_strided_slice %34 {offsets = [0, 8], sizes = [16, 8], strides = [1, 1]} : vector<16x96xf32> to vector<16x8xf32>
    %85 = vector.extract_strided_slice %34 {offsets = [0, 16], sizes = [16, 8], strides = [1, 1]} : vector<16x96xf32> to vector<16x8xf32>
    %86 = vector.extract_strided_slice %34 {offsets = [0, 24], sizes = [16, 8], strides = [1, 1]} : vector<16x96xf32> to vector<16x8xf32>
    %87 = vector.shape_cast %83 : vector<16x8xf32> to vector<1x16x8xf32>
    %88 = vector.shape_cast %84 : vector<16x8xf32> to vector<1x16x8xf32>
    %89 = vector.shape_cast %85 : vector<16x8xf32> to vector<1x16x8xf32>
    %90 = vector.shape_cast %86 : vector<16x8xf32> to vector<1x16x8xf32>
    %91 = tpu.concatenate %87, %88, %89, %90 in 0 : vector<1x16x8xf32>, vector<1x16x8xf32>, vector<1x16x8xf32>, vector<1x16x8xf32> -> vector<4x16x8xf32>
    %92 = arith.truncf %91 : vector<4x16x8xf32> to vector<4x16x8xbf16>
    %93 = tpu.iota {dimensions = array<i32: 0>} : vector<16x16xi32>
    %94 = tpu.iota {dimensions = array<i32: 1>} : vector<16x16xi32>
    %95 = arith.cmpi sle, %94, %93 : vector<16x16xi32>
    %cst_26 = arith.constant -1.000000e+30 : f32
    %96 = vector.broadcast %cst_26 : f32 to vector<4x16x1xf32>
    %cst_27 = arith.constant 0.000000e+00 : f32
    %97 = vector.broadcast %cst_27 : f32 to vector<4x16x1xf32>
    %cst_28 = arith.constant 0.000000e+00 : f32
    %98 = vector.broadcast %cst_28 : f32 to vector<4x16x8xf32>
    %c1_i32 = arith.constant 1 : i32
    %99 = arith.addi %arg1, %c1_i32 : i32
    %c0_i32 = arith.constant 0 : i32
    %100 = arith.subi %99, %c0_i32 : i32
    %101 = arith.addi %c0_i32, %100 : i32
    %c1_i32_29 = arith.constant 1 : i32
    %102:3 = scf.for %arg17 = %c0_i32 to %101 step %c1_i32_29 iter_args(%arg18 = %96, %arg19 = %97, %arg20 = %98) -> (vector<4x16x1xf32>, vector<4x16x1xf32>, vector<4x16x8xf32>)  : i32 {
      %c16_i32_58 = arith.constant 16 : i32
      %174 = arith.muli %arg17, %c16_i32_58 : i32
      %175 = tpu.assume_multiple %174, 16 : i32
      %c0_59 = arith.constant 0 : index
      %176 = arith.index_cast %175 : i32 to index
      %c0_60 = arith.constant 0 : index
      %177 = vector.load %arg15[%c0_59, %176, %c0_60] : memref<4x32x8xbf16, #tpu.memory_space<vmem>>, vector<4x16x8xbf16>
      %c0_61 = arith.constant 0 : index
      %178 = arith.index_cast %175 : i32 to index
      %c0_62 = arith.constant 0 : index
      %179 = vector.load %arg16[%c0_61, %178, %c0_62] : memref<4x32x8xbf16, #tpu.memory_space<vmem>>, vector<4x16x8xbf16>
      "tpu.trace_start"() <{level = 10 : i32, message = "hqd,hkd->hqk"}> : () -> ()
      %cst_63 = arith.constant dense<0.000000e+00> : vector<4x16x16xf32>
      %180 = tpu.matmul %92, %177, %cst_63 {dimension_numbers = #tpu.dot_dimension_numbers<[2], [2], [1], [1], [0, 0, 0, 1, 1, 1], [0], [0]>} : vector<4x16x8xbf16>, vector<4x16x8xbf16>, vector<4x16x16xf32> -> vector<4x16x16xf32>
      "tpu.trace_stop"() : () -> ()
      %181 = arith.cmpi slt, %arg17, %arg1 : i32
      %182 = vector.broadcast %181 : i1 to vector<16x16xi1>
      %183 = arith.ori %95, %182 : vector<16x16xi1>
      %184 = vector.shape_cast %183 : vector<16x16xi1> to vector<1x16x16xi1>
      %cst_64 = arith.constant -1.000000e+30 : f32
      %185 = vector.shape_cast %184 : vector<1x16x16xi1> to vector<1x16x16xi1>
      %186 = vector.broadcast %185 : vector<1x16x16xi1> to vector<4x16x16xi1>
      %187 = vector.broadcast %cst_64 : f32 to vector<4x16x16xf32>
      %188 = arith.select %186, %180, %187 : vector<4x16x16xi1>, vector<4x16x16xf32>
      %cst_65 = arith.constant dense<0xFF800000> : vector<4x16xf32>
      %189 = vector.multi_reduction <maximumf>, %188, %cst_65 [2] : vector<4x16x16xf32> to vector<4x16xf32>
      %190 = vector.shape_cast %189 : vector<4x16xf32> to vector<4x16x1xf32>
      %191 = arith.maximumf %arg18, %190 : vector<4x16x1xf32>
      %192 = arith.subf %arg18, %191 : vector<4x16x1xf32>
      %193 = math.exp %192 : vector<4x16x1xf32>
      %194 = vector.broadcast %191 : vector<4x16x1xf32> to vector<4x16x16xf32>
      %195 = arith.subf %188, %194 : vector<4x16x16xf32>
      %196 = math.exp %195 : vector<4x16x16xf32>
      %197 = arith.mulf %193, %arg19 : vector<4x16x1xf32>
      %cst_66 = arith.constant dense<0.000000e+00> : vector<4x16xf32>
      %198 = vector.multi_reduction <add>, %196, %cst_66 [2] : vector<4x16x16xf32> to vector<4x16xf32>
      %199 = vector.shape_cast %198 : vector<4x16xf32> to vector<4x16x1xf32>
      %200 = arith.addf %197, %199 : vector<4x16x1xf32>
      %201 = vector.broadcast %193 : vector<4x16x1xf32> to vector<4x16x8xf32>
      %202 = arith.mulf %201, %arg20 : vector<4x16x8xf32>
      %203 = arith.truncf %196 : vector<4x16x16xf32> to vector<4x16x16xbf16>
      "tpu.trace_start"() <{level = 10 : i32, message = "hqk,hkd->hqd"}> : () -> ()
      %cst_67 = arith.constant dense<0.000000e+00> : vector<4x16x8xf32>
      %204 = tpu.matmul %203, %179, %cst_67 {dimension_numbers = #tpu.dot_dimension_numbers<[2], [1], [1], [2], [0, 0, 0, 1, 1, 2], [0], [0]>} : vector<4x16x16xbf16>, vector<4x16x8xbf16>, vector<4x16x8xf32> -> vector<4x16x8xf32>
      "tpu.trace_stop"() : () -> ()
      %205 = arith.addf %202, %204 : vector<4x16x8xf32>
      scf.yield %191, %200, %205 : vector<4x16x1xf32>, vector<4x16x1xf32>, vector<4x16x8xf32>
    }
    %103 = tpu.reciprocal %102#1 {approx = true} : vector<4x16x1xf32> -> vector<4x16x1xf32>
    %104 = vector.broadcast %103 : vector<4x16x1xf32> to vector<4x16x8xf32>
    %105 = arith.mulf %102#2, %104 : vector<4x16x8xf32>
    %106 = vector.extract_strided_slice %105 {offsets = [0, 0, 0], sizes = [1, 16, 8], strides = [1, 1, 1]} : vector<4x16x8xf32> to vector<1x16x8xf32>
    %107 = vector.shape_cast %106 : vector<1x16x8xf32> to vector<16x8xf32>
    %108 = vector.extract_strided_slice %105 {offsets = [1, 0, 0], sizes = [1, 16, 8], strides = [1, 1, 1]} : vector<4x16x8xf32> to vector<1x16x8xf32>
    %109 = vector.shape_cast %108 : vector<1x16x8xf32> to vector<16x8xf32>
    %110 = vector.extract_strided_slice %105 {offsets = [2, 0, 0], sizes = [1, 16, 8], strides = [1, 1, 1]} : vector<4x16x8xf32> to vector<1x16x8xf32>
    %111 = vector.shape_cast %110 : vector<1x16x8xf32> to vector<16x8xf32>
    %112 = vector.extract_strided_slice %105 {offsets = [3, 0, 0], sizes = [1, 16, 8], strides = [1, 1, 1]} : vector<4x16x8xf32> to vector<1x16x8xf32>
    %113 = vector.shape_cast %112 : vector<1x16x8xf32> to vector<16x8xf32>
    %114 = tpu.concatenate %107, %109, %111, %113 in 1 : vector<16x8xf32>, vector<16x8xf32>, vector<16x8xf32>, vector<16x8xf32> -> vector<16x32xf32>
    %115 = arith.truncf %114 : vector<16x32xf32> to vector<16x32xbf16>
    %c0_30 = arith.constant 0 : index
    %c0_31 = arith.constant 0 : index
    %116 = vector.load %arg6[%c0_30, %c0_31] : memref<32x32xbf16, #tpu.memory_space<vmem>>, vector<32x32xbf16>
    %cst_32 = arith.constant dense<0.000000e+00> : vector<16x32xf32>
    %117 = tpu.matmul %115, %116, %cst_32 {dimension_numbers = #tpu.dot_dimension_numbers<[1], [0], [0], [1], [0, 0, 1, 1], [], []>} : vector<16x32xbf16>, vector<32x32xbf16>, vector<16x32xf32> -> vector<16x32xf32>
    %c0_33 = arith.constant 0 : index
    %c0_34 = arith.constant 0 : index
    %118 = vector.load %arg7[%c0_33, %c0_34] : memref<1x32xf32, #tpu.memory_space<vmem>>, vector<1x32xf32>
    %119 = vector.shape_cast %118 : vector<1x32xf32> to vector<32xf32>
    %120 = vector.shape_cast %119 : vector<32xf32> to vector<1x32xf32>
    %121 = vector.broadcast %120 : vector<1x32xf32> to vector<16x32xf32>
    %122 = arith.addf %117, %121 : vector<16x32xf32>
    %123 = arith.addf %3, %122 : vector<16x32xf32>
    %c0_35 = arith.constant 0 : index
    %c0_36 = arith.constant 0 : index
    %124 = vector.load %arg8[%c0_35, %c0_36] : memref<1x32xf32, #tpu.memory_space<vmem>>, vector<1x32xf32>
    %125 = vector.shape_cast %124 : vector<1x32xf32> to vector<32xf32>
    %c0_37 = arith.constant 0 : index
    %c0_38 = arith.constant 0 : index
    %126 = vector.load %arg9[%c0_37, %c0_38] : memref<1x32xf32, #tpu.memory_space<vmem>>, vector<1x32xf32>
    %127 = vector.shape_cast %126 : vector<1x32xf32> to vector<32xf32>
    %cst_39 = arith.constant dense<0.000000e+00> : vector<16xf32>
    %128 = vector.multi_reduction <add>, %123, %cst_39 [1] : vector<16x32xf32> to vector<16xf32>
    %129 = vector.shape_cast %128 : vector<16xf32> to vector<16x1xf32>
    %cst_40 = arith.constant 3.200000e+01 : f32
    %130 = vector.broadcast %cst_40 : f32 to vector<16x1xf32>
    %131 = arith.divf %129, %130 : vector<16x1xf32>
    %132 = vector.broadcast %131 : vector<16x1xf32> to vector<16x32xf32>
    %133 = arith.subf %123, %132 : vector<16x32xf32>
    %134 = arith.mulf %133, %133 : vector<16x32xf32>
    %cst_41 = arith.constant dense<0.000000e+00> : vector<16xf32>
    %135 = vector.multi_reduction <add>, %134, %cst_41 [1] : vector<16x32xf32> to vector<16xf32>
    %136 = vector.shape_cast %135 : vector<16xf32> to vector<16x1xf32>
    %cst_42 = arith.constant 3.200000e+01 : f32
    %137 = vector.broadcast %cst_42 : f32 to vector<16x1xf32>
    %138 = arith.divf %136, %137 : vector<16x1xf32>
    %139 = vector.broadcast %131 : vector<16x1xf32> to vector<16x32xf32>
    %140 = arith.subf %123, %139 : vector<16x32xf32>
    %cst_43 = arith.constant 9.99999974E-6 : f32
    %141 = vector.broadcast %cst_43 : f32 to vector<16x1xf32>
    %142 = arith.addf %138, %141 : vector<16x1xf32>
    %143 = math.rsqrt %142 : vector<16x1xf32>
    %144 = vector.broadcast %143 : vector<16x1xf32> to vector<16x32xf32>
    %145 = arith.mulf %140, %144 : vector<16x32xf32>
    %146 = vector.shape_cast %125 : vector<32xf32> to vector<1x32xf32>
    %147 = vector.broadcast %146 : vector<1x32xf32> to vector<16x32xf32>
    %148 = arith.mulf %145, %147 : vector<16x32xf32>
    %149 = vector.shape_cast %127 : vector<32xf32> to vector<1x32xf32>
    %150 = vector.broadcast %149 : vector<1x32xf32> to vector<16x32xf32>
    %151 = arith.addf %148, %150 : vector<16x32xf32>
    %152 = arith.truncf %151 : vector<16x32xf32> to vector<16x32xbf16>
    %c0_44 = arith.constant 0 : index
    %c0_45 = arith.constant 0 : index
    %153 = vector.load %arg10[%c0_44, %c0_45] : memref<32x128xbf16, #tpu.memory_space<vmem>>, vector<32x128xbf16>
    %cst_46 = arith.constant dense<0.000000e+00> : vector<16x128xf32>
    %154 = tpu.matmul %152, %153, %cst_46 {dimension_numbers = #tpu.dot_dimension_numbers<[1], [0], [0], [1], [0, 0, 1, 1], [], []>} : vector<16x32xbf16>, vector<32x128xbf16>, vector<16x128xf32> -> vector<16x128xf32>
    %c0_47 = arith.constant 0 : index
    %c0_48 = arith.constant 0 : index
    %155 = vector.load %arg11[%c0_47, %c0_48] : memref<1x128xf32, #tpu.memory_space<vmem>>, vector<1x128xf32>
    %156 = vector.shape_cast %155 : vector<1x128xf32> to vector<128xf32>
    %157 = vector.shape_cast %156 : vector<128xf32> to vector<1x128xf32>
    %158 = vector.broadcast %157 : vector<1x128xf32> to vector<16x128xf32>
    %159 = arith.addf %154, %158 : vector<16x128xf32>
    %cst_49 = arith.constant 0.000000e+00 : f32
    %160 = vector.broadcast %cst_49 : f32 to vector<16x128xf32>
    %161 = arith.maximumf %159, %160 : vector<16x128xf32>
    %162 = arith.truncf %161 : vector<16x128xf32> to vector<16x128xbf16>
    %c0_50 = arith.constant 0 : index
    %c0_51 = arith.constant 0 : index
    %163 = vector.load %arg12[%c0_50, %c0_51] : memref<128x32xbf16, #tpu.memory_space<vmem>>, vector<128x32xbf16>
    %cst_52 = arith.constant dense<0.000000e+00> : vector<16x32xf32>
    %164 = tpu.matmul %162, %163, %cst_52 {dimension_numbers = #tpu.dot_dimension_numbers<[1], [0], [0], [1], [0, 0, 1, 1], [], []>} : vector<16x128xbf16>, vector<128x32xbf16>, vector<16x32xf32> -> vector<16x32xf32>
    %c0_53 = arith.constant 0 : index
    %c0_54 = arith.constant 0 : index
    %165 = vector.load %arg13[%c0_53, %c0_54] : memref<1x32xf32, #tpu.memory_space<vmem>>, vector<1x32xf32>
    %166 = vector.shape_cast %165 : vector<1x32xf32> to vector<32xf32>
    %167 = vector.shape_cast %166 : vector<32xf32> to vector<1x32xf32>
    %168 = vector.broadcast %167 : vector<1x32xf32> to vector<16x32xf32>
    %169 = arith.addf %164, %168 : vector<16x32xf32>
    %170 = arith.addf %123, %169 : vector<16x32xf32>
    %c0_55 = arith.constant 0 : index
    %c0_56 = arith.constant 0 : index
    %c0_57 = arith.constant 0 : index
    %171 = vector.load %arg14[%c0_55, %c0_56, %c0_57] : memref<1x16x32xf32, #tpu.memory_space<vmem>>, vector<1x16x32xf32>
    %172 = vector.shape_cast %171 : vector<1x16x32xf32> to vector<16x32xf32>
    %173 = vector.shape_cast %170 : vector<16x32xf32> to vector<1x16x32xf32>
    tpu.vector_store %arg14[%c0_55, %c0_56, %c0_57], %173 {strides = array<i32>} : memref<1x16x32xf32, #tpu.memory_space<vmem>>, vector<1x16x32xf32>,
    return
  }
  func.func @transform_0(%arg0: i32, %arg1: i32) -> (i32, i32, i32) {
    %c0_i32 = arith.constant 0 : i32
    %c0_i32_0 = arith.constant 0 : i32
    return %arg0, %arg1, %c0_i32 : i32, i32, i32
  }
  func.func @transform_1(%arg0: i32, %arg1: i32) -> (i32, i32) {
    %c0_i32 = arith.constant 0 : i32
    %c0_i32_0 = arith.constant 0 : i32
    %c0_i32_1 = arith.constant 0 : i32
    return %c0_i32, %c0_i32_0 : i32, i32
  }
  func.func @transform_2(%arg0: i32, %arg1: i32) -> (i32, i32) {
    %c0_i32 = arith.constant 0 : i32
    %c0_i32_0 = arith.constant 0 : i32
    %c0_i32_1 = arith.constant 0 : i32
    return %c0_i32, %c0_i32_0 : i32, i32
  }
  func.func @transform_3(%arg0: i32, %arg1: i32) -> (i32, i32) {
    %c0_i32 = arith.constant 0 : i32
    %c0_i32_0 = arith.constant 0 : i32
    %c0_i32_1 = arith.constant 0 : i32
    return %c0_i32, %c0_i32_0 : i32, i32
  }
  func.func @transform_4(%arg0: i32, %arg1: i32) -> (i32, i32) {
    %c0_i32 = arith.constant 0 : i32
    %c0_i32_0 = arith.constant 0 : i32
    %c0_i32_1 = arith.constant 0 : i32
    return %c0_i32, %c0_i32_0 : i32, i32
  }
  func.func @transform_5(%arg0: i32, %arg1: i32) -> (i32, i32) {
    %c0_i32 = arith.constant 0 : i32
    %c0_i32_0 = arith.constant 0 : i32
    %c0_i32_1 = arith.constant 0 : i32
    return %c0_i32, %c0_i32_0 : i32, i32
  }
  func.func @transform_6(%arg0: i32, %arg1: i32) -> (i32, i32) {
    %c0_i32 = arith.constant 0 : i32
    %c0_i32_0 = arith.constant 0 : i32
    %c0_i32_1 = arith.constant 0 : i32
    return %c0_i32, %c0_i32_0 : i32, i32
  }
  func.func @transform_7(%arg0: i32, %arg1: i32) -> (i32, i32) {
    %c0_i32 = arith.constant 0 : i32
    %c0_i32_0 = arith.constant 0 : i32
    %c0_i32_1 = arith.constant 0 : i32
    return %c0_i32, %c0_i32_0 : i32, i32
  }
  func.func @transform_8(%arg0: i32, %arg1: i32) -> (i32, i32) {
    %c0_i32 = arith.constant 0 : i32
    %c0_i32_0 = arith.constant 0 : i32
    %c0_i32_1 = arith.constant 0 : i32
    return %c0_i32, %c0_i32_0 : i32, i32
  }
  func.func @transform_9(%arg0: i32, %arg1: i32) -> (i32, i32) {
    %c0_i32 = arith.constant 0 : i32
    %c0_i32_0 = arith.constant 0 : i32
    %c0_i32_1 = arith.constant 0 : i32
    return %c0_i32, %c0_i32_0 : i32, i32
  }
  func.func @transform_10(%arg0: i32, %arg1: i32) -> (i32, i32) {
    %c0_i32 = arith.constant 0 : i32
    %c0_i32_0 = arith.constant 0 : i32
    %c0_i32_1 = arith.constant 0 : i32
    return %c0_i32, %c0_i32_0 : i32, i32
  }
  func.func @transform_11(%arg0: i32, %arg1: i32) -> (i32, i32) {
    %c0_i32 = arith.constant 0 : i32
    %c0_i32_0 = arith.constant 0 : i32
    %c0_i32_1 = arith.constant 0 : i32
    return %c0_i32, %c0_i32_0 : i32, i32
  }
  func.func @transform_12(%arg0: i32, %arg1: i32) -> (i32, i32, i32) {
    %c0_i32 = arith.constant 0 : i32
    %c0_i32_0 = arith.constant 0 : i32
    return %arg0, %arg1, %c0_i32 : i32, i32, i32
  }
}

module attributes {stable_mosaic.version = 11 : i64} {
  func.func @block_kernel(%arg0: i32, %arg1: i32, %arg2: memref<1x16x32xf32, #tpu.memory_space<vmem>>, %arg3: memref<1x32xf32, #tpu.memory_space<vmem>>, %arg4: memref<1x32xf32, #tpu.memory_space<vmem>>, %arg5: memref<32x96xbf16, #tpu.memory_space<vmem>>, %arg6: memref<32x32xbf16, #tpu.memory_space<vmem>>, %arg7: memref<1x32xf32, #tpu.memory_space<vmem>>, %arg8: memref<1x32xf32, #tpu.memory_space<vmem>>, %arg9: memref<1x32xf32, #tpu.memory_space<vmem>>, %arg10: memref<32x128xbf16, #tpu.memory_space<vmem>>, %arg11: memref<1x128xf32, #tpu.memory_space<vmem>>, %arg12: memref<128x32xbf16, #tpu.memory_space<vmem>>, %arg13: memref<1x32xf32, #tpu.memory_space<vmem>>, %arg14: memref<1x16x32xf32, #tpu.memory_space<vmem>>, %arg15: memref<4x32x8xbf16, #tpu.memory_space<vmem>>, %arg16: memref<4x32x8xbf16, #tpu.memory_space<vmem>>) attributes {dimension_semantics = [#tpu.dimension_semantics<parallel>, #tpu.dimension_semantics<arbitrary>], iteration_bounds = array<i64: 2, 2>, scalar_prefetch = 0 : i64, scratch_operands = 2 : i64, tpu.core_type = #tpu.core_type<tc>, window_params = [{transform_indices = @transform_0, window_bounds = array<i64: 1, 16, 32>}, {pipeline_mode = #tpu.pipeline_mode<synchronous>, transform_indices = @transform_1, window_bounds = array<i64: 1, 32>}, {pipeline_mode = #tpu.pipeline_mode<synchronous>, transform_indices = @transform_2, window_bounds = array<i64: 1, 32>}, {pipeline_mode = #tpu.pipeline_mode<synchronous>, transform_indices = @transform_3, window_bounds = array<i64: 32, 96>}, {pipeline_mode = #tpu.pipeline_mode<synchronous>, transform_indices = @transform_4, window_bounds = array<i64: 32, 32>}, {pipeline_mode = #tpu.pipeline_mode<synchronous>, transform_indices = @transform_5, window_bounds = array<i64: 1, 32>}, {pipeline_mode = #tpu.pipeline_mode<synchronous>, transform_indices = @transform_6, window_bounds = array<i64: 1, 32>}, {pipeline_mode = #tpu.pipeline_mode<synchronous>, transform_indices = @transform_7, window_bounds = array<i64: 1, 32>}, {pipeline_mode = #tpu.pipeline_mode<synchronous>, transform_indices = @transform_8, window_bounds = array<i64: 32, 128>}, {pipeline_mode = #tpu.pipeline_mode<synchronous>, transform_indices = @transform_9, window_bounds = array<i64: 1, 128>}, {pipeline_mode = #tpu.pipeline_mode<synchronous>, transform_indices = @transform_10, window_bounds = array<i64: 128, 32>}, {pipeline_mode = #tpu.pipeline_mode<synchronous>, transform_indices = @transform_11, window_bounds = array<i64: 1, 32>}, {transform_indices = @transform_12, window_bounds = array<i64: 1, 16, 32>}]} {
    %c16_i32 = arith.constant 16 : i32
    %0 = arith.muli %arg1, %c16_i32 : i32
    %1 = tpu.assume_multiple %0, 16 : i32
    %c0 = arith.constant 0 : index
    %c0_0 = arith.constant 0 : index
    %c0_1 = arith.constant 0 : index
    %2 = vector.load %arg2[%c0, %c0_0, %c0_1] : memref<1x16x32xf32, #tpu.memory_space<vmem>>, vector<1x16x32xf32>
    %3 = vector.shape_cast %2 : vector<1x16x32xf32> to vector<16x32xf32>
    %c0_2 = arith.constant 0 : index
    %c0_3 = arith.constant 0 : index
    %4 = vector.load %arg3[%c0_2, %c0_3] : memref<1x32xf32, #tpu.memory_space<vmem>>, vector<1x32xf32>
    %5 = vector.shape_cast %4 : vector<1x32xf32> to vector<32xf32>
    %c0_4 = arith.constant 0 : index
    %c0_5 = arith.constant 0 : index
    %6 = vector.load %arg4[%c0_4, %c0_5] : memref<1x32xf32, #tpu.memory_space<vmem>>, vector<1x32xf32>
    %7 = vector.shape_cast %6 : vector<1x32xf32> to vector<32xf32>
    %cst = arith.constant dense<0.000000e+00> : vector<16xf32>
    %8 = vector.multi_reduction <add>, %3, %cst [1] : vector<16x32xf32> to vector<16xf32>
    %9 = vector.shape_cast %8 : vector<16xf32> to vector<16x1xf32>
    %cst_6 = arith.constant 3.200000e+01 : f32
    %10 = vector.broadcast %cst_6 : f32 to vector<16x1xf32>
    %11 = arith.divf %9, %10 : vector<16x1xf32>
    %12 = vector.broadcast %11 : vector<16x1xf32> to vector<16x32xf32>
    %13 = arith.subf %3, %12 : vector<16x32xf32>
    %14 = arith.mulf %13, %13 : vector<16x32xf32>
    %cst_7 = arith.constant dense<0.000000e+00> : vector<16xf32>
    %15 = vector.multi_reduction <add>, %14, %cst_7 [1] : vector<16x32xf32> to vector<16xf32>
    %16 = vector.shape_cast %15 : vector<16xf32> to vector<16x1xf32>
    %cst_8 = arith.constant 3.200000e+01 : f32
    %17 = vector.broadcast %cst_8 : f32 to vector<16x1xf32>
    %18 = arith.divf %16, %17 : vector<16x1xf32>
    %19 = vector.broadcast %11 : vector<16x1xf32> to vector<16x32xf32>
    %20 = arith.subf %3, %19 : vector<16x32xf32>
    %cst_9 = arith.constant 9.99999974E-6 : f32
    %21 = vector.broadcast %cst_9 : f32 to vector<16x1xf32>
    %22 = arith.addf %18, %21 : vector<16x1xf32>
    %23 = math.rsqrt %22 : vector<16x1xf32>
    %24 = vector.broadcast %23 : vector<16x1xf32> to vector<16x32xf32>
    %25 = arith.mulf %20, %24 : vector<16x32xf32>
    %26 = vector.shape_cast %5 : vector<32xf32> to vector<1x32xf32>
    %27 = vector.broadcast %26 : vector<1x32xf32> to vector<16x32xf32>
    %28 = arith.mulf %25, %27 : vector<16x32xf32>
    %29 = vector.shape_cast %7 : vector<32xf32> to vector<1x32xf32>
    %30 = vector.broadcast %29 : vector<1x32xf32> to vector<16x32xf32>
    %31 = arith.addf %28, %30 : vector<16x32xf32>
    %32 = arith.truncf %31 : vector<16x32xf32> to vector<16x32xbf16>
    %c0_10 = arith.constant 0 : index
    %c0_11 = arith.constant 0 : index
    %33 = vector.load %arg5[%c0_10, %c0_11] : memref<32x96xbf16, #tpu.memory_space<vmem>>, vector<32x96xbf16>
    %cst_12 = arith.constant dense<0.000000e+00> : vector<16x96xf32>
    %34 = tpu.matmul %32, %33, %cst_12 {dimension_numbers = #tpu.dot_dimension_numbers<[1], [0], [0], [1], [0, 0, 1, 1], [], []>} : vector<16x32xbf16>, vector<32x96xbf16>, vector<16x96xf32> -> vector<16x96xf32>
    %35 = vector.extract_strided_slice %34 {offsets = [0, 32], sizes = [16, 8], strides = [1, 1]} : vector<16x96xf32> to vector<16x8xf32>
    %36 = arith.truncf %35 : vector<16x8xf32> to vector<16x8xbf16>
    %c0_13 = arith.constant 0 : index
    %37 = arith.index_cast %1 : i32 to index
    %c0_14 = arith.constant 0 : index
    %38 = vector.load %arg15[%c0_13, %37, %c0_14] : memref<4x32x8xbf16, #tpu.memory_space<vmem>>, vector<1x16x8xbf16>
    %39 = vector.shape_cast %38 : vector<1x16x8xbf16> to vector<16x8xbf16>
    %40 = vector.shape_cast %36 : vector<16x8xbf16> to vector<1x16x8xbf16>
    tpu.vector_store %arg15[%c0_13, %37, %c0_14], %40 {strides = array<i32>} : memref<4x32x8xbf16, #tpu.memory_space<vmem>>, vector<1x16x8xbf16>,
    %41 = vector.extract_strided_slice %34 {offsets = [0, 64], sizes = [16, 8], strides = [1, 1]} : vector<16x96xf32> to vector<16x8xf32>
    %42 = arith.truncf %41 : vector<16x8xf32> to vector<16x8xbf16>
    %c0_15 = arith.constant 0 : index
    %43 = arith.index_cast %1 : i32 to index
    %c0_16 = arith.constant 0 : index
    %44 = vector.load %arg16[%c0_15, %43, %c0_16] : memref<4x32x8xbf16, #tpu.memory_space<vmem>>, vector<1x16x8xbf16>
    %45 = vector.shape_cast %44 : vector<1x16x8xbf16> to vector<16x8xbf16>
    %46 = vector.shape_cast %42 : vector<16x8xbf16> to vector<1x16x8xbf16>
    tpu.vector_store %arg16[%c0_15, %43, %c0_16], %46 {strides = array<i32>} : memref<4x32x8xbf16, #tpu.memory_space<vmem>>, vector<1x16x8xbf16>,
    %47 = vector.extract_strided_slice %34 {offsets = [0, 40], sizes = [16, 8], strides = [1, 1]} : vector<16x96xf32> to vector<16x8xf32>
    %48 = arith.truncf %47 : vector<16x8xf32> to vector<16x8xbf16>
    %c1 = arith.constant 1 : index
    %49 = arith.index_cast %1 : i32 to index
    %c0_17 = arith.constant 0 : index
    %50 = vector.load %arg15[%c1, %49, %c0_17] : memref<4x32x8xbf16, #tpu.memory_space<vmem>>, vector<1x16x8xbf16>
    %51 = vector.shape_cast %50 : vector<1x16x8xbf16> to vector<16x8xbf16>
    %52 = vector.shape_cast %48 : vector<16x8xbf16> to vector<1x16x8xbf16>
    tpu.vector_store %arg15[%c1, %49, %c0_17], %52 {strides = array<i32>} : memref<4x32x8xbf16, #tpu.memory_space<vmem>>, vector<1x16x8xbf16>,
    %53 = vector.extract_strided_slice %34 {offsets = [0, 72], sizes = [16, 8], strides = [1, 1]} : vector<16x96xf32> to vector<16x8xf32>
    %54 = arith.truncf %53 : vector<16x8xf32> to vector<16x8xbf16>
    %c1_18 = arith.constant 1 : index
    %55 = arith.index_cast %1 : i32 to index
    %c0_19 = arith.constant 0 : index
    %56 = vector.load %arg16[%c1_18, %55, %c0_19] : memref<4x32x8xbf16, #tpu.memory_space<vmem>>, vector<1x16x8xbf16>
    %57 = vector.shape_cast %56 : vector<1x16x8xbf16> to vector<16x8xbf16>
    %58 = vector.shape_cast %54 : vector<16x8xbf16> to vector<1x16x8xbf16>
    tpu.vector_store %arg16[%c1_18, %55, %c0_19], %58 {strides = array<i32>} : memref<4x32x8xbf16, #tpu.memory_space<vmem>>, vector<1x16x8xbf16>,
    %59 = vector.extract_strided_slice %34 {offsets = [0, 48], sizes = [16, 8], strides = [1, 1]} : vector<16x96xf32> to vector<16x8xf32>
    %60 = arith.truncf %59 : vector<16x8xf32> to vector<16x8xbf16>
    %c2 = arith.constant 2 : index
    %61 = arith.index_cast %1 : i32 to index
    %c0_20 = arith.constant 0 : index
    %62 = vector.load %arg15[%c2, %61, %c0_20] : memref<4x32x8xbf16, #tpu.memory_space<vmem>>, vector<1x16x8xbf16>
    %63 = vector.shape_cast %62 : vector<1x16x8xbf16> to vector<16x8xbf16>
    %64 = vector.shape_cast %60 : vector<16x8xbf16> to vector<1x16x8xbf16>
    tpu.vector_store %arg15[%c2, %61, %c0_20], %64 {strides = array<i32>} : memref<4x32x8xbf16, #tpu.memory_space<vmem>>, vector<1x16x8xbf16>,
    %65 = vector.extract_strided_slice %34 {offsets = [0, 80], sizes = [16, 8], strides = [1, 1]} : vector<16x96xf32> to vector<16x8xf32>
    %66 = arith.truncf %65 : vector<16x8xf32> to vector<16x8xbf16>
    %c2_21 = arith.constant 2 : index
    %67 = arith.index_cast %1 : i32 to index
    %c0_22 = arith.constant 0 : index
    %68 = vector.load %arg16[%c2_21, %67, %c0_22] : memref<4x32x8xbf16, #tpu.memory_space<vmem>>, vector<1x16x8xbf16>
    %69 = vector.shape_cast %68 : vector<1x16x8xbf16> to vector<16x8xbf16>
    %70 = vector.shape_cast %66 : vector<16x8xbf16> to vector<1x16x8xbf16>
    tpu.vector_store %arg16[%c2_21, %67, %c0_22], %70 {strides = array<i32>} : memref<4x32x8xbf16, #tpu.memory_space<vmem>>, vector<1x16x8xbf16>,
    %71 = vector.extract_strided_slice %34 {offsets = [0, 56], sizes = [16, 8], strides = [1, 1]} : vector<16x96xf32> to vector<16x8xf32>
    %72 = arith.truncf %71 : vector<16x8xf32> to vector<16x8xbf16>
    %c3 = arith.constant 3 : index
    %73 = arith.index_cast %1 : i32 to index
    %c0_23 = arith.constant 0 : index
    %74 = vector.load %arg15[%c3, %73, %c0_23] : memref<4x32x8xbf16, #tpu.memory_space<vmem>>, vector<1x16x8xbf16>
    %75 = vector.shape_cast %74 : vector<1x16x8xbf16> to vector<16x8xbf16>
    %76 = vector.shape_cast %72 : vector<16x8xbf16> to vector<1x16x8xbf16>
    tpu.vector_store %arg15[%c3, %73, %c0_23], %76 {strides = array<i32>} : memref<4x32x8xbf16, #tpu.memory_space<vmem>>, vector<1x16x8xbf16>,
    %77 = vector.extract_strided_slice %34 {offsets = [0, 88], sizes = [16, 8], strides = [1, 1]} : vector<16x96xf32> to vector<16x8xf32>
    %78 = arith.truncf %77 : vector<16x8xf32> to vector<16x8xbf16>
    %c3_24 = arith.constant 3 : index
    %79 = arith.index_cast %1 : i32 to index
    %c0_25 = arith.constant 0 : index
    %80 = vector.load %arg16[%c3_24, %79, %c0_25] : memref<4x32x8xbf16, #tpu.memory_space<vmem>>, vector<1x16x8xbf16>
    %81 = vector.shape_cast %80 : vector<1x16x8xbf16> to vector<16x8xbf16>
    %82 = vector.shape_cast %78 : vector<16x8xbf16> to vector<1x16x8xbf16>
    tpu.vector_store %arg16[%c3_24, %79, %c0_25], %82 {strides = array<i32>} : memref<4x32x8xbf16, #tpu.memory_space<vmem>>, vector<1x16x8xbf16>,
    %83 = vector.extract_strided_slice %34 {offsets = [0, 0], sizes = [16, 8], strides = [1, 1]} : vector<16x96xf32> to vector<16x8xf32>
    %84 = vector.extract_strided_slice %34 {offsets = [0, 8], sizes = [16, 8], strides = [1, 1]} : vector<16x96xf32> to vector<16x8xf32>
    %85 = vector.extract_strided_slice %34 {offsets = [0, 16], sizes = [16, 8], strides = [1, 1]} : vector<16x96xf32> to vector<16x8xf32>
    %86 = vector.extract_strided_slice %34 {offsets = [0, 24], sizes = [16, 8], strides = [1, 1]} : vector<16x96xf32> to vector<16x8xf32>
    %87 = vector.shape_cast %83 : vector<16x8xf32> to vector<1x16x8xf32>
    %88 = vector.shape_cast %84 : vector<16x8xf32> to vector<1x16x8xf32>
    %89 = vector.shape_cast %85 : vector<16x8xf32> to vector<1x16x8xf32>
    %90 = vector.shape_cast %86 : vector<16x8xf32> to vector<1x16x8xf32>
    %91 = tpu.concatenate %87, %88, %89, %90 in 0 : vector<1x16x8xf32>, vector<1x16x8xf32>, vector<1x16x8xf32>, vector<1x16x8xf32> -> vector<4x16x8xf32>
    %92 = arith.truncf %91 : vector<4x16x8xf32> to vector<4x16x8xbf16>
    %93 = tpu.iota {dimensions = array<i32: 0>} : vector<16x16xi32>
    %94 = tpu.iota {dimensions = array<i32: 1>} : vector<16x16xi32>
    %95 = arith.cmpi sle, %94, %93 : vector<16x16xi32>
    %cst_26 = arith.constant -1.000000e+30 : f32
    %96 = vector.broadcast %cst_26 : f32 to vector<4x16x1xf32>
    %cst_27 = arith.constant 0.000000e+00 : f32
    %97 = vector.broadcast %cst_27 : f32 to vector<4x16x1xf32>
    %cst_28 = arith.constant 0.000000e+00 : f32
    %98 = vector.broadcast %cst_28 : f32 to vector<4x16x8xf32>
    %c1_i32 = arith.constant 1 : i32
    %99 = arith.addi %arg1, %c1_i32 : i32
    %c0_i32 = arith.constant 0 : i32
    %100 = arith.subi %99, %c0_i32 : i32
    %101 = arith.addi %c0_i32, %100 : i32
    %c1_i32_29 = arith.constant 1 : i32
    %102:3 = scf.for %arg17 = %c0_i32 to %101 step %c1_i32_29 iter_args(%arg18 = %96, %arg19 = %97, %arg20 = %98) -> (vector<4x16x1xf32>, vector<4x16x1xf32>, vector<4x16x8xf32>)  : i32 {
      %c16_i32_58 = arith.constant 16 : i32
      %174 = arith.muli %arg17, %c16_i32_58 : i32
      %175 = tpu.assume_multiple %174, 16 : i32
      %c0_59 = arith.constant 0 : index
      %176 = arith.index_cast %175 : i32 to index
      %c0_60 = arith.constant 0 : index
      %177 = vector.load %arg15[%c0_59, %176, %c0_60] : memref<4x32x8xbf16, #tpu.memory_space<vmem>>, vector<4x16x8xbf16>
      %c0_61 = arith.constant 0 : index
      %178 = arith.index_cast %175 : i32 to index
      %c0_62 = arith.constant 0 : index
      %179 = vector.load %arg16[%c0_61, %178, %c0_62] : memref<4x32x8xbf16, #tpu.memory_space<vmem>>, vector<4x16x8xbf16>
      "tpu.trace_start"() <{level = 10 : i32, message = "hqd,hkd->hqk"}> : () -> ()
      %cst_63 = arith.constant dense<0.000000e+00> : vector<4x16x16xf32>
      %180 = tpu.matmul %92, %177, %cst_63 {dimension_numbers = #tpu.dot_dimension_numbers<[2], [2], [1], [1], [0, 0, 0, 1, 1, 1], [0], [0]>} : vector<4x16x8xbf16>, vector<4x16x8xbf16>, vector<4x16x16xf32> -> vector<4x16x16xf32>
      "tpu.trace_stop"() : () -> ()
      %181 = arith.cmpi slt, %arg17, %arg1 : i32
      %182 = vector.broadcast %181 : i1 to vector<16x16xi1>
      %183 = arith.ori %95, %182 : vector<16x16xi1>
      %184 = vector.shape_cast %183 : vector<16x16xi1> to vector<1x16x16xi1>
      %cst_64 = arith.constant -1.000000e+30 : f32
      %185 = vector.shape_cast %184 : vector<1x16x16xi1> to vector<1x16x16xi1>
      %186 = vector.broadcast %185 : vector<1x16x16xi1> to vector<4x16x16xi1>
      %187 = vector.broadcast %cst_64 : f32 to vector<4x16x16xf32>
      %188 = arith.select %186, %180, %187 : vector<4x16x16xi1>, vector<4x16x16xf32>
      %cst_65 = arith.constant dense<0xFF800000> : vector<4x16xf32>
      %189 = vector.multi_reduction <maximumf>, %188, %cst_65 [2] : vector<4x16x16xf32> to vector<4x16xf32>
      %190 = vector.shape_cast %189 : vector<4x16xf32> to vector<4x16x1xf32>
      %191 = arith.maximumf %arg18, %190 : vector<4x16x1xf32>
      %192 = arith.subf %arg18, %191 : vector<4x16x1xf32>
      %193 = math.exp %192 : vector<4x16x1xf32>
      %194 = vector.broadcast %191 : vector<4x16x1xf32> to vector<4x16x16xf32>
      %195 = arith.subf %188, %194 : vector<4x16x16xf32>
      %196 = math.exp %195 : vector<4x16x16xf32>
      %197 = arith.mulf %193, %arg19 : vector<4x16x1xf32>
      %cst_66 = arith.constant dense<0.000000e+00> : vector<4x16xf32>
      %198 = vector.multi_reduction <add>, %196, %cst_66 [2] : vector<4x16x16xf32> to vector<4x16xf32>
      %199 = vector.shape_cast %198 : vector<4x16xf32> to vector<4x16x1xf32>
      %200 = arith.addf %197, %199 : vector<4x16x1xf32>
      %201 = vector.broadcast %193 : vector<4x16x1xf32> to vector<4x16x8xf32>
      %202 = arith.mulf %201, %arg20 : vector<4x16x8xf32>
      %203 = arith.truncf %196 : vector<4x16x16xf32> to vector<4x16x16xbf16>
      "tpu.trace_start"() <{level = 10 : i32, message = "hqk,hkd->hqd"}> : () -> ()
      %cst_67 = arith.constant dense<0.000000e+00> : vector<4x16x8xf32>
      %204 = tpu.matmul %203, %179, %cst_67 {dimension_numbers = #tpu.dot_dimension_numbers<[2], [1], [1], [2], [0, 0, 0, 1, 1, 2], [0], [0]>} : vector<4x16x16xbf16>, vector<4x16x8xbf16>, vector<4x16x8xf32> -> vector<4x16x8xf32>
      "tpu.trace_stop"() : () -> ()
      %205 = arith.addf %202, %204 : vector<4x16x8xf32>
      scf.yield %191, %200, %205 : vector<4x16x1xf32>, vector<4x16x1xf32>, vector<4x16x8xf32>
    }
    %103 = tpu.reciprocal %102#1 {approx = true} : vector<4x16x1xf32> -> vector<4x16x1xf32>
    %104 = vector.broadcast %103 : vector<4x16x1xf32> to vector<4x16x8xf32>
    %105 = arith.mulf %102#2, %104 : vector<4x16x8xf32>
    %106 = vector.extract_strided_slice %105 {offsets = [0, 0, 0], sizes = [1, 16, 8], strides = [1, 1, 1]} : vector<4x16x8xf32> to vector<1x16x8xf32>
    %107 = vector.shape_cast %106 : vector<1x16x8xf32> to vector<16x8xf32>
    %108 = vector.extract_strided_slice %105 {offsets = [1, 0, 0], sizes = [1, 16, 8], strides = [1, 1, 1]} : vector<4x16x8xf32> to vector<1x16x8xf32>
    %109 = vector.shape_cast %108 : vector<1x16x8xf32> to vector<16x8xf32>
    %110 = vector.extract_strided_slice %105 {offsets = [2, 0, 0], sizes = [1, 16, 8], strides = [1, 1, 1]} : vector<4x16x8xf32> to vector<1x16x8xf32>
    %111 = vector.shape_cast %110 : vector<1x16x8xf32> to vector<16x8xf32>
    %112 = vector.extract_strided_slice %105 {offsets = [3, 0, 0], sizes = [1, 16, 8], strides = [1, 1, 1]} : vector<4x16x8xf32> to vector<1x16x8xf32>
    %113 = vector.shape_cast %112 : vector<1x16x8xf32> to vector<16x8xf32>
    %114 = tpu.concatenate %107, %109, %111, %113 in 1 : vector<16x8xf32>, vector<16x8xf32>, vector<16x8xf32>, vector<16x8xf32> -> vector<16x32xf32>
    %115 = arith.truncf %114 : vector<16x32xf32> to vector<16x32xbf16>
    %c0_30 = arith.constant 0 : index
    %c0_31 = arith.constant 0 : index
    %116 = vector.load %arg6[%c0_30, %c0_31] : memref<32x32xbf16, #tpu.memory_space<vmem>>, vector<32x32xbf16>
    %cst_32 = arith.constant dense<0.000000e+00> : vector<16x32xf32>
    %117 = tpu.matmul %115, %116, %cst_32 {dimension_numbers = #tpu.dot_dimension_numbers<[1], [0], [0], [1], [0, 0, 1, 1], [], []>} : vector<16x32xbf16>, vector<32x32xbf16>, vector<16x32xf32> -> vector<16x32xf32>
    %c0_33 = arith.constant 0 : index
    %c0_34 = arith.constant 0 : index
    %118 = vector.load %arg7[%c0_33, %c0_34] : memref<1x32xf32, #tpu.memory_space<vmem>>, vector<1x32xf32>
    %119 = vector.shape_cast %118 : vector<1x32xf32> to vector<32xf32>
    %120 = vector.shape_cast %119 : vector<32xf32> to vector<1x32xf32>
    %121 = vector.broadcast %120 : vector<1x32xf32> to vector<16x32xf32>
    %122 = arith.addf %117, %121 : vector<16x32xf32>
    %123 = arith.addf %3, %122 : vector<16x32xf32>
    %c0_35 = arith.constant 0 : index
    %c0_36 = arith.constant 0 : index
    %124 = vector.load %arg8[%c0_35, %c0_36] : memref<1x32xf32, #tpu.memory_space<vmem>>, vector<1x32xf32>
    %125 = vector.shape_cast %124 : vector<1x32xf32> to vector<32xf32>
    %c0_37 = arith.constant 0 : index
    %c0_38 = arith.constant 0 : index
    %126 = vector.load %arg9[%c0_37, %c0_38] : memref<1x32xf32, #tpu.memory_space<vmem>>, vector<1x32xf32>
    %127 = vector.shape_cast %126 : vector<1x32xf32> to vector<32xf32>
    %cst_39 = arith.constant dense<0.000000e+00> : vector<16xf32>
    %128 = vector.multi_reduction <add>, %123, %cst_39 [1] : vector<16x32xf32> to vector<16xf32>
    %129 = vector.shape_cast %128 : vector<16xf32> to vector<16x1xf32>
    %cst_40 = arith.constant 3.200000e+01 : f32
    %130 = vector.broadcast %cst_40 : f32 to vector<16x1xf32>
    %131 = arith.divf %129, %130 : vector<16x1xf32>
    %132 = vector.broadcast %131 : vector<16x1xf32> to vector<16x32xf32>
    %133 = arith.subf %123, %132 : vector<16x32xf32>
    %134 = arith.mulf %133, %133 : vector<16x32xf32>
    %cst_41 = arith.constant dense<0.000000e+00> : vector<16xf32>
    %135 = vector.multi_reduction <add>, %134, %cst_41 [1] : vector<16x32xf32> to vector<16xf32>
    %136 = vector.shape_cast %135 : vector<16xf32> to vector<16x1xf32>
    %cst_42 = arith.constant 3.200000e+01 : f32
    %137 = vector.broadcast %cst_42 : f32 to vector<16x1xf32>
    %138 = arith.divf %136, %137 : vector<16x1xf32>
    %139 = vector.broadcast %131 : vector<16x1xf32> to vector<16x32xf32>
    %140 = arith.subf %123, %139 : vector<16x32xf32>
    %cst_43 = arith.constant 9.99999974E-6 : f32
    %141 = vector.broadcast %cst_43 : f32 to vector<16x1xf32>
    %142 = arith.addf %138, %141 : vector<16x1xf32>
    %143 = math.rsqrt %142 : vector<16x1xf32>
    %144 = vector.broadcast %143 : vector<16x1xf32> to vector<16x32xf32>
    %145 = arith.mulf %140, %144 : vector<16x32xf32>
    %146 = vector.shape_cast %125 : vector<32xf32> to vector<1x32xf32>
    %147 = vector.broadcast %146 : vector<1x32xf32> to vector<16x32xf32>
    %148 = arith.mulf %145, %147 : vector<16x32xf32>
    %149 = vector.shape_cast %127 : vector<32xf32> to vector<1x32xf32>
    %150 = vector.broadcast %149 : vector<1x32xf32> to vector<16x32xf32>
    %151 = arith.addf %148, %150 : vector<16x32xf32>
    %152 = arith.truncf %151 : vector<16x32xf32> to vector<16x32xbf16>
    %c0_44 = arith.constant 0 : index
    %c0_45 = arith.constant 0 : index
    %153 = vector.load %arg10[%c0_44, %c0_45] : memref<32x128xbf16, #tpu.memory_space<vmem>>, vector<32x128xbf16>
    %cst_46 = arith.constant dense<0.000000e+00> : vector<16x128xf32>
    %154 = tpu.matmul %152, %153, %cst_46 {dimension_numbers = #tpu.dot_dimension_numbers<[1], [0], [0], [1], [0, 0, 1, 1], [], []>} : vector<16x32xbf16>, vector<32x128xbf16>, vector<16x128xf32> -> vector<16x128xf32>
    %c0_47 = arith.constant 0 : index
    %c0_48 = arith.constant 0 : index
    %155 = vector.load %arg11[%c0_47, %c0_48] : memref<1x128xf32, #tpu.memory_space<vmem>>, vector<1x128xf32>
    %156 = vector.shape_cast %155 : vector<1x128xf32> to vector<128xf32>
    %157 = vector.shape_cast %156 : vector<128xf32> to vector<1x128xf32>
    %158 = vector.broadcast %157 : vector<1x128xf32> to vector<16x128xf32>
    %159 = arith.addf %154, %158 : vector<16x128xf32>
    %cst_49 = arith.constant 0.000000e+00 : f32
    %160 = vector.broadcast %cst_49 : f32 to vector<16x128xf32>
    %161 = arith.maximumf %159, %160 : vector<16x128xf32>
    %162 = arith.truncf %161 : vector<16x128xf32> to vector<16x128xbf16>
    %c0_50 = arith.constant 0 : index
    %c0_51 = arith.constant 0 : index
    %163 = vector.load %arg12[%c0_50, %c0_51] : memref<128x32xbf16, #tpu.memory_space<vmem>>, vector<128x32xbf16>
    %cst_52 = arith.constant dense<0.000000e+00> : vector<16x32xf32>
    %164 = tpu.matmul %162, %163, %cst_52 {dimension_numbers = #tpu.dot_dimension_numbers<[1], [0], [0], [1], [0, 0, 1, 1], [], []>} : vector<16x128xbf16>, vector<128x32xbf16>, vector<16x32xf32> -> vector<16x32xf32>
    %c0_53 = arith.constant 0 : index
    %c0_54 = arith.constant 0 : index
    %165 = vector.load %arg13[%c0_53, %c0_54] : memref<1x32xf32, #tpu.memory_space<vmem>>, vector<1x32xf32>
    %166 = vector.shape_cast %165 : vector<1x32xf32> to vector<32xf32>
    %167 = vector.shape_cast %166 : vector<32xf32> to vector<1x32xf32>
    %168 = vector.broadcast %167 : vector<1x32xf32> to vector<16x32xf32>
    %169 = arith.addf %164, %168 : vector<16x32xf32>
    %170 = arith.addf %123, %169 : vector<16x32xf32>
    %c0_55 = arith.constant 0 : index
    %c0_56 = arith.constant 0 : index
    %c0_57 = arith.constant 0 : index
    %171 = vector.load %arg14[%c0_55, %c0_56, %c0_57] : memref<1x16x32xf32, #tpu.memory_space<vmem>>, vector<1x16x32xf32>
    %172 = vector.shape_cast %171 : vector<1x16x32xf32> to vector<16x32xf32>
    %173 = vector.shape_cast %170 : vector<16x32xf32> to vector<1x16x32xf32>
    tpu.vector_store %arg14[%c0_55, %c0_56, %c0_57], %173 {strides = array<i32>} : memref<1x16x32xf32, #tpu.memory_space<vmem>>, vector<1x16x32xf32>,
    return
  }
  func.func @transform_0(%arg0: i32, %arg1: i32) -> (i32, i32, i32) {
    %c0_i32 = arith.constant 0 : i32
    %c0_i32_0 = arith.constant 0 : i32
    return %arg0, %arg1, %c0_i32 : i32, i32, i32
  }
  func.func @transform_1(%arg0: i32, %arg1: i32) -> (i32, i32) {
    %c0_i32 = arith.constant 0 : i32
    %c0_i32_0 = arith.constant 0 : i32
    %c0_i32_1 = arith.constant 0 : i32
    return %c0_i32, %c0_i32_0 : i32, i32
  }
  func.func @transform_2(%arg0: i32, %arg1: i32) -> (i32, i32) {
    %c0_i32 = arith.constant 0 : i32
    %c0_i32_0 = arith.constant 0 : i32
    %c0_i32_1 = arith.constant 0 : i32
    return %c0_i32, %c0_i32_0 : i32, i32
  }
  func.func @transform_3(%arg0: i32, %arg1: i32) -> (i32, i32) {
    %c0_i32 = arith.constant 0 : i32
    %c0_i32_0 = arith.constant 0 : i32
    %c0_i32_1 = arith.constant 0 : i32
    return %c0_i32, %c0_i32_0 : i32, i32
  }
  func.func @transform_4(%arg0: i32, %arg1: i32) -> (i32, i32) {
    %c0_i32 = arith.constant 0 : i32
    %c0_i32_0 = arith.constant 0 : i32
    %c0_i32_1 = arith.constant 0 : i32
    return %c0_i32, %c0_i32_0 : i32, i32
  }
  func.func @transform_5(%arg0: i32, %arg1: i32) -> (i32, i32) {
    %c0_i32 = arith.constant 0 : i32
    %c0_i32_0 = arith.constant 0 : i32
    %c0_i32_1 = arith.constant 0 : i32
    return %c0_i32, %c0_i32_0 : i32, i32
  }
  func.func @transform_6(%arg0: i32, %arg1: i32) -> (i32, i32) {
    %c0_i32 = arith.constant 0 : i32
    %c0_i32_0 = arith.constant 0 : i32
    %c0_i32_1 = arith.constant 0 : i32
    return %c0_i32, %c0_i32_0 : i32, i32
  }
  func.func @transform_7(%arg0: i32, %arg1: i32) -> (i32, i32) {
    %c0_i32 = arith.constant 0 : i32
    %c0_i32_0 = arith.constant 0 : i32
    %c0_i32_1 = arith.constant 0 : i32
    return %c0_i32, %c0_i32_0 : i32, i32
  }
  func.func @transform_8(%arg0: i32, %arg1: i32) -> (i32, i32) {
    %c0_i32 = arith.constant 0 : i32
    %c0_i32_0 = arith.constant 0 : i32
    %c0_i32_1 = arith.constant 0 : i32
    return %c0_i32, %c0_i32_0 : i32, i32
  }
  func.func @transform_9(%arg0: i32, %arg1: i32) -> (i32, i32) {
    %c0_i32 = arith.constant 0 : i32
    %c0_i32_0 = arith.constant 0 : i32
    %c0_i32_1 = arith.constant 0 : i32
    return %c0_i32, %c0_i32_0 : i32, i32
  }
  func.func @transform_10(%arg0: i32, %arg1: i32) -> (i32, i32) {
    %c0_i32 = arith.constant 0 : i32
    %c0_i32_0 = arith.constant 0 : i32
    %c0_i32_1 = arith.constant 0 : i32
    return %c0_i32, %c0_i32_0 : i32, i32
  }
  func.func @transform_11(%arg0: i32, %arg1: i32) -> (i32, i32) {
    %c0_i32 = arith.constant 0 : i32
    %c0_i32_0 = arith.constant 0 : i32
    %c0_i32_1 = arith.constant 0 : i32
    return %c0_i32, %c0_i32_0 : i32, i32
  }
  func.func @transform_12(%arg0: i32, %arg1: i32) -> (i32, i32, i32) {
    %c0_i32 = arith.constant 0 : i32
    %c0_i32_0 = arith.constant 0 : i32
    return %arg0, %arg1, %c0_i32 : i32, i32, i32
  }
}

</mosaic_0001>

<llo_original>
// kernel: tpu_custom_call.1
$region0: #{tpu_custom_call.1}
  #allocation0 [shape = 'u32[]', space=smem, size = 0x4, offset = 0x4, fixed_abs, tag = 'smem constant byte address 0x4 - core index']
  #allocation1 [shape = 'u32[144,128]{1,0:T(1,128)}', space=vmem, size = 0x12000, scoped, tag = 'internal scratch']
  #allocation2 [shape = 'bf16[4,32,8]{2,1,0:T(16,128)(2,1)}', space=vmem, size = 0x8000, scoped, tag = 'scratch operand']
  #allocation3 [shape = 'bf16[4,32,8]{2,1,0:T(16,128)(2,1)}', space=vmem, size = 0x8000, scoped, tag = 'scratch operand']
  %s0 = inlined_call_operand.vmem [shape: f32[2,32,32], index: 0, kind: input, shape index: {}]
  %s1 = inlined_call_operand.vmem [shape: f32[1,32], index: 1, kind: input, shape index: {}]
  %s2 = inlined_call_operand.vmem [shape: f32[1,32], index: 2, kind: input, shape index: {}]
  %s3 = inlined_call_operand.vmem [shape: bf16[32,96], index: 3, kind: input, shape index: {}]
  %s4 = inlined_call_operand.hbm [shape: bf16[32,32], index: 4, kind: input, shape index: {}]
  %s5 = inlined_call_operand.vmem [shape: f32[1,32], index: 5, kind: input, shape index: {}]
  %s6 = inlined_call_operand.vmem [shape: f32[1,32], index: 6, kind: input, shape index: {}]
  %s7 = inlined_call_operand.vmem [shape: f32[1,32], index: 7, kind: input, shape index: {}]
  %s8 = inlined_call_operand.hbm [shape: bf16[32,128], index: 8, kind: input, shape index: {}]
  %s9 = inlined_call_operand.vmem [shape: f32[1,128], index: 9, kind: input, shape index: {}]
  %s10 = inlined_call_operand.vmem [shape: bf16[128,32], index: 10, kind: input, shape index: {}]
  %s11 = inlined_call_operand.vmem [shape: f32[1,32], index: 11, kind: input, shape index: {}]
  %s12 = inlined_call_operand.hbm [shape: f32[2,32,32], index: 12, kind: output, shape index: {}]
  %s13 = sld [smem:[#allocation0]]
  $region96: #{tpu_custom_call.1} parent=0
    _
  %s15 = ssub.s32 1, %s13
  %s16 = scalar_select 0, %s15, %s13
  $region1: #{tpu_custom_call.1} parent=0
    #allocation4 [shape = 'u8[8192]{0}', space=vmem, size = 0x2000, scoped, tag = 'input window, operand 4, single buffered']
    #allocation5 [shape = 's32[2]{0}', space=sflag, size = 0x8, scoped, tag = 'scoped memory for tpu_custom_call.1']
    #allocation6 [shape = 's32[2]{0}', space=sflag, size = 0x8, scoped, tag = 'scoped memory for tpu_custom_call.1']
    #allocation7 [shape = 'u8[8192]{0}', space=vmem, size = 0x2000, scoped, tag = 'input window, operand 8, single buffered']
    #allocation8 [shape = 's32[1]{0}', space=sflag, size = 0x4, scoped, tag = 'scoped memory for tpu_custom_call.1']
    #allocation9 [shape = 'u8[16384]{0}', space=vmem, size = 0x4000, scoped, tag = 'output window, operand 0']
    %17 = vsyncpa [#allocation5], 0
    %18 = vsyncpa [#allocation8], 0
    %19 = vsyncpa [#allocation6], 0
    %s20 = scalar_lea.sflag [#allocation6], 1
    %21 = vsyncpa %s20, 0
    loop: start=0, step=1, limit=6
    $region2: #{tpu_custom_call.1} parent=1 // loop_pre_header
      _
    $region3: #{tpu_custom_call.1} parent=1 // loop_header
      %s23 = sphi 0, %s27
      %p24 = scmp.ge.s32.totalorder %s23, 6
      %s30 = sphi 0, %s42
      %s31 = sphi 0, %s38
      %s32 = sphi 0, %s30
      %s33 = sphi 0, %s31
      %s34 = sphi 0, %s32
      %s35 = sphi 0, %s33
      %s47 = sphi 0, %s49
      %s50 = sphi 0, %s47
      %s51 = sphi 0, %s50
      %s67 = sphi 0, %s51
      %s71 = sphi 0, %s71
      %s73 = sphi 0, %s71
      %s74 = sphi 0, %s73
      %s88 = sphi 0, %s74
      %s92 = sphi 0, %s92
      %s94 = sphi 0, %s92
      %s95 = sphi 0, %s94
      %s109 = sphi 0, %s95
      %s113 = sphi 0, %s113
      %s115 = sphi 0, %s113
      %s116 = sphi 0, %s115
      %s130 = sphi 0, %s116
      %s134 = sphi 0, %s134
      %s136 = sphi 0, %s134
      %s137 = sphi 0, %s136
      %s151 = sphi 0, %s137
      %s155 = sphi 0, %s155
      %s157 = sphi 0, %s155
      %s158 = sphi 0, %s157
      %s172 = sphi 0, %s158
      %s176 = sphi 0, %s176
      %s178 = sphi 0, %s176
      %s179 = sphi 0, %s178
      %s193 = sphi 0, %s179
      %s197 = sphi 0, %s197
      %s199 = sphi 0, %s197
      %s200 = sphi 0, %s199
      %s214 = sphi 0, %s200
      %s218 = sphi 0, %s218
      %s220 = sphi 0, %s218
      %s221 = sphi 0, %s220
      %s235 = sphi 0, %s221
      %s239 = sphi 0, %s239
      %s241 = sphi 0, %s239
      %s242 = sphi 0, %s241
      %s256 = sphi 0, %s242
      %s260 = sphi 0, %s260
      %s262 = sphi 0, %s260
      %s263 = sphi 0, %s262
      %s277 = sphi 0, %s263
      %s281 = sphi 0, %s281
      %s283 = sphi 0, %s281
      %s284 = sphi 0, %s283
      %s298 = sphi 0, %s284
      %s306 = sphi 0, %s308
      %s309 = sphi 0, %s306
      %s310 = sphi 0, %s309
      %s326 = sphi 0, %s310
    $region4: #{tpu_custom_call.1} parent=1 // loop_header_branch
      %26 = sbr.rel (%p24) target = $region8
    $region5: #{tpu_custom_call.1} parent=1 // loop_body
      %s28 = ssub.s32 %s23, 1
      %s29 = ssub.s32 %s23, 2
      %s36 = sadd.s32 1, %s31
      %p37 = scmp.ge.s32.totalorder %s36, 2
      %s38 = scalar_select %p37, 0, %s36
      %s39 = sadd.s32 1, %s30
      %s40 = scalar_select %p37, %s39, %s30
      %p41 = scmp.ge.s32.totalorder %s40, 2
      %s42 = scalar_select %p41, 0, %s40
      %s43 = ssub.s32 %s30, %s42
      %s44 = ssub.s32 %s31, %s38
      %s45 = sor.u32 %s43, %s44
      %p46 = scmp.eq.s32.totalorder %s45, 0
      %s48 = sadd.s32 %s47, 1
      %s49 = scalar_select %p46, %s47, %s48
      %p52 = pneg %p46
      %p53 = scmp.eq.s32.totalorder %s23, 3
      %p54 = por %p52, %p53
      %p55 = scmp.ne.s32.totalorder %s47, %s50
      %p56 = scmp.eq.s32.totalorder %s23, 0
      %p57 = por %p55, %p56
      %p58 = scmp.ne.s32.totalorder %s47, %s50
      %p59 = scmp.eq.s32.totalorder %s28, 3
      %p60 = por %p58, %p59
      %p61 = scmp.ne.s32.totalorder %s50, %s51
      %p62 = scmp.eq.s32.totalorder %s28, 0
      %p63 = por %p61, %p62
      %p64 = scmp.ne.s32.totalorder %s50, %s51
      %p65 = scmp.eq.s32.totalorder %s29, 3
      %p66 = por %p64, %p65
      %p68 = scmp.ne.s32.totalorder %s51, %s67
      %p69 = scmp.eq.s32.totalorder %s29, 0
      %p70 = por %p68, %p69
      %s72 = sadd.s32 %s71, 1
      %p75 = scmp.eq.s32.totalorder %s23, 3
      %p76 = scmp.ne.s32.totalorder %s71, %s73
      %p77 = scmp.eq.s32.totalorder %s23, 0
      %p78 = por %p76, %p77
      %p79 = scmp.ne.s32.totalorder %s71, %s73
      %p80 = scmp.eq.s32.totalorder %s28, 3
      %p81 = por %p79, %p80
      %p82 = scmp.ne.s32.totalorder %s73, %s74
      %p83 = scmp.eq.s32.totalorder %s28, 0
      %p84 = por %p82, %p83
      %p85 = scmp.ne.s32.totalorder %s73, %s74
      %p86 = scmp.eq.s32.totalorder %s29, 3
      %p87 = por %p85, %p86
      %p89 = scmp.ne.s32.totalorder %s74, %s88
      %p90 = scmp.eq.s32.totalorder %s29, 0
      %p91 = por %p89, %p90
      %s93 = sadd.s32 %s92, 1
      %p96 = scmp.eq.s32.totalorder %s23, 3
      %p97 = scmp.ne.s32.totalorder %s92, %s94
      %p98 = scmp.eq.s32.totalorder %s23, 0
      %p99 = por %p97, %p98
      %p100 = scmp.ne.s32.totalorder %s92, %s94
      %p101 = scmp.eq.s32.totalorder %s28, 3
      %p102 = por %p100, %p101
      %p103 = scmp.ne.s32.totalorder %s94, %s95
      %p104 = scmp.eq.s32.totalorder %s28, 0
      %p105 = por %p103, %p104
      %p106 = scmp.ne.s32.totalorder %s94, %s95
      %p107 = scmp.eq.s32.totalorder %s29, 3
      %p108 = por %p106, %p107
      %p110 = scmp.ne.s32.totalorder %s95, %s109
      %p111 = scmp.eq.s32.totalorder %s29, 0
      %p112 = por %p110, %p111
      %s114 = sadd.s32 %s113, 1
      %p117 = scmp.eq.s32.totalorder %s23, 3
      %p118 = scmp.ne.s32.totalorder %s113, %s115
      %p119 = scmp.eq.s32.totalorder %s23, 0
      %p120 = por %p118, %p119
      %p121 = scmp.ne.s32.totalorder %s113, %s115
      %p122 = scmp.eq.s32.totalorder %s28, 3
      %p123 = por %p121, %p122
      %p124 = scmp.ne.s32.totalorder %s115, %s116
      %p125 = scmp.eq.s32.totalorder %s28, 0
      %p126 = por %p124, %p125
      %p127 = scmp.ne.s32.totalorder %s115, %s116
      %p128 = scmp.eq.s32.totalorder %s29, 3
      %p129 = por %p127, %p128
      %p131 = scmp.ne.s32.totalorder %s116, %s130
      %p132 = scmp.eq.s32.totalorder %s29, 0
      %p133 = por %p131, %p132
      %s135 = sadd.s32 %s134, 1
      %p138 = scmp.eq.s32.totalorder %s23, 3
      %p139 = scmp.ne.s32.totalorder %s134, %s136
      %p140 = scmp.eq.s32.totalorder %s23, 0
      %p141 = por %p139, %p140
      %p142 = scmp.ne.s32.totalorder %s134, %s136
      %p143 = scmp.eq.s32.totalorder %s28, 3
      %p144 = por %p142, %p143
      %p145 = scmp.ne.s32.totalorder %s136, %s137
      %p146 = scmp.eq.s32.totalorder %s28, 0
      %p147 = por %p145, %p146
      %p148 = scmp.ne.s32.totalorder %s136, %s137
      %p149 = scmp.eq.s32.totalorder %s29, 3
      %p150 = por %p148, %p149
      %p152 = scmp.ne.s32.totalorder %s137, %s151
      %p153 = scmp.eq.s32.totalorder %s29, 0
      %p154 = por %p152, %p153
      %s156 = sadd.s32 %s155, 1
      %p159 = scmp.eq.s32.totalorder %s23, 3
      %p160 = scmp.ne.s32.totalorder %s155, %s157
      %p161 = scmp.eq.s32.totalorder %s23, 0
      %p162 = por %p160, %p161
      %p163 = scmp.ne.s32.totalorder %s155, %s157
      %p164 = scmp.eq.s32.totalorder %s28, 3
      %p165 = por %p163, %p164
      %p166 = scmp.ne.s32.totalorder %s157, %s158
      %p167 = scmp.eq.s32.totalorder %s28, 0
      %p168 = por %p166, %p167
      %p169 = scmp.ne.s32.totalorder %s157, %s158
      %p170 = scmp.eq.s32.totalorder %s29, 3
      %p171 = por %p169, %p170
      %p173 = scmp.ne.s32.totalorder %s158, %s172
      %p174 = scmp.eq.s32.totalorder %s29, 0
      %p175 = por %p173, %p174
      %s177 = sadd.s32 %s176, 1
      %p180 = scmp.eq.s32.totalorder %s23, 3
      %p181 = scmp.ne.s32.totalorder %s176, %s178
      %p182 = scmp.eq.s32.totalorder %s23, 0
      %p183 = por %p181, %p182
      %p184 = scmp.ne.s32.totalorder %s176, %s178
      %p185 = scmp.eq.s32.totalorder %s28, 3
      %p186 = por %p184, %p185
      %p187 = scmp.ne.s32.totalorder %s178, %s179
      %p188 = scmp.eq.s32.totalorder %s28, 0
      %p189 = por %p187, %p188
      %p190 = scmp.ne.s32.totalorder %s178, %s179
      %p191 = scmp.eq.s32.totalorder %s29, 3
      %p192 = por %p190, %p191
      %p194 = scmp.ne.s32.totalorder %s179, %s193
      %p195 = scmp.eq.s32.totalorder %s29, 0
      %p196 = por %p194, %p195
      %s198 = sadd.s32 %s197, 1
      %p201 = scmp.eq.s32.totalorder %s23, 3
      %p202 = scmp.ne.s32.totalorder %s197, %s199
      %p203 = scmp.eq.s32.totalorder %s23, 0
      %p204 = por %p202, %p203
      %p205 = scmp.ne.s32.totalorder %s197, %s199
      %p206 = scmp.eq.s32.totalorder %s28, 3
      %p207 = por %p205, %p206
      %p208 = scmp.ne.s32.totalorder %s199, %s200
      %p209 = scmp.eq.s32.totalorder %s28, 0
      %p210 = por %p208, %p209
      %p211 = scmp.ne.s32.totalorder %s199, %s200
      %p212 = scmp.eq.s32.totalorder %s29, 3
      %p213 = por %p211, %p212
      %p215 = scmp.ne.s32.totalorder %s200, %s214
      %p216 = scmp.eq.s32.totalorder %s29, 0
      %p217 = por %p215, %p216
      %s219 = sadd.s32 %s218, 1
      %p222 = scmp.eq.s32.totalorder %s23, 3
      %p223 = scmp.ne.s32.totalorder %s218, %s220
      %p224 = scmp.eq.s32.totalorder %s23, 0
      %p225 = por %p223, %p224
      %p226 = scmp.ne.s32.totalorder %s218, %s220
      %p227 = scmp.eq.s32.totalorder %s28, 3
      %p228 = por %p226, %p227
      %p229 = scmp.ne.s32.totalorder %s220, %s221
      %p230 = scmp.eq.s32.totalorder %s28, 0
      %p231 = por %p229, %p230
      %p232 = scmp.ne.s32.totalorder %s220, %s221
      %p233 = scmp.eq.s32.totalorder %s29, 3
      %p234 = por %p232, %p233
      %p236 = scmp.ne.s32.totalorder %s221, %s235
      %p237 = scmp.eq.s32.totalorder %s29, 0
      %p238 = por %p236, %p237
      %s240 = sadd.s32 %s239, 1
      %p243 = scmp.eq.s32.totalorder %s23, 3
      %p244 = scmp.ne.s32.totalorder %s239, %s241
      %p245 = scmp.eq.s32.totalorder %s23, 0
      %p246 = por %p244, %p245
      %p247 = scmp.ne.s32.totalorder %s239, %s241
      %p248 = scmp.eq.s32.totalorder %s28, 3
      %p249 = por %p247, %p248
      %p250 = scmp.ne.s32.totalorder %s241, %s242
      %p251 = scmp.eq.s32.totalorder %s28, 0
      %p252 = por %p250, %p251
      %p253 = scmp.ne.s32.totalorder %s241, %s242
      %p254 = scmp.eq.s32.totalorder %s29, 3
      %p255 = por %p253, %p254
      %p257 = scmp.ne.s32.totalorder %s242, %s256
      %p258 = scmp.eq.s32.totalorder %s29, 0
      %p259 = por %p257, %p258
      %s261 = sadd.s32 %s260, 1
      %p264 = scmp.eq.s32.totalorder %s23, 3
      %p265 = scmp.ne.s32.totalorder %s260, %s262
      %p266 = scmp.eq.s32.totalorder %s23, 0
      %p267 = por %p265, %p266
      %p268 = scmp.ne.s32.totalorder %s260, %s262
      %p269 = scmp.eq.s32.totalorder %s28, 3
      %p270 = por %p268, %p269
      %p271 = scmp.ne.s32.totalorder %s262, %s263
      %p272 = scmp.eq.s32.totalorder %s28, 0
      %p273 = por %p271, %p272
      %p274 = scmp.ne.s32.totalorder %s262, %s263
      %p275 = scmp.eq.s32.totalorder %s29, 3
      %p276 = por %p274, %p275
      %p278 = scmp.ne.s32.totalorder %s263, %s277
      %p279 = scmp.eq.s32.totalorder %s29, 0
      %p280 = por %p278, %p279
      %s282 = sadd.s32 %s281, 1
      %p285 = scmp.eq.s32.totalorder %s23, 3
      %p286 = scmp.ne.s32.totalorder %s281, %s283
      %p287 = scmp.eq.s32.totalorder %s23, 0
      %p288 = por %p286, %p287
      %p289 = scmp.ne.s32.totalorder %s281, %s283
      %p290 = scmp.eq.s32.totalorder %s28, 3
      %p291 = por %p289, %p290
      %p292 = scmp.ne.s32.totalorder %s283, %s284
      %p293 = scmp.eq.s32.totalorder %s28, 0
      %p294 = por %p292, %p293
      %p295 = scmp.ne.s32.totalorder %s283, %s284
      %p296 = scmp.eq.s32.totalorder %s29, 3
      %p297 = por %p295, %p296
      %p299 = scmp.ne.s32.totalorder %s284, %s298
      %p300 = scmp.eq.s32.totalorder %s29, 0
      %p301 = por %p299, %p300
      %s302 = ssub.s32 %s30, %s42
      %s303 = ssub.s32 %s31, %s38
      %s304 = sor.u32 %s302, %s303
      %p305 = scmp.eq.s32.totalorder %s304, 0
      %s307 = sadd.s32 %s306, 1
      %s308 = scalar_select %p305, %s306, %s307
      %p311 = pneg %p305
      %p312 = scmp.eq.s32.totalorder %s23, 3
      %p313 = por %p311, %p312
      %p314 = scmp.ne.s32.totalorder %s306, %s309
      %p315 = scmp.eq.s32.totalorder %s23, 0
      %p316 = por %p314, %p315
      %p317 = scmp.ne.s32.totalorder %s306, %s309
      %p318 = scmp.eq.s32.totalorder %s28, 3
      %p319 = por %p317, %p318
      %p320 = scmp.ne.s32.totalorder %s309, %s310
      %p321 = scmp.eq.s32.totalorder %s28, 0
      %p322 = por %p320, %p321
      %p323 = scmp.ne.s32.totalorder %s309, %s310
      %p324 = scmp.eq.s32.totalorder %s29, 3
      %p325 = por %p323, %p324
      %p327 = scmp.ne.s32.totalorder %s310, %s326
      %p328 = scmp.eq.s32.totalorder %s29, 0
      %p329 = por %p327, %p328
      %p330 = scmp.le.s32.totalorder 1, %s23
      %p331 = scmp.lt.s32.totalorder %s23, 5
      %p332 = pnand %p330, %p331
      %p333 = pneg %p332
      // Predicated region
      $region9: #{tpu_custom_call.1} parent=5 // pred_check
        _
      $region10: #{tpu_custom_call.1} parent=5 // pred_check_branch
        %335 = sbr.rel (%p332) target = $region12
      $region11: #{tpu_custom_call.1} parent=5 // pred_region
        %s336 = ssub.s32 %s23, 1
        // Predicated region
        $region13: #{tpu_custom_call.1} parent=11 // pred_check
          %p337 = pneg %p84
        $region14: #{tpu_custom_call.1} parent=11 // pred_check_branch
          %339 = sbr.rel (%p337) target = $region16
        $region15: #{tpu_custom_call.1} parent=11 // pred_region
          _
        $region16: #{tpu_custom_call.1} parent=11 // pred_fallthru
          _
        // Predicated region
        $region17: #{tpu_custom_call.1} parent=11 // pred_check
          %p340 = pneg %p105
        $region18: #{tpu_custom_call.1} parent=11 // pred_check_branch
          %342 = sbr.rel (%p340) target = $region20
        $region19: #{tpu_custom_call.1} parent=11 // pred_region
          _
        $region20: #{tpu_custom_call.1} parent=11 // pred_fallthru
          _
        // Predicated region
        $region21: #{tpu_custom_call.1} parent=11 // pred_check
          %p343 = pneg %p126
        $region22: #{tpu_custom_call.1} parent=11 // pred_check_branch
          %345 = sbr.rel (%p343) target = $region24
        $region23: #{tpu_custom_call.1} parent=11 // pred_region
          _
        $region24: #{tpu_custom_call.1} parent=11 // pred_fallthru
          _
        // Predicated region
        $region25: #{tpu_custom_call.1} parent=11 // pred_check
          %p346 = pneg %p147
        $region26: #{tpu_custom_call.1} parent=11 // pred_check_branch
          %348 = sbr.rel (%p346) target = $region28
        $region27: #{tpu_custom_call.1} parent=11 // pred_region
          %s350 = ssub.s32 256, 256
          %351 = vsyncadd [#allocation5], %s350
          %s352 = sshll.u32 [#allocation4], 4
          %s353 = int_to_ptr.vmem [resolvable:$true] %s352
          %358 = dma.hbm_to_vmem [thread:$0]  %s4, 256, %s353, [#allocation5], 64, 64, 4
        $region28: #{tpu_custom_call.1} parent=11 // pred_fallthru
          _
        // Predicated region
        $region29: #{tpu_custom_call.1} parent=11 // pred_check
          %p359 = pneg %p168
        $region30: #{tpu_custom_call.1} parent=11 // pred_check_branch
          %361 = sbr.rel (%p359) target = $region32
        $region31: #{tpu_custom_call.1} parent=11 // pred_region
          _
        $region32: #{tpu_custom_call.1} parent=11 // pred_fallthru
          _
        // Predicated region
        $region33: #{tpu_custom_call.1} parent=11 // pred_check
          %p362 = pneg %p189
        $region34: #{tpu_custom_call.1} parent=11 // pred_check_branch
          %364 = sbr.rel (%p362) target = $region36
        $region35: #{tpu_custom_call.1} parent=11 // pred_region
          _
        $region36: #{tpu_custom_call.1} parent=11 // pred_fallthru
          _
        // Predicated region
        $region37: #{tpu_custom_call.1} parent=11 // pred_check
          %p365 = pneg %p210
        $region38: #{tpu_custom_call.1} parent=11 // pred_check_branch
          %367 = sbr.rel (%p365) target = $region40
        $region39: #{tpu_custom_call.1} parent=11 // pred_region
          _
        $region40: #{tpu_custom_call.1} parent=11 // pred_fallthru
          _
        // Predicated region
        $region41: #{tpu_custom_call.1} parent=11 // pred_check
          %p368 = pneg %p231
        $region42: #{tpu_custom_call.1} parent=11 // pred_check_branch
          %370 = sbr.rel (%p368) target = $region44
        $region43: #{tpu_custom_call.1} parent=11 // pred_region
          %s372 = ssub.s32 256, 256
          %373 = vsyncadd [#allocation8], %s372
          %s374 = sshll.u32 [#allocation7], 4
          %s375 = int_to_ptr.vmem [resolvable:$true] %s374
          %380 = dma.hbm_to_vmem [thread:$0]  %s8, 256, %s375, [#allocation8], 64, 64, 4
        $region44: #{tpu_custom_call.1} parent=11 // pred_fallthru
          _
        // Predicated region
        $region45: #{tpu_custom_call.1} parent=11 // pred_check
          %p381 = pneg %p252
        $region46: #{tpu_custom_call.1} parent=11 // pred_check_branch
          %383 = sbr.rel (%p381) target = $region48
        $region47: #{tpu_custom_call.1} parent=11 // pred_region
          _
        $region48: #{tpu_custom_call.1} parent=11 // pred_fallthru
          _
        // Predicated region
        $region49: #{tpu_custom_call.1} parent=11 // pred_check
          %p384 = pneg %p273
        $region50: #{tpu_custom_call.1} parent=11 // pred_check_branch
          %386 = sbr.rel (%p384) target = $region52
        $region51: #{tpu_custom_call.1} parent=11 // pred_region
          _
        $region52: #{tpu_custom_call.1} parent=11 // pred_fallthru
          _
        // Predicated region
        $region53: #{tpu_custom_call.1} parent=11 // pred_check
          %p387 = pneg %p294
        $region54: #{tpu_custom_call.1} parent=11 // pred_check_branch
          %389 = sbr.rel (%p387) target = $region56
        $region55: #{tpu_custom_call.1} parent=11 // pred_region
          _
        $region56: #{tpu_custom_call.1} parent=11 // pred_fallthru
          _
      $region12: #{tpu_custom_call.1} parent=5 // pred_fallthru
        _
      %p390 = scmp.lt.s32.totalorder %s23, 4
      // Predicated region
      $region57: #{tpu_custom_call.1} parent=5 // pred_check
        %p391 = pneg %p390
      $region58: #{tpu_custom_call.1} parent=5 // pred_check_branch
        %393 = sbr.rel (%p391) target = $region60
      $region59: #{tpu_custom_call.1} parent=5 // pred_region
        // Predicated region
        $region61: #{tpu_custom_call.1} parent=59 // pred_check
          %p394 = pneg %p57
        $region62: #{tpu_custom_call.1} parent=59 // pred_check_branch
          %396 = sbr.rel (%p394) target = $region64
        $region63: #{tpu_custom_call.1} parent=59 // pred_region
          %s397 = smul.u32 2, %s31
          %p398 = scmp.lt.s32.totalorder %s30, 1
          %s399 = scalar_select %p398, %s30, 1
          %p400 = scmp.lt.s32.totalorder %s397, 3
          %s401 = scalar_select %p400, %s397, 3
          %s402 = smul.addr %s399, 4
          %s403 = sadd.s32 %s401, %s402
          %s404 = smul.addr %s403, 8
          %s405 = scalar_lea.vmem %s0, %s404
          %s406 = smul.u32 2, %s31
        $region64: #{tpu_custom_call.1} parent=59 // pred_fallthru
          _
      $region60: #{tpu_custom_call.1} parent=5 // pred_fallthru
        _
      %p407 = scmp.le.s32.totalorder 1, %s23
      %p408 = scmp.lt.s32.totalorder %s23, 5
      %p409 = pnand %p407, %p408
      %p410 = pneg %p409
      // Predicated region
      $region65: #{tpu_custom_call.1} parent=5 // pred_check
        _
      $region66: #{tpu_custom_call.1} parent=5 // pred_check_branch
        %412 = sbr.rel (%p409) target = $region68
      $region67: #{tpu_custom_call.1} parent=5 // pred_region
        %s413 = ssub.s32 %s23, 1
        // Predicated region
        $region69: #{tpu_custom_call.1} parent=67 // pred_check
          %p414 = pneg %p147
        $region70: #{tpu_custom_call.1} parent=67 // pred_check_branch
          %416 = sbr.rel (%p414) target = $region72
        $region71: #{tpu_custom_call.1} parent=67 // pred_region
          %417 = dma.done [#allocation5], 256
        $region72: #{tpu_custom_call.1} parent=67 // pred_fallthru
          _
        // Predicated region
        $region73: #{tpu_custom_call.1} parent=67 // pred_check
          %p418 = pneg %p231
        $region74: #{tpu_custom_call.1} parent=67 // pred_check_branch
          %420 = sbr.rel (%p418) target = $region76
        $region75: #{tpu_custom_call.1} parent=67 // pred_region
          %421 = dma.done [#allocation8], 256
        $region76: #{tpu_custom_call.1} parent=67 // pred_fallthru
          _
        %s422 = smul.u32 2, %s33
        %p423 = scmp.lt.s32.totalorder %s32, 1
        %s424 = scalar_select %p423, %s32, 1
        %p425 = scmp.lt.s32.totalorder %s422, 3
        %s426 = scalar_select %p425, %s422, 3
        %s427 = smul.addr %s424, 4
        %s428 = sadd.s32 %s426, %s427
        %s429 = smul.addr %s428, 8
        %s430 = scalar_lea.vmem %s0, %s429
        %p431 = pneg %p63
        %p432 = pneg %p60
        %p433 = pneg %p84
        %p434 = pneg %p81
        %p435 = pneg %p105
        %p436 = pneg %p102
        %p437 = pneg %p126
        %p438 = pneg %p123
        %p439 = pneg %p147
        %p440 = pneg %p144
        %p441 = pneg %p168
        %p442 = pneg %p165
        %p443 = pneg %p189
        %p444 = pneg %p186
        %p445 = pneg %p210
        %p446 = pneg %p207
        %p447 = pneg %p231
        %p448 = pneg %p228
        %p449 = pneg %p252
        %p450 = pneg %p249
        %p451 = pneg %p273
        %p452 = pneg %p270
        %p453 = pneg %p294
        %p454 = pneg %p291
        %p455 = pneg %p322
        %p456 = pneg %p319
        %s457 = sand.u32 %s309, 1
        %s458 = scalar_lea.sflag [#allocation6], %s457
        %s459 = sand.u32 %s309, 1
        %s460 = smul.addr %s459, 16
        %s461 = scalar_lea.vmem [#allocation9], %s460
        %s462 = smul.u32 2, %s33
        %p463 = scmp.lt.s32.totalorder %s32, 1
        %s464 = scalar_select %p463, %s32, 1
        %p465 = scmp.lt.s32.totalorder %s462, 3
        %s466 = scalar_select %p465, %s462, 3
        %s467 = smul.addr %s464, 4
        %s468 = sadd.s32 %s466, %s467
        %s469 = smul.addr %s468, 8
        %s470 = scalar_lea.vmem %s0, %s469
        %s471 = smul.u32 2, %s33
        %s472 = smul.u32 2, %s33
        %s474 = smul.u32 %s33, 16
        %v475 = vld [vmem:[%s470] sm:$0xff]
        %v476 = vld [vmem:[%s470 + $0x8] sm:$0xff]
        %v477 = vld [vmem:[%s1] sm:$0x1]
        %v478 = vld [vmem:[%s2] sm:$0x1]
        %vm479 = vcmask 261120
        %v480 = vsel %vm479, %v475, 0.0
        %481 = vadd.xlane.f32.xlu0 %v480
        %v482 = vpop.xlane.xlu0 %481
        %v483 = vsel %vm479, %v476, 0.0
        %484 = vadd.xlane.f32.xlu0 %v483
        %v485 = vpop.xlane.xlu0 %484
        %v486 = vrcp.pop 32.0
        %v487 = vmul.f32 %v482, %v486
        %v488 = vmul.f32 %v485, %v486
        %v489 = vsub.f32 %v475, %v487
        %v490 = vsub.f32 %v476, %v488
        %v491 = vmul.f32 %v489, %v489
        %v492 = vmul.f32 %v490, %v490
        %v493 = vsel %vm479, %v491, 0.0
        %494 = vadd.xlane.f32.xlu0 %v493
        %v495 = vpop.xlane.xlu0 %494
        %v496 = vsel %vm479, %v492, 0.0
        %497 = vadd.xlane.f32.xlu0 %v496
        %v498 = vpop.xlane.xlu0 %497
        %v499 = vmul.f32 %v495, %v486
        %v500 = vmul.f32 %v498, %v486
        %v501 = vadd.f32 %v499, 1e-05
        %v502 = vadd.f32 %v500, 1e-05
        %v503 = vrsqrt.pop %v501
        %v504 = vrsqrt.pop %v502
        %v505 = vmul.f32 %v489, %v503
        %v506 = vmul.f32 %v490, %v504
        %v508 = vlaneseq
        %v509 = vshrl.u32 %v508, 7
        %v510 = vsub.s32 0, %v509
        %v511 = vrot.slane %v477, %v510
        %v513 = vmul.f32 %v505, %v511
        %v514 = vmul.f32 %v506, %v511
        %v516 = vlaneseq
        %v517 = vshrl.u32 %v516, 7
        %v518 = vsub.s32 0, %v517
        %v519 = vrot.slane %v478, %v518
        %v521 = vadd.f32 %v513, %v519
        %v522 = vadd.f32 %v514, %v519
        %v523 = vpack.c.bf16 %v522, %v521
        %v524 = vld [vmem:[%s3] sm:$0xf]
        %v525 = vld [vmem:[%s3 + $0x4] sm:$0xf]
        %v526 = vld [vmem:[%s3 + $0x8] sm:$0xf]
        %v527 = vld [vmem:[%s3 + $0xc] sm:$0xf]
        %v532 = vunpack.c.l.b16 %v524
        %v533 = vunpack.c.l.b16 %v525
        %v534 = vunpack.c.l.b16 %v526
        %v535 = vunpack.c.l.b16 %v527
        %v536 = vpack.c.b16 %v533, %v532
        %v537 = vpack.c.b16 %v535, %v534
        %v541 = vsel %vm479, %v523, 0
        %543 = vmatprep.subr.bf16.mxu0 0
        %544 = vmatpush1.bf16.msra.mxu0 %v536
        %545 = vmatprep.subr.bf16.mxu0 0
        %546 = vmatpush1.bf16.msra.mxu0 %v537
        %547 = vmatprep.subr.bf16.mxu0 0
        %548 = vmatpush1.bf16.msra.mxu0 0
        %549 = vmatprep.subr.bf16.mxu0 0
        %550 = vmatpush1.bf16.msra.mxu0 0
        %551 = vmatprep.subr.bf16.mxu0 0
        %552 = vmatpush1.bf16.msra.mxu0 0
        %553 = vmatprep.subr.bf16.mxu0 0
        %554 = vmatpush1.bf16.msra.mxu0 0
        %555 = vmatprep.subr.bf16.mxu0 0
        %556 = vmatpush1.bf16.msra.mxu0 0
        %557 = vmatprep.subr.bf16.mxu0 0
        %558 = vmatpush1.bf16.msra.mxu0 0
        %559 = vmatprep.subr.bf16.mxu0 0
        %560 = vmatpush1.bf16.msra.mxu0 0
        %561 = vmatprep.subr.bf16.mxu0 0
        %562 = vmatpush1.bf16.msra.mxu0 0
        %563 = vmatprep.subr.bf16.mxu0 0
        %564 = vmatpush1.bf16.msra.mxu0 0
        %565 = vmatprep.subr.bf16.mxu0 0
        %566 = vmatpush1.bf16.msra.mxu0 0
        %567 = vmatprep.subr.bf16.mxu0 0
        %568 = vmatpush1.bf16.msra.mxu0 0
        %569 = vmatprep.subr.bf16.mxu0 0
        %570 = vmatpush1.bf16.msra.mxu0 0
        %571 = vmatprep.subr.bf16.mxu0 0
        %572 = vmatpush1.bf16.msra.mxu0 0
        %573 = vmatprep.subr.bf16.mxu0 0
        %574 = vmatpush1.bf16.msra.mxu0 0
        %575 = vmatprep.mubr.bf16.mxu0 0
        %576 = vmatmul.mubr.bf16.gmra.mrb[0].mxu0 %v541
        %v577 = vpop.f32.mrb[0].mxu0
        %v578 = vadd.f32 0.0, %v577
        %v579 = vpop.f32.mrb[0].mxu0
        %v580 = vpop.f32.mrb[0].mxu0
        %v581 = vadd.f32 0.0, %v580
        %v582 = vpop.f32.mrb[0].mxu0
        %583 = vdwg.mxu0
        %v584 = vpack.c.bf16 %v581, %v578
        %586 = vrot.lane.b32.xlu0 %v584, 96
        %v587 = vpop.permute.xlu0 %586
        %s589 = sshra.s32 %s474, 4
        %s590 = sand.u32 %s474, 15
        %s591 = smul.addr %s589, 8
        %s592 = scalar_lea.vmem [#allocation2], %s591
        %vm593 = vcmask 64512
        %594 = vst.msk [vmem:[%s592] sm:$0xff] %vm593, %v587
        %595 = vrot.lane.b32.xlu0 %v584, 64
        %v596 = vpop.permute.xlu0 %595
        %s598 = smul.addr %s589, 8
        %s599 = scalar_lea.vmem [#allocation3], %s598
        %600 = vst.msk [vmem:[%s599] sm:$0xff] %vm593, %v596
        %601 = vrot.lane.b32.xlu0 %v584, 88
        %v602 = vpop.permute.xlu0 %601
        %s604 = sadd.s32 %s589, 2
        %s605 = smul.addr %s604, 8
        %s606 = scalar_lea.vmem [#allocation2], %s605
        %607 = vst.msk [vmem:[%s606] sm:$0xff] %vm593, %v602
        %608 = vrot.lane.b32.xlu0 %v584, 56
        %v609 = vpop.permute.xlu0 %608
        %s611 = smul.addr %s604, 8
        %s612 = scalar_lea.vmem [#allocation3], %s611
        %613 = vst.msk [vmem:[%s612] sm:$0xff] %vm593, %v609
        %614 = vrot.lane.b32.xlu0 %v584, 80
        %v615 = vpop.permute.xlu0 %614
        %s617 = sadd.s32 %s589, 4
        %s618 = smul.addr %s617, 8
        %s619 = scalar_lea.vmem [#allocation2], %s618
        %620 = vst.msk [vmem:[%s619] sm:$0xff] %vm593, %v615
        %621 = vrot.lane.b32.xlu0 %v584, 48
        %v622 = vpop.permute.xlu0 %621
        %s624 = smul.addr %s617, 8
        %s625 = scalar_lea.vmem [#allocation3], %s624
        %626 = vst.msk [vmem:[%s625] sm:$0xff] %vm593, %v622
        %627 = vrot.lane.b32.xlu0 %v584, 72
        %v628 = vpop.permute.xlu0 %627
        %s630 = sadd.s32 %s589, 6
        %s631 = smul.addr %s630, 8
        %s632 = scalar_lea.vmem [#allocation2], %s631
        %633 = vst.msk [vmem:[%s632] sm:$0xff] %vm593, %v628
        %634 = vrot.lane.b32.xlu0 %v584, 40
        %v635 = vpop.permute.xlu0 %634
        %s637 = smul.addr %s630, 8
        %s638 = scalar_lea.vmem [#allocation3], %s637
        %639 = vst.msk [vmem:[%s638] sm:$0xff] %vm593, %v635
        %642 = vrot.lane.b32.xlu0 %v578, 120
        %v643 = vpop.permute.xlu0 %642
        %644 = vrot.lane.b32.xlu0 %v581, 120
        %v645 = vpop.permute.xlu0 %644
        %648 = vrot.lane.b32.xlu0 %v578, 112
        %v649 = vpop.permute.xlu0 %648
        %650 = vrot.lane.b32.xlu0 %v581, 112
        %v651 = vpop.permute.xlu0 %650
        %654 = vrot.lane.b32.xlu0 %v578, 104
        %v655 = vpop.permute.xlu0 %654
        %656 = vrot.lane.b32.xlu0 %v581, 104
        %v657 = vpop.permute.xlu0 %656
        %v660 = vpack.c.bf16 %v645, %v643
        %v661 = vpack.c.bf16 %v651, %v649
        %v662 = vpack.c.bf16 %v657, %v655
        %v663 = vlaneseq
        %v664 = vshrl.u32 %v663, 7
        %v665 = vadd.s32 %v664, 8
        %v666 = vlaneseq
        %v667 = vand.u32 %v666, 127
        %vm668 = vcmp.le.s32.totalorder %v667, %v664
        %vm669 = vcmp.le.s32.totalorder %v667, %v665
        %s670 = sadd.s32 %s33, 1
        // While loop
        $region77: #{tpu_custom_call.1} parent=67 // loop_pre_header
          _
        $region78: #{tpu_custom_call.1} parent=67 // loop_header
          %s672 = sphi 0, %s674
          %p673 = scmp.ge.s32.totalorder %s672, %s670
          %v677 = vphi -1e+30, %v947
          %v678 = vphi -1e+30, %v948
          %v679 = vphi -1e+30, %v949
          %v680 = vphi -1e+30, %v950
          %v681 = vphi -1e+30, %v951
          %v682 = vphi -1e+30, %v952
          %v683 = vphi -1e+30, %v953
          %v684 = vphi -1e+30, %v954
          %v685 = vphi 0.0, %v1035
          %v686 = vphi 0.0, %v1036
          %v687 = vphi 0.0, %v1037
          %v688 = vphi 0.0, %v1038
          %v689 = vphi 0.0, %v1039
          %v690 = vphi 0.0, %v1040
          %v691 = vphi 0.0, %v1041
          %v692 = vphi 0.0, %v1042
          %v693 = vphi 0.0, %v1231
          %v694 = vphi 0.0, %v1232
          %v695 = vphi 0.0, %v1233
          %v696 = vphi 0.0, %v1234
          %v697 = vphi 0.0, %v1235
          %v698 = vphi 0.0, %v1236
          %v699 = vphi 0.0, %v1237
          %v700 = vphi 0.0, %v1238
        $region79: #{tpu_custom_call.1} parent=67 // loop_header_branch
          %676 = sbr.rel (%p673) target = $region83
        $region80: #{tpu_custom_call.1} parent=67 // loop_body
          %s701 = smul.u32 %s672, 16
          %s702 = sshra.s32 %s701, 4
          %s703 = sand.u32 %s701, 15
          %s704 = smul.addr %s702, 8
          %s705 = scalar_lea.vmem [#allocation2], %s704
          %v706 = vld [vmem:[%s705] sm:$0xff]
          %v707 = vld [vmem:[%s705 + $0x10] sm:$0xff]
          %v708 = vld [vmem:[%s705 + $0x20] sm:$0xff]
          %v709 = vld [vmem:[%s705 + $0x30] sm:$0xff]
          %s710 = smul.addr %s702, 8
          %s711 = scalar_lea.vmem [#allocation3], %s710
          %v712 = vld [vmem:[%s711] sm:$0xff]
          %v713 = vld [vmem:[%s711 + $0x10] sm:$0xff]
          %v714 = vld [vmem:[%s711 + $0x20] sm:$0xff]
          %v715 = vld [vmem:[%s711 + $0x30] sm:$0xff]
          %v717 = vsel %vm593, %v584, 0
          %v720 = vsel %vm593, %v706, 0
          %722 = vmatprep.subr.bf16.mxu0 0
          %723 = vmatpush1.bf16.xpose.msra.mxu0 %v720
          %724 = vmatprep.subr.bf16.mxu0 0
          %725 = vmatpush1.bf16.xpose.msra.mxu0 0
          %726 = vmatprep.subr.bf16.mxu0 0
          %727 = vmatpush1.bf16.xpose.msra.mxu0 0
          %728 = vmatprep.subr.bf16.mxu0 0
          %729 = vmatpush1.bf16.xpose.msra.mxu0 0
          %730 = vmatprep.subr.bf16.mxu0 0
          %731 = vmatpush1.bf16.xpose.msra.mxu0 0
          %732 = vmatprep.subr.bf16.mxu0 0
          %733 = vmatpush1.bf16.xpose.msra.mxu0 0
          %734 = vmatprep.subr.bf16.mxu0 0
          %735 = vmatpush1.bf16.xpose.msra.mxu0 0
          %736 = vmatprep.subr.bf16.mxu0 0
          %737 = vmatpush1.bf16.xpose.msra.mxu0 0
          %738 = vmatprep.subr.bf16.mxu0 0
          %739 = vmatpush1.bf16.xpose.msra.mxu0 0
          %740 = vmatprep.subr.bf16.mxu0 0
          %741 = vmatpush1.bf16.xpose.msra.mxu0 0
          %742 = vmatprep.subr.bf16.mxu0 0
          %743 = vmatpush1.bf16.xpose.msra.mxu0 0
          %744 = vmatprep.subr.bf16.mxu0 0
          %745 = vmatpush1.bf16.xpose.msra.mxu0 0
          %746 = vmatprep.subr.bf16.mxu0 0
          %747 = vmatpush1.bf16.xpose.msra.mxu0 0
          %748 = vmatprep.subr.bf16.mxu0 0
          %749 = vmatpush1.bf16.xpose.msra.mxu0 0
          %750 = vmatprep.subr.bf16.mxu0 0
          %751 = vmatpush1.bf16.xpose.msra.mxu0 0
          %752 = vmatprep.subr.bf16.mxu0 0
          %753 = vmatpush1.bf16.xpose.msra.mxu0 0
          %754 = vmatprep.mubr.bf16.mxu0 0
          %755 = vmatmul.mubr.bf16.gmra.mrb[0].mxu0 %v717
          %v756 = vpop.f32.mrb[0].mxu0
          %v757 = vadd.f32 0.0, %v756
          %v758 = vpop.f32.mrb[0].mxu0
          %v759 = vpop.f32.mrb[0].mxu0
          %v760 = vadd.f32 0.0, %v759
          %v761 = vpop.f32.mrb[0].mxu0
          %762 = vdwg.mxu0
          %v764 = vsel %vm593, %v660, 0
          %v767 = vsel %vm593, %v707, 0
          %769 = vmatprep.subr.bf16.mxu0 0
          %770 = vmatpush1.bf16.xpose.msra.mxu0 %v767
          %771 = vmatprep.subr.bf16.mxu0 0
          %772 = vmatpush1.bf16.xpose.msra.mxu0 0
          %773 = vmatprep.subr.bf16.mxu0 0
          %774 = vmatpush1.bf16.xpose.msra.mxu0 0
          %775 = vmatprep.subr.bf16.mxu0 0
          %776 = vmatpush1.bf16.xpose.msra.mxu0 0
          %777 = vmatprep.subr.bf16.mxu0 0
          %778 = vmatpush1.bf16.xpose.msra.mxu0 0
          %779 = vmatprep.subr.bf16.mxu0 0
          %780 = vmatpush1.bf16.xpose.msra.mxu0 0
          %781 = vmatprep.subr.bf16.mxu0 0
          %782 = vmatpush1.bf16.xpose.msra.mxu0 0
          %783 = vmatprep.subr.bf16.mxu0 0
          %784 = vmatpush1.bf16.xpose.msra.mxu0 0
          %785 = vmatprep.subr.bf16.mxu0 0
          %786 = vmatpush1.bf16.xpose.msra.mxu0 0
          %787 = vmatprep.subr.bf16.mxu0 0
          %788 = vmatpush1.bf16.xpose.msra.mxu0 0
          %789 = vmatprep.subr.bf16.mxu0 0
          %790 = vmatpush1.bf16.xpose.msra.mxu0 0
          %791 = vmatprep.subr.bf16.mxu0 0
          %792 = vmatpush1.bf16.xpose.msra.mxu0 0
          %793 = vmatprep.subr.bf16.mxu0 0
          %794 = vmatpush1.bf16.xpose.msra.mxu0 0
          %795 = vmatprep.subr.bf16.mxu0 0
          %796 = vmatpush1.bf16.xpose.msra.mxu0 0
          %797 = vmatprep.subr.bf16.mxu0 0
          %798 = vmatpush1.bf16.xpose.msra.mxu0 0
          %799 = vmatprep.subr.bf16.mxu0 0
          %800 = vmatpush1.bf16.xpose.msra.mxu0 0
          %801 = vmatprep.mubr.bf16.mxu0 0
          %802 = vmatmul.mubr.bf16.gmra.mrb[0].mxu0 %v764
          %v803 = vpop.f32.mrb[0].mxu0
          %v804 = vadd.f32 0.0, %v803
          %v805 = vpop.f32.mrb[0].mxu0
          %v806 = vpop.f32.mrb[0].mxu0
          %v807 = vadd.f32 0.0, %v806
          %v808 = vpop.f32.mrb[0].mxu0
          %809 = vdwg.mxu0
          %v811 = vsel %vm593, %v661, 0
          %v814 = vsel %vm593, %v708, 0
          %816 = vmatprep.subr.bf16.mxu0 0
          %817 = vmatpush1.bf16.xpose.msra.mxu0 %v814
          %818 = vmatprep.subr.bf16.mxu0 0
          %819 = vmatpush1.bf16.xpose.msra.mxu0 0
          %820 = vmatprep.subr.bf16.mxu0 0
          %821 = vmatpush1.bf16.xpose.msra.mxu0 0
          %822 = vmatprep.subr.bf16.mxu0 0
          %823 = vmatpush1.bf16.xpose.msra.mxu0 0
          %824 = vmatprep.subr.bf16.mxu0 0
          %825 = vmatpush1.bf16.xpose.msra.mxu0 0
          %826 = vmatprep.subr.bf16.mxu0 0
          %827 = vmatpush1.bf16.xpose.msra.mxu0 0
          %828 = vmatprep.subr.bf16.mxu0 0
          %829 = vmatpush1.bf16.xpose.msra.mxu0 0
          %830 = vmatprep.subr.bf16.mxu0 0
          %831 = vmatpush1.bf16.xpose.msra.mxu0 0
          %832 = vmatprep.subr.bf16.mxu0 0
          %833 = vmatpush1.bf16.xpose.msra.mxu0 0
          %834 = vmatprep.subr.bf16.mxu0 0
          %835 = vmatpush1.bf16.xpose.msra.mxu0 0
          %836 = vmatprep.subr.bf16.mxu0 0
          %837 = vmatpush1.bf16.xpose.msra.mxu0 0
          %838 = vmatprep.subr.bf16.mxu0 0
          %839 = vmatpush1.bf16.xpose.msra.mxu0 0
          %840 = vmatprep.subr.bf16.mxu0 0
          %841 = vmatpush1.bf16.xpose.msra.mxu0 0
          %842 = vmatprep.subr.bf16.mxu0 0
          %843 = vmatpush1.bf16.xpose.msra.mxu0 0
          %844 = vmatprep.subr.bf16.mxu0 0
          %845 = vmatpush1.bf16.xpose.msra.mxu0 0
          %846 = vmatprep.subr.bf16.mxu0 0
          %847 = vmatpush1.bf16.xpose.msra.mxu0 0
          %848 = vmatprep.mubr.bf16.mxu0 0
          %849 = vmatmul.mubr.bf16.gmra.mrb[0].mxu0 %v811
          %v850 = vpop.f32.mrb[0].mxu0
          %v851 = vadd.f32 0.0, %v850
          %v852 = vpop.f32.mrb[0].mxu0
          %v853 = vpop.f32.mrb[0].mxu0
          %v854 = vadd.f32 0.0, %v853
          %v855 = vpop.f32.mrb[0].mxu0
          %856 = vdwg.mxu0
          %v858 = vsel %vm593, %v662, 0
          %v861 = vsel %vm593, %v709, 0
          %863 = vmatprep.subr.bf16.mxu0 0
          %864 = vmatpush1.bf16.xpose.msra.mxu0 %v861
          %865 = vmatprep.subr.bf16.mxu0 0
          %866 = vmatpush1.bf16.xpose.msra.mxu0 0
          %867 = vmatprep.subr.bf16.mxu0 0
          %868 = vmatpush1.bf16.xpose.msra.mxu0 0
          %869 = vmatprep.subr.bf16.mxu0 0
          %870 = vmatpush1.bf16.xpose.msra.mxu0 0
          %871 = vmatprep.subr.bf16.mxu0 0
          %872 = vmatpush1.bf16.xpose.msra.mxu0 0
          %873 = vmatprep.subr.bf16.mxu0 0
          %874 = vmatpush1.bf16.xpose.msra.mxu0 0
          %875 = vmatprep.subr.bf16.mxu0 0
          %876 = vmatpush1.bf16.xpose.msra.mxu0 0
          %877 = vmatprep.subr.bf16.mxu0 0
          %878 = vmatpush1.bf16.xpose.msra.mxu0 0
          %879 = vmatprep.subr.bf16.mxu0 0
          %880 = vmatpush1.bf16.xpose.msra.mxu0 0
          %881 = vmatprep.subr.bf16.mxu0 0
          %882 = vmatpush1.bf16.xpose.msra.mxu0 0
          %883 = vmatprep.subr.bf16.mxu0 0
          %884 = vmatpush1.bf16.xpose.msra.mxu0 0
          %885 = vmatprep.subr.bf16.mxu0 0
          %886 = vmatpush1.bf16.xpose.msra.mxu0 0
          %887 = vmatprep.subr.bf16.mxu0 0
          %888 = vmatpush1.bf16.xpose.msra.mxu0 0
          %889 = vmatprep.subr.bf16.mxu0 0
          %890 = vmatpush1.bf16.xpose.msra.mxu0 0
          %891 = vmatprep.subr.bf16.mxu0 0
          %892 = vmatpush1.bf16.xpose.msra.mxu0 0
          %893 = vmatprep.subr.bf16.mxu0 0
          %894 = vmatpush1.bf16.xpose.msra.mxu0 0
          %895 = vmatprep.mubr.bf16.mxu0 0
          %896 = vmatmul.mubr.bf16.gmra.mrb[0].mxu0 %v858
          %v897 = vpop.f32.mrb[0].mxu0
          %v898 = vadd.f32 0.0, %v897
          %v899 = vpop.f32.mrb[0].mxu0
          %v900 = vpop.f32.mrb[0].mxu0
          %v901 = vadd.f32 0.0, %v900
          %v902 = vpop.f32.mrb[0].mxu0
          %903 = vdwg.mxu0
          %p904 = scmp.lt.s32.totalorder %s672, %s33
          %s905 = scalar_select %p904, 1, 0
          %v906 = vstv %s905
          %vm907 = vcmp.eq.s32.totalorder %v906, 1
          %vm908 = vmor %vm668, %vm907
          %vm909 = vmor %vm669, %vm907
          %v910 = vsel %vm908, 1, 0
          %v911 = vsel %vm909, 1, 0
          %vm912 = vcmp.eq.s32.totalorder %v910, 1
          %vm913 = vcmp.eq.s32.totalorder %v911, 1
          %v914 = vsel %vm912, %v757, -1e+30
          %v915 = vsel %vm913, %v760, -1e+30
          %v916 = vsel %vm912, %v804, -1e+30
          %v917 = vsel %vm913, %v807, -1e+30
          %v918 = vsel %vm912, %v851, -1e+30
          %v919 = vsel %vm913, %v854, -1e+30
          %v920 = vsel %vm912, %v898, -1e+30
          %v921 = vsel %vm913, %v901, -1e+30
          %vm922 = vcmask 130048
          %v923 = vsel %vm922, %v914, -inf
          %924 = vmax.xlane.f32.xlu0 %v923
          %v925 = vpop.xlane.xlu0 %924
          %v926 = vsel %vm922, %v915, -inf
          %927 = vmax.xlane.f32.xlu0 %v926
          %v928 = vpop.xlane.xlu0 %927
          %v929 = vsel %vm922, %v916, -inf
          %930 = vmax.xlane.f32.xlu0 %v929
          %v931 = vpop.xlane.xlu0 %930
          %v932 = vsel %vm922, %v917, -inf
          %933 = vmax.xlane.f32.xlu0 %v932
          %v934 = vpop.xlane.xlu0 %933
          %v935 = vsel %vm922, %v918, -inf
          %936 = vmax.xlane.f32.xlu0 %v935
          %v937 = vpop.xlane.xlu0 %936
          %v938 = vsel %vm922, %v919, -inf
          %939 = vmax.xlane.f32.xlu0 %v938
          %v940 = vpop.xlane.xlu0 %939
          %v941 = vsel %vm922, %v920, -inf
          %942 = vmax.xlane.f32.xlu0 %v941
          %v943 = vpop.xlane.xlu0 %942
          %v944 = vsel %vm922, %v921, -inf
          %945 = vmax.xlane.f32.xlu0 %v944
          %v946 = vpop.xlane.xlu0 %945
          %v947 = vmax.f32 %v677, %v925
          %v948 = vmax.f32 %v678, %v928
          %v949 = vmax.f32 %v679, %v931
          %v950 = vmax.f32 %v680, %v934
          %v951 = vmax.f32 %v681, %v937
          %v952 = vmax.f32 %v682, %v940
          %v953 = vmax.f32 %v683, %v943
          %v954 = vmax.f32 %v684, %v946
          %v955 = vsub.f32 %v677, %v947
          %v956 = vsub.f32 %v678, %v948
          %v957 = vsub.f32 %v679, %v949
          %v958 = vsub.f32 %v680, %v950
          %v959 = vsub.f32 %v681, %v951
          %v960 = vsub.f32 %v682, %v952
          %v961 = vsub.f32 %v683, %v953
          %v962 = vsub.f32 %v684, %v954
          %v963 = vmul.f32 %v955, 1.442695
          %v964 = vpow.pop %v963
          %v965 = vmul.f32 %v956, 1.442695
          %v966 = vpow.pop %v965
          %v967 = vmul.f32 %v957, 1.442695
          %v968 = vpow.pop %v967
          %v969 = vmul.f32 %v958, 1.442695
          %v970 = vpow.pop %v969
          %v971 = vmul.f32 %v959, 1.442695
          %v972 = vpow.pop %v971
          %v973 = vmul.f32 %v960, 1.442695
          %v974 = vpow.pop %v973
          %v975 = vmul.f32 %v961, 1.442695
          %v976 = vpow.pop %v975
          %v977 = vmul.f32 %v962, 1.442695
          %v978 = vpow.pop %v977
          %v979 = vsub.f32 %v914, %v947
          %v980 = vsub.f32 %v915, %v948
          %v981 = vsub.f32 %v916, %v949
          %v982 = vsub.f32 %v917, %v950
          %v983 = vsub.f32 %v918, %v951
          %v984 = vsub.f32 %v919, %v952
          %v985 = vsub.f32 %v920, %v953
          %v986 = vsub.f32 %v921, %v954
          %v987 = vmul.f32 %v979, 1.442695
          %v988 = vpow.pop %v987
          %v989 = vmul.f32 %v980, 1.442695
          %v990 = vpow.pop %v989
          %v991 = vmul.f32 %v981, 1.442695
          %v992 = vpow.pop %v991
          %v993 = vmul.f32 %v982, 1.442695
          %v994 = vpow.pop %v993
          %v995 = vmul.f32 %v983, 1.442695
          %v996 = vpow.pop %v995
          %v997 = vmul.f32 %v984, 1.442695
          %v998 = vpow.pop %v997
          %v999 = vmul.f32 %v985, 1.442695
          %v1000 = vpow.pop %v999
          %v1001 = vmul.f32 %v986, 1.442695
          %v1002 = vpow.pop %v1001
          %v1003 = vmul.f32 %v964, %v685
          %v1004 = vmul.f32 %v966, %v686
          %v1005 = vmul.f32 %v968, %v687
          %v1006 = vmul.f32 %v970, %v688
          %v1007 = vmul.f32 %v972, %v689
          %v1008 = vmul.f32 %v974, %v690
          %v1009 = vmul.f32 %v976, %v691
          %v1010 = vmul.f32 %v978, %v692
          %v1011 = vsel %vm922, %v988, 0.0
          %1012 = vadd.xlane.f32.xlu0 %v1011
          %v1013 = vpop.xlane.xlu0 %1012
          %v1014 = vsel %vm922, %v990, 0.0
          %1015 = vadd.xlane.f32.xlu0 %v1014
          %v1016 = vpop.xlane.xlu0 %1015
          %v1017 = vsel %vm922, %v992, 0.0
          %1018 = vadd.xlane.f32.xlu0 %v1017
          %v1019 = vpop.xlane.xlu0 %1018
          %v1020 = vsel %vm922, %v994, 0.0
          %1021 = vadd.xlane.f32.xlu0 %v1020
          %v1022 = vpop.xlane.xlu0 %1021
          %v1023 = vsel %vm922, %v996, 0.0
          %1024 = vadd.xlane.f32.xlu0 %v1023
          %v1025 = vpop.xlane.xlu0 %1024
          %v1026 = vsel %vm922, %v998, 0.0
          %1027 = vadd.xlane.f32.xlu0 %v1026
          %v1028 = vpop.xlane.xlu0 %1027
          %v1029 = vsel %vm922, %v1000, 0.0
          %1030 = vadd.xlane.f32.xlu0 %v1029
          %v1031 = vpop.xlane.xlu0 %1030
          %v1032 = vsel %vm922, %v1002, 0.0
          %1033 = vadd.xlane.f32.xlu0 %v1032
          %v1034 = vpop.xlane.xlu0 %1033
          %v1035 = vadd.f32 %v1003, %v1013
          %v1036 = vadd.f32 %v1004, %v1016
          %v1037 = vadd.f32 %v1005, %v1019
          %v1038 = vadd.f32 %v1006, %v1022
          %v1039 = vadd.f32 %v1007, %v1025
          %v1040 = vadd.f32 %v1008, %v1028
          %v1041 = vadd.f32 %v1009, %v1031
          %v1042 = vadd.f32 %v1010, %v1034
          %v1043 = vmul.f32 %v964, %v693
          %v1044 = vmul.f32 %v966, %v694
          %v1045 = vmul.f32 %v968, %v695
          %v1046 = vmul.f32 %v970, %v696
          %v1047 = vmul.f32 %v972, %v697
          %v1048 = vmul.f32 %v974, %v698
          %v1049 = vmul.f32 %v976, %v699
          %v1050 = vmul.f32 %v978, %v700
          %v1051 = vpack.c.bf16 %v990, %v988
          %v1052 = vpack.c.bf16 %v994, %v992
          %v1053 = vpack.c.bf16 %v998, %v996
          %v1054 = vpack.c.bf16 %v1002, %v1000
          %v1056 = vsel %vm922, %v1051, 0
          %1058 = vmatprep.subr.bf16.mxu0 0
          %1059 = vmatpush1.bf16.msra.mxu0 %v712
          %1060 = vmatprep.subr.bf16.mxu0 0
          %1061 = vmatpush1.bf16.msra.mxu0 0
          %1062 = vmatprep.subr.bf16.mxu0 0
          %1063 = vmatpush1.bf16.msra.mxu0 0
          %1064 = vmatprep.subr.bf16.mxu0 0
          %1065 = vmatpush1.bf16.msra.mxu0 0
          %1066 = vmatprep.subr.bf16.mxu0 0
          %1067 = vmatpush1.bf16.msra.mxu0 0
          %1068 = vmatprep.subr.bf16.mxu0 0
          %1069 = vmatpush1.bf16.msra.mxu0 0
          %1070 = vmatprep.subr.bf16.mxu0 0
          %1071 = vmatpush1.bf16.msra.mxu0 0
          %1072 = vmatprep.subr.bf16.mxu0 0
          %1073 = vmatpush1.bf16.msra.mxu0 0
          %1074 = vmatprep.subr.bf16.mxu0 0
          %1075 = vmatpush1.bf16.msra.mxu0 0
          %1076 = vmatprep.subr.bf16.mxu0 0
          %1077 = vmatpush1.bf16.msra.mxu0 0
          %1078 = vmatprep.subr.bf16.mxu0 0
          %1079 = vmatpush1.bf16.msra.mxu0 0
          %1080 = vmatprep.subr.bf16.mxu0 0
          %1081 = vmatpush1.bf16.msra.mxu0 0
          %1082 = vmatprep.subr.bf16.mxu0 0
          %1083 = vmatpush1.bf16.msra.mxu0 0
          %1084 = vmatprep.subr.bf16.mxu0 0
          %1085 = vmatpush1.bf16.msra.mxu0 0
          %1086 = vmatprep.subr.bf16.mxu0 0
          %1087 = vmatpush1.bf16.msra.mxu0 0
          %1088 = vmatprep.subr.bf16.mxu0 0
          %1089 = vmatpush1.bf16.msra.mxu0 0
          %1090 = vmatprep.mubr.bf16.mxu0 0
          %1091 = vmatmul.mubr.bf16.gmra.mrb[0].mxu0 %v1056
          %v1092 = vpop.f32.mrb[0].mxu0
          %v1093 = vadd.f32 0.0, %v1092
          %v1094 = vpop.f32.mrb[0].mxu0
          %v1095 = vpop.f32.mrb[0].mxu0
          %v1096 = vadd.f32 0.0, %v1095
          %v1097 = vpop.f32.mrb[0].mxu0
          %1098 = vdwg.mxu0
          %v1100 = vsel %vm922, %v1052, 0
          %1102 = vmatprep.subr.bf16.mxu0 0
          %1103 = vmatpush1.bf16.msra.mxu0 %v713
          %1104 = vmatprep.subr.bf16.mxu0 0
          %1105 = vmatpush1.bf16.msra.mxu0 0
          %1106 = vmatprep.subr.bf16.mxu0 0
          %1107 = vmatpush1.bf16.msra.mxu0 0
          %1108 = vmatprep.subr.bf16.mxu0 0
          %1109 = vmatpush1.bf16.msra.mxu0 0
          %1110 = vmatprep.subr.bf16.mxu0 0
          %1111 = vmatpush1.bf16.msra.mxu0 0
          %1112 = vmatprep.subr.bf16.mxu0 0
          %1113 = vmatpush1.bf16.msra.mxu0 0
          %1114 = vmatprep.subr.bf16.mxu0 0
          %1115 = vmatpush1.bf16.msra.mxu0 0
          %1116 = vmatprep.subr.bf16.mxu0 0
          %1117 = vmatpush1.bf16.msra.mxu0 0
          %1118 = vmatprep.subr.bf16.mxu0 0
          %1119 = vmatpush1.bf16.msra.mxu0 0
          %1120 = vmatprep.subr.bf16.mxu0 0
          %1121 = vmatpush1.bf16.msra.mxu0 0
          %1122 = vmatprep.subr.bf16.mxu0 0
          %1123 = vmatpush1.bf16.msra.mxu0 0
          %1124 = vmatprep.subr.bf16.mxu0 0
          %1125 = vmatpush1.bf16.msra.mxu0 0
          %1126 = vmatprep.subr.bf16.mxu0 0
          %1127 = vmatpush1.bf16.msra.mxu0 0
          %1128 = vmatprep.subr.bf16.mxu0 0
          %1129 = vmatpush1.bf16.msra.mxu0 0
          %1130 = vmatprep.subr.bf16.mxu0 0
          %1131 = vmatpush1.bf16.msra.mxu0 0
          %1132 = vmatprep.subr.bf16.mxu0 0
          %1133 = vmatpush1.bf16.msra.mxu0 0
          %1134 = vmatprep.mubr.bf16.mxu0 0
          %1135 = vmatmul.mubr.bf16.gmra.mrb[0].mxu0 %v1100
          %v1136 = vpop.f32.mrb[0].mxu0
          %v1137 = vadd.f32 0.0, %v1136
          %v1138 = vpop.f32.mrb[0].mxu0
          %v1139 = vpop.f32.mrb[0].mxu0
          %v1140 = vadd.f32 0.0, %v1139
          %v1141 = vpop.f32.mrb[0].mxu0
          %1142 = vdwg.mxu0
          %v1144 = vsel %vm922, %v1053, 0
          %1146 = vmatprep.subr.bf16.mxu0 0
          %1147 = vmatpush1.bf16.msra.mxu0 %v714
          %1148 = vmatprep.subr.bf16.mxu0 0
          %1149 = vmatpush1.bf16.msra.mxu0 0
          %1150 = vmatprep.subr.bf16.mxu0 0
          %1151 = vmatpush1.bf16.msra.mxu0 0
          %1152 = vmatprep.subr.bf16.mxu0 0
          %1153 = vmatpush1.bf16.msra.mxu0 0
          %1154 = vmatprep.subr.bf16.mxu0 0
          %1155 = vmatpush1.bf16.msra.mxu0 0
          %1156 = vmatprep.subr.bf16.mxu0 0
          %1157 = vmatpush1.bf16.msra.mxu0 0
          %1158 = vmatprep.subr.bf16.mxu0 0
          %1159 = vmatpush1.bf16.msra.mxu0 0
          %1160 = vmatprep.subr.bf16.mxu0 0
          %1161 = vmatpush1.bf16.msra.mxu0 0
          %1162 = vmatprep.subr.bf16.mxu0 0
          %1163 = vmatpush1.bf16.msra.mxu0 0
          %1164 = vmatprep.subr.bf16.mxu0 0
          %1165 = vmatpush1.bf16.msra.mxu0 0
          %1166 = vmatprep.subr.bf16.mxu0 0
          %1167 = vmatpush1.bf16.msra.mxu0 0
          %1168 = vmatprep.subr.bf16.mxu0 0
          %1169 = vmatpush1.bf16.msra.mxu0 0
          %1170 = vmatprep.subr.bf16.mxu0 0
          %1171 = vmatpush1.bf16.msra.mxu0 0
          %1172 = vmatprep.subr.bf16.mxu0 0
          %1173 = vmatpush1.bf16.msra.mxu0 0
          %1174 = vmatprep.subr.bf16.mxu0 0
          %1175 = vmatpush1.bf16.msra.mxu0 0
          %1176 = vmatprep.subr.bf16.mxu0 0
          %1177 = vmatpush1.bf16.msra.mxu0 0
          %1178 = vmatprep.mubr.bf16.mxu0 0
          %1179 = vmatmul.mubr.bf16.gmra.mrb[0].mxu0 %v1144
          %v1180 = vpop.f32.mrb[0].mxu0
          %v1181 = vadd.f32 0.0, %v1180
          %v1182 = vpop.f32.mrb[0].mxu0
          %v1183 = vpop.f32.mrb[0].mxu0
          %v1184 = vadd.f32 0.0, %v1183
          %v1185 = vpop.f32.mrb[0].mxu0
          %1186 = vdwg.mxu0
          %v1188 = vsel %vm922, %v1054, 0
          %1190 = vmatprep.subr.bf16.mxu0 0
          %1191 = vmatpush1.bf16.msra.mxu0 %v715
          %1192 = vmatprep.subr.bf16.mxu0 0
          %1193 = vmatpush1.bf16.msra.mxu0 0
          %1194 = vmatprep.subr.bf16.mxu0 0
          %1195 = vmatpush1.bf16.msra.mxu0 0
          %1196 = vmatprep.subr.bf16.mxu0 0
          %1197 = vmatpush1.bf16.msra.mxu0 0
          %1198 = vmatprep.subr.bf16.mxu0 0
          %1199 = vmatpush1.bf16.msra.mxu0 0
          %1200 = vmatprep.subr.bf16.mxu0 0
          %1201 = vmatpush1.bf16.msra.mxu0 0
          %1202 = vmatprep.subr.bf16.mxu0 0
          %1203 = vmatpush1.bf16.msra.mxu0 0
          %1204 = vmatprep.subr.bf16.mxu0 0
          %1205 = vmatpush1.bf16.msra.mxu0 0
          %1206 = vmatprep.subr.bf16.mxu0 0
          %1207 = vmatpush1.bf16.msra.mxu0 0
          %1208 = vmatprep.subr.bf16.mxu0 0
          %1209 = vmatpush1.bf16.msra.mxu0 0
          %1210 = vmatprep.subr.bf16.mxu0 0
          %1211 = vmatpush1.bf16.msra.mxu0 0
          %1212 = vmatprep.subr.bf16.mxu0 0
          %1213 = vmatpush1.bf16.msra.mxu0 0
          %1214 = vmatprep.subr.bf16.mxu0 0
          %1215 = vmatpush1.bf16.msra.mxu0 0
          %1216 = vmatprep.subr.bf16.mxu0 0
          %1217 = vmatpush1.bf16.msra.mxu0 0
          %1218 = vmatprep.subr.bf16.mxu0 0
          %1219 = vmatpush1.bf16.msra.mxu0 0
          %1220 = vmatprep.subr.bf16.mxu0 0
          %1221 = vmatpush1.bf16.msra.mxu0 0
          %1222 = vmatprep.mubr.bf16.mxu0 0
          %1223 = vmatmul.mubr.bf16.gmra.mrb[0].mxu0 %v1188
          %v1224 = vpop.f32.mrb[0].mxu0
          %v1225 = vadd.f32 0.0, %v1224
          %v1226 = vpop.f32.mrb[0].mxu0
          %v1227 = vpop.f32.mrb[0].mxu0
          %v1228 = vadd.f32 0.0, %v1227
          %v1229 = vpop.f32.mrb[0].mxu0
          %1230 = vdwg.mxu0
          %v1231 = vadd.f32 %v1043, %v1093
          %v1232 = vadd.f32 %v1044, %v1096
          %v1233 = vadd.f32 %v1045, %v1137
          %v1234 = vadd.f32 %v1046, %v1140
          %v1235 = vadd.f32 %v1047, %v1181
          %v1236 = vadd.f32 %v1048, %v1184
          %v1237 = vadd.f32 %v1049, %v1225
          %v1238 = vadd.f32 %v1050, %v1228
        $region81: #{tpu_custom_call.1} parent=67 // loop_footer
          %s674 = sadd.s32 %s672, 1
        $region82: #{tpu_custom_call.1} parent=67 // loop_footer_branch
          %671 = sbr.rel target = $region78
        $region83: #{tpu_custom_call.1} parent=67 // loop_exit
          _
        %v1239 = vrcp.pop %v685
        %v1240 = vrcp.pop %v686
        %v1241 = vrcp.pop %v687
        %v1242 = vrcp.pop %v688
        %v1243 = vrcp.pop %v689
        %v1244 = vrcp.pop %v690
        %v1245 = vrcp.pop %v691
        %v1246 = vrcp.pop %v692
        %v1247 = vmul.f32 %v693, %v1239
        %v1248 = vmul.f32 %v694, %v1240
        %v1249 = vmul.f32 %v695, %v1241
        %v1250 = vmul.f32 %v696, %v1242
        %v1251 = vmul.f32 %v697, %v1243
        %v1252 = vmul.f32 %v698, %v1244
        %v1253 = vmul.f32 %v699, %v1245
        %v1254 = vmul.f32 %v700, %v1246
        %1257 = vrot.lane.b32.xlu0 %v1249, 8
        %v1258 = vpop.permute.xlu0 %1257
        %1259 = vrot.lane.b32.xlu0 %v1250, 8
        %v1260 = vpop.permute.xlu0 %1259
        %1265 = vrot.lane.b32.xlu0 %v1251, 16
        %v1266 = vpop.permute.xlu0 %1265
        %1267 = vrot.lane.b32.xlu0 %v1252, 16
        %v1268 = vpop.permute.xlu0 %1267
        %1273 = vrot.lane.b32.xlu0 %v1253, 24
        %v1274 = vpop.permute.xlu0 %1273
        %1275 = vrot.lane.b32.xlu0 %v1254, 24
        %v1276 = vpop.permute.xlu0 %1275
        %v1279 = vsel %vm593, %v1247, %v1258
        %v1280 = vsel %vm593, %v1248, %v1260
        %vm1281 = vcmask 130048
        %v1282 = vsel %vm1281, %v1279, %v1266
        %v1283 = vsel %vm1281, %v1280, %v1268
        %vm1284 = vcmask 195584
        %v1285 = vsel %vm1284, %v1282, %v1274
        %v1286 = vsel %vm1284, %v1283, %v1276
        %v1287 = vpack.c.bf16 %v1286, %v1285
        %v1288 = vld [vmem:[#allocation4] sm:$0xf]
        %v1289 = vld [vmem:[#allocation4 + $0x4] sm:$0xf]
        %v1290 = vld [vmem:[#allocation4 + $0x8] sm:$0xf]
        %v1291 = vld [vmem:[#allocation4 + $0xc] sm:$0xf]
        %v1292 = vld [vmem:[%s5] sm:$0x1]
        %v1294 = vlaneseq
        %v1295 = vshrl.u32 %v1294, 7
        %v1296 = vsub.s32 0, %v1295
        %v1297 = vrot.slane %v1292, %v1296
        %v1303 = vunpack.c.l.b16 %v1288
        %v1304 = vunpack.c.l.b16 %v1289
        %v1305 = vunpack.c.l.b16 %v1290
        %v1306 = vunpack.c.l.b16 %v1291
        %v1307 = vpack.c.b16 %v1304, %v1303
        %v1308 = vpack.c.b16 %v1306, %v1305
        %v1312 = vsel %vm479, %v1287, 0
        %1314 = vmatprep.subr.bf16.mxu0 0
        %1315 = vmatpush1.bf16.msra.mxu0 %v1307
        %1316 = vmatprep.subr.bf16.mxu0 0
        %1317 = vmatpush1.bf16.msra.mxu0 %v1308
        %1318 = vmatprep.subr.bf16.mxu0 0
        %1319 = vmatpush1.bf16.msra.mxu0 0
        %1320 = vmatprep.subr.bf16.mxu0 0
        %1321 = vmatpush1.bf16.msra.mxu0 0
        %1322 = vmatprep.subr.bf16.mxu0 0
        %1323 = vmatpush1.bf16.msra.mxu0 0
        %1324 = vmatprep.subr.bf16.mxu0 0
        %1325 = vmatpush1.bf16.msra.mxu0 0
        %1326 = vmatprep.subr.bf16.mxu0 0
        %1327 = vmatpush1.bf16.msra.mxu0 0
        %1328 = vmatprep.subr.bf16.mxu0 0
        %1329 = vmatpush1.bf16.msra.mxu0 0
        %1330 = vmatprep.subr.bf16.mxu0 0
        %1331 = vmatpush1.bf16.msra.mxu0 0
        %1332 = vmatprep.subr.bf16.mxu0 0
        %1333 = vmatpush1.bf16.msra.mxu0 0
        %1334 = vmatprep.subr.bf16.mxu0 0
        %1335 = vmatpush1.bf16.msra.mxu0 0
        %1336 = vmatprep.subr.bf16.mxu0 0
        %1337 = vmatpush1.bf16.msra.mxu0 0
        %1338 = vmatprep.subr.bf16.mxu0 0
        %1339 = vmatpush1.bf16.msra.mxu0 0
        %1340 = vmatprep.subr.bf16.mxu0 0
        %1341 = vmatpush1.bf16.msra.mxu0 0
        %1342 = vmatprep.subr.bf16.mxu0 0
        %1343 = vmatpush1.bf16.msra.mxu0 0
        %1344 = vmatprep.subr.bf16.mxu0 0
        %1345 = vmatpush1.bf16.msra.mxu0 0
        %1346 = vmatprep.mubr.bf16.mxu0 0
        %1347 = vmatmul.mubr.bf16.gmra.mrb[0].mxu0 %v1312
        %v1348 = vpop.f32.mrb[0].mxu0
        %v1349 = vadd.f32 %v1297, %v1348
        %v1350 = vpop.f32.mrb[0].mxu0
        %v1351 = vpop.f32.mrb[0].mxu0
        %v1352 = vadd.f32 %v1297, %v1351
        %v1353 = vpop.f32.mrb[0].mxu0
        %1354 = vdwg.mxu0
        %v1355 = vadd.f32 %v475, %v1349
        %v1356 = vadd.f32 %v476, %v1352
        %v1357 = vld [vmem:[%s6] sm:$0x1]
        %v1358 = vld [vmem:[%s7] sm:$0x1]
        %v1359 = vsel %vm479, %v1355, 0.0
        %1360 = vadd.xlane.f32.xlu0 %v1359
        %v1361 = vpop.xlane.xlu0 %1360
        %v1362 = vsel %vm479, %v1356, 0.0
        %1363 = vadd.xlane.f32.xlu0 %v1362
        %v1364 = vpop.xlane.xlu0 %1363
        %v1365 = vmul.f32 %v1361, %v486
        %v1366 = vmul.f32 %v1364, %v486
        %v1367 = vsub.f32 %v1355, %v1365
        %v1368 = vsub.f32 %v1356, %v1366
        %v1369 = vmul.f32 %v1367, %v1367
        %v1370 = vmul.f32 %v1368, %v1368
        %v1371 = vsel %vm479, %v1369, 0.0
        %1372 = vadd.xlane.f32.xlu0 %v1371
        %v1373 = vpop.xlane.xlu0 %1372
        %v1374 = vsel %vm479, %v1370, 0.0
        %1375 = vadd.xlane.f32.xlu0 %v1374
        %v1376 = vpop.xlane.xlu0 %1375
        %v1377 = vmul.f32 %v1373, %v486
        %v1378 = vmul.f32 %v1376, %v486
        %v1379 = vadd.f32 %v1377, 1e-05
        %v1380 = vadd.f32 %v1378, 1e-05
        %v1381 = vrsqrt.pop %v1379
        %v1382 = vrsqrt.pop %v1380
        %v1383 = vmul.f32 %v1367, %v1381
        %v1384 = vmul.f32 %v1368, %v1382
        %v1386 = vlaneseq
        %v1387 = vshrl.u32 %v1386, 7
        %v1388 = vsub.s32 0, %v1387
        %v1389 = vrot.slane %v1357, %v1388
        %v1391 = vmul.f32 %v1383, %v1389
        %v1392 = vmul.f32 %v1384, %v1389
        %v1394 = vlaneseq
        %v1395 = vshrl.u32 %v1394, 7
        %v1396 = vsub.s32 0, %v1395
        %v1397 = vrot.slane %v1358, %v1396
        %v1399 = vadd.f32 %v1391, %v1397
        %v1400 = vadd.f32 %v1392, %v1397
        %v1401 = vpack.c.bf16 %v1400, %v1399
        %v1402 = vld [vmem:[#allocation7] sm:$0xf]
        %v1403 = vld [vmem:[#allocation7 + $0x4] sm:$0xf]
        %v1404 = vld [vmem:[#allocation7 + $0x8] sm:$0xf]
        %v1405 = vld [vmem:[#allocation7 + $0xc] sm:$0xf]
        %v1406 = vld [vmem:[%s9] sm:$0x1]
        %v1408 = vlaneseq
        %v1409 = vshrl.u32 %v1408, 7
        %v1410 = vsub.s32 0, %v1409
        %v1411 = vrot.slane %v1406, %v1410
        %v1417 = vunpack.c.l.b16 %v1402
        %v1418 = vunpack.c.l.b16 %v1403
        %v1419 = vunpack.c.l.b16 %v1404
        %v1420 = vunpack.c.l.b16 %v1405
        %v1421 = vpack.c.b16 %v1418, %v1417
        %v1422 = vpack.c.b16 %v1420, %v1419
        %v1426 = vsel %vm479, %v1401, 0
        %1428 = vmatprep.subr.bf16.mxu0 0
        %1429 = vmatpush1.bf16.msra.mxu0 %v1421
        %1430 = vmatprep.subr.bf16.mxu0 0
        %1431 = vmatpush1.bf16.msra.mxu0 %v1422
        %1432 = vmatprep.subr.bf16.mxu0 0
        %1433 = vmatpush1.bf16.msra.mxu0 0
        %1434 = vmatprep.subr.bf16.mxu0 0
        %1435 = vmatpush1.bf16.msra.mxu0 0
        %1436 = vmatprep.subr.bf16.mxu0 0
        %1437 = vmatpush1.bf16.msra.mxu0 0
        %1438 = vmatprep.subr.bf16.mxu0 0
        %1439 = vmatpush1.bf16.msra.mxu0 0
        %1440 = vmatprep.subr.bf16.mxu0 0
        %1441 = vmatpush1.bf16.msra.mxu0 0
        %1442 = vmatprep.subr.bf16.mxu0 0
        %1443 = vmatpush1.bf16.msra.mxu0 0
        %1444 = vmatprep.subr.bf16.mxu0 0
        %1445 = vmatpush1.bf16.msra.mxu0 0
        %1446 = vmatprep.subr.bf16.mxu0 0
        %1447 = vmatpush1.bf16.msra.mxu0 0
        %1448 = vmatprep.subr.bf16.mxu0 0
        %1449 = vmatpush1.bf16.msra.mxu0 0
        %1450 = vmatprep.subr.bf16.mxu0 0
        %1451 = vmatpush1.bf16.msra.mxu0 0
        %1452 = vmatprep.subr.bf16.mxu0 0
        %1453 = vmatpush1.bf16.msra.mxu0 0
        %1454 = vmatprep.subr.bf16.mxu0 0
        %1455 = vmatpush1.bf16.msra.mxu0 0
        %1456 = vmatprep.subr.bf16.mxu0 0
        %1457 = vmatpush1.bf16.msra.mxu0 0
        %1458 = vmatprep.subr.bf16.mxu0 0
        %1459 = vmatpush1.bf16.msra.mxu0 0
        %1460 = vmatprep.mubr.bf16.mxu0 0
        %1461 = vmatmul.mubr.bf16.gmra.mrb[0].mxu0 %v1426
        %v1462 = vpop.f32.mrb[0].mxu0
        %v1463 = vadd.f32 %v1411, %v1462
        %v1464 = vpop.f32.mrb[0].mxu0
        %v1465 = vpop.f32.mrb[0].mxu0
        %v1466 = vadd.f32 %v1411, %v1465
        %v1467 = vpop.f32.mrb[0].mxu0
        %1468 = vdwg.mxu0
        %v1469 = vmax.f32 %v1463, 0.0
        %v1470 = vmax.f32 %v1466, 0.0
        %v1471 = vpack.c.bf16 %v1470, %v1469
        %v1472 = vld [vmem:[%s10] sm:$0xf]
        %v1473 = vld [vmem:[%s10 + $0x4] sm:$0xf]
        %v1474 = vld [vmem:[%s10 + $0x8] sm:$0xf]
        %v1475 = vld [vmem:[%s10 + $0xc] sm:$0xf]
        %v1476 = vld [vmem:[%s10 + $0x10] sm:$0xf]
        %v1477 = vld [vmem:[%s10 + $0x14] sm:$0xf]
        %v1478 = vld [vmem:[%s10 + $0x18] sm:$0xf]
        %v1479 = vld [vmem:[%s10 + $0x1c] sm:$0xf]
        %v1480 = vld [vmem:[%s10 + $0x20] sm:$0xf]
        %v1481 = vld [vmem:[%s10 + $0x24] sm:$0xf]
        %v1482 = vld [vmem:[%s10 + $0x28] sm:$0xf]
        %v1483 = vld [vmem:[%s10 + $0x2c] sm:$0xf]
        %v1484 = vld [vmem:[%s10 + $0x30] sm:$0xf]
        %v1485 = vld [vmem:[%s10 + $0x34] sm:$0xf]
        %v1486 = vld [vmem:[%s10 + $0x38] sm:$0xf]
        %v1487 = vld [vmem:[%s10 + $0x3c] sm:$0xf]
        %v1488 = vld [vmem:[%s11] sm:$0x1]
        %v1490 = vlaneseq
        %v1491 = vshrl.u32 %v1490, 7
        %v1492 = vsub.s32 0, %v1491
        %v1493 = vrot.slane %v1488, %v1492
        %v1511 = vunpack.c.l.b16 %v1472
        %v1512 = vunpack.c.l.b16 %v1473
        %v1513 = vunpack.c.l.b16 %v1474
        %v1514 = vunpack.c.l.b16 %v1475
        %v1515 = vunpack.c.l.b16 %v1476
        %v1516 = vunpack.c.l.b16 %v1477
        %v1517 = vunpack.c.l.b16 %v1478
        %v1518 = vunpack.c.l.b16 %v1479
        %v1519 = vunpack.c.l.b16 %v1480
        %v1520 = vunpack.c.l.b16 %v1481
        %v1521 = vunpack.c.l.b16 %v1482
        %v1522 = vunpack.c.l.b16 %v1483
        %v1523 = vunpack.c.l.b16 %v1484
        %v1524 = vunpack.c.l.b16 %v1485
        %v1525 = vunpack.c.l.b16 %v1486
        %v1526 = vunpack.c.l.b16 %v1487
        %v1527 = vpack.c.b16 %v1512, %v1511
        %v1528 = vpack.c.b16 %v1514, %v1513
        %v1529 = vpack.c.b16 %v1516, %v1515
        %v1530 = vpack.c.b16 %v1518, %v1517
        %v1531 = vpack.c.b16 %v1520, %v1519
        %v1532 = vpack.c.b16 %v1522, %v1521
        %v1533 = vpack.c.b16 %v1524, %v1523
        %v1534 = vpack.c.b16 %v1526, %v1525
        %1543 = vmatprep.subr.bf16.mxu0 0
        %1544 = vmatpush1.bf16.msra.mxu0 %v1527
        %1545 = vmatprep.subr.bf16.mxu0 0
        %1546 = vmatpush1.bf16.msra.mxu0 %v1528
        %1547 = vmatprep.subr.bf16.mxu0 0
        %1548 = vmatpush1.bf16.msra.mxu0 %v1529
        %1549 = vmatprep.subr.bf16.mxu0 0
        %1550 = vmatpush1.bf16.msra.mxu0 %v1530
        %1551 = vmatprep.subr.bf16.mxu0 0
        %1552 = vmatpush1.bf16.msra.mxu0 %v1531
        %1553 = vmatprep.subr.bf16.mxu0 0
        %1554 = vmatpush1.bf16.msra.mxu0 %v1532
        %1555 = vmatprep.subr.bf16.mxu0 0
        %1556 = vmatpush1.bf16.msra.mxu0 %v1533
        %1557 = vmatprep.subr.bf16.mxu0 0
        %1558 = vmatpush1.bf16.msra.mxu0 %v1534
        %1559 = vmatprep.subr.bf16.mxu0 0
        %1560 = vmatpush1.bf16.msra.mxu0 0
        %1561 = vmatprep.subr.bf16.mxu0 0
        %1562 = vmatpush1.bf16.msra.mxu0 0
        %1563 = vmatprep.subr.bf16.mxu0 0
        %1564 = vmatpush1.bf16.msra.mxu0 0
        %1565 = vmatprep.subr.bf16.mxu0 0
        %1566 = vmatpush1.bf16.msra.mxu0 0
        %1567 = vmatprep.subr.bf16.mxu0 0
        %1568 = vmatpush1.bf16.msra.mxu0 0
        %1569 = vmatprep.subr.bf16.mxu0 0
        %1570 = vmatpush1.bf16.msra.mxu0 0
        %1571 = vmatprep.subr.bf16.mxu0 0
        %1572 = vmatpush1.bf16.msra.mxu0 0
        %1573 = vmatprep.subr.bf16.mxu0 0
        %1574 = vmatpush1.bf16.msra.mxu0 0
        %1575 = vmatprep.mubr.bf16.mxu0 0
        %1576 = vmatmul.mubr.bf16.gmra.mrb[0].mxu0 %v1471
        %v1577 = vpop.f32.mrb[0].mxu0
        %v1578 = vadd.f32 %v1493, %v1577
        %v1579 = vpop.f32.mrb[0].mxu0
        %v1580 = vpop.f32.mrb[0].mxu0
        %v1581 = vadd.f32 %v1493, %v1580
        %v1582 = vpop.f32.mrb[0].mxu0
        %1583 = vdwg.mxu0
        %v1584 = vadd.f32 %v1355, %v1578
        %v1585 = vadd.f32 %v1356, %v1581
        %1586 = vst.msk [vmem:[%s461] sm:$0xff] %vm479, %v1584
        %1587 = vst.msk [vmem:[%s461 + $0x8] sm:$0xff] %vm479, %v1585
        %s1588 = sand.u32 %s309, 1
        %s1589 = scalar_lea.sflag [#allocation6], %s1588
        %s1590 = sand.u32 %s309, 1
        %s1591 = smul.addr %s1590, 16
        %s1592 = scalar_lea.vmem [#allocation9], %s1591
        // Predicated region
        $region84: #{tpu_custom_call.1} parent=67 // pred_check
          %p1593 = pneg %p319
        $region85: #{tpu_custom_call.1} parent=67 // pred_check_branch
          %1595 = sbr.rel (%p1593) target = $region87
        $region86: #{tpu_custom_call.1} parent=67 // pred_region
          %s1596 = smul.u32 2, %s33
          %s1598 = ssub.s32 256, 256
          %1599 = vsyncadd %s1589, %s1598
          %s1600 = smul.addr %s32, 4
          %s1601 = sadd.s32 %s1596, %s1600
          %s1602 = smul.addr %s1601, 128
          %s1603 = scalar_lea.hbm %s12, %s1602
          %s1604 = sshll.u32 %s1592, 4
          %s1605 = int_to_ptr.vmem [resolvable:$true] %s1604
          %1610 = dma.vmem_to_hbm [thread:$0]  %s1605, 256, %s1603, %s1589, 128, 128, 8
        $region87: #{tpu_custom_call.1} parent=67 // pred_fallthru
          _
      $region68: #{tpu_custom_call.1} parent=5 // pred_fallthru
        _
      %p1611 = scmp.le.s32.totalorder 2, %s23
      // Predicated region
      $region88: #{tpu_custom_call.1} parent=5 // pred_check
        %p1612 = pneg %p1611
      $region89: #{tpu_custom_call.1} parent=5 // pred_check_branch
        %1614 = sbr.rel (%p1612) target = $region91
      $region90: #{tpu_custom_call.1} parent=5 // pred_region
        %s1615 = ssub.s32 %s23, 2
        // Predicated region
        $region92: #{tpu_custom_call.1} parent=90 // pred_check
          %p1616 = pneg %p325
        $region93: #{tpu_custom_call.1} parent=90 // pred_check_branch
          %1618 = sbr.rel (%p1616) target = $region95
        $region94: #{tpu_custom_call.1} parent=90 // pred_region
          %s1619 = sand.u32 %s310, 1
          %s1620 = scalar_lea.sflag [#allocation6], %s1619
          %s1621 = sand.u32 %s310, 1
          %s1622 = smul.addr %s1621, 16
          %s1623 = scalar_lea.vmem [#allocation9], %s1622
          %1624 = dma.done %s1620, 256
        $region95: #{tpu_custom_call.1} parent=90 // pred_fallthru
          _
      $region91: #{tpu_custom_call.1} parent=5 // pred_fallthru
        _
    $region6: #{tpu_custom_call.1} parent=1 // loop_footer
      %s27 = sadd.s32 1, %s23
    $region7: #{tpu_custom_call.1} parent=1 // loop_footer_branch
      %22 = sbr.rel target = $region3
    $region8: #{tpu_custom_call.1} parent=1 // loop_exit
      _
    %1625 = vsyncpa [#allocation5], 1
    %s1626 = scalar_lea.sflag [#allocation5], 1
    %1627 = vsyncpa %s1626, 1
    %1628 = vsyncpa [#allocation8], 1
    %1629 = vsyncpa [#allocation6], 1
    %s1630 = scalar_lea.sflag [#allocation6], 1
    %1631 = vsyncpa %s1630, 1

// kernel: tpu_custom_call.1
$region0: #{tpu_custom_call.1}
  #allocation0 [shape = 'u32[]', space=smem, size = 0x4, offset = 0x4, fixed_abs, tag = 'smem constant byte address 0x4 - core index']
  #allocation1 [shape = 'u32[144,128]{1,0:T(1,128)}', space=vmem, size = 0x12000, scoped, tag = 'internal scratch']
  #allocation2 [shape = 'bf16[4,32,8]{2,1,0:T(16,128)(2,1)}', space=vmem, size = 0x8000, scoped, tag = 'scratch operand']
  #allocation3 [shape = 'bf16[4,32,8]{2,1,0:T(16,128)(2,1)}', space=vmem, size = 0x8000, scoped, tag = 'scratch operand']
  %s0 = inlined_call_operand.vmem [shape: f32[2,32,32], index: 0, kind: input, shape index: {}]
  %s1 = inlined_call_operand.vmem [shape: f32[1,32], index: 1, kind: input, shape index: {}]
  %s2 = inlined_call_operand.vmem [shape: f32[1,32], index: 2, kind: input, shape index: {}]
  %s3 = inlined_call_operand.vmem [shape: bf16[32,96], index: 3, kind: input, shape index: {}]
  %s4 = inlined_call_operand.hbm [shape: bf16[32,32], index: 4, kind: input, shape index: {}]
  %s5 = inlined_call_operand.vmem [shape: f32[1,32], index: 5, kind: input, shape index: {}]
  %s6 = inlined_call_operand.vmem [shape: f32[1,32], index: 6, kind: input, shape index: {}]
  %s7 = inlined_call_operand.vmem [shape: f32[1,32], index: 7, kind: input, shape index: {}]
  %s8 = inlined_call_operand.hbm [shape: bf16[32,128], index: 8, kind: input, shape index: {}]
  %s9 = inlined_call_operand.vmem [shape: f32[1,128], index: 9, kind: input, shape index: {}]
  %s10 = inlined_call_operand.vmem [shape: bf16[128,32], index: 10, kind: input, shape index: {}]
  %s11 = inlined_call_operand.vmem [shape: f32[1,32], index: 11, kind: input, shape index: {}]
  %s12 = inlined_call_operand.hbm [shape: f32[2,32,32], index: 12, kind: output, shape index: {}]
  %s13 = sld [smem:[#allocation0]]
  $region96: #{tpu_custom_call.1} parent=0
    _
  %s15 = ssub.s32 1, %s13
  %s16 = scalar_select 0, %s15, %s13
  $region1: #{tpu_custom_call.1} parent=0
    #allocation4 [shape = 'u8[8192]{0}', space=vmem, size = 0x2000, scoped, tag = 'input window, operand 4, single buffered']
    #allocation5 [shape = 's32[2]{0}', space=sflag, size = 0x8, scoped, tag = 'scoped memory for tpu_custom_call.1']
    #allocation6 [shape = 's32[2]{0}', space=sflag, size = 0x8, scoped, tag = 'scoped memory for tpu_custom_call.1']
    #allocation7 [shape = 'u8[8192]{0}', space=vmem, size = 0x2000, scoped, tag = 'input window, operand 8, single buffered']
    #allocation8 [shape = 's32[1]{0}', space=sflag, size = 0x4, scoped, tag = 'scoped memory for tpu_custom_call.1']
    #allocation9 [shape = 'u8[16384]{0}', space=vmem, size = 0x4000, scoped, tag = 'output window, operand 0']
    %17 = vsyncpa [#allocation5], 0
    %18 = vsyncpa [#allocation8], 0
    %19 = vsyncpa [#allocation6], 0
    %s20 = scalar_lea.sflag [#allocation6], 1
    %21 = vsyncpa %s20, 0
    loop: start=0, step=1, limit=6
    $region2: #{tpu_custom_call.1} parent=1 // loop_pre_header
      _
    $region3: #{tpu_custom_call.1} parent=1 // loop_header
      %s23 = sphi 0, %s27
      %p24 = scmp.ge.s32.totalorder %s23, 6
      %s30 = sphi 0, %s42
      %s31 = sphi 0, %s38
      %s32 = sphi 0, %s30
      %s33 = sphi 0, %s31
      %s34 = sphi 0, %s32
      %s35 = sphi 0, %s33
      %s47 = sphi 0, %s49
      %s50 = sphi 0, %s47
      %s51 = sphi 0, %s50
      %s67 = sphi 0, %s51
      %s71 = sphi 0, %s71
      %s73 = sphi 0, %s71
      %s74 = sphi 0, %s73
      %s88 = sphi 0, %s74
      %s92 = sphi 0, %s92
      %s94 = sphi 0, %s92
      %s95 = sphi 0, %s94
      %s109 = sphi 0, %s95
      %s113 = sphi 0, %s113
      %s115 = sphi 0, %s113
      %s116 = sphi 0, %s115
      %s130 = sphi 0, %s116
      %s134 = sphi 0, %s134
      %s136 = sphi 0, %s134
      %s137 = sphi 0, %s136
      %s151 = sphi 0, %s137
      %s155 = sphi 0, %s155
      %s157 = sphi 0, %s155
      %s158 = sphi 0, %s157
      %s172 = sphi 0, %s158
      %s176 = sphi 0, %s176
      %s178 = sphi 0, %s176
      %s179 = sphi 0, %s178
      %s193 = sphi 0, %s179
      %s197 = sphi 0, %s197
      %s199 = sphi 0, %s197
      %s200 = sphi 0, %s199
      %s214 = sphi 0, %s200
      %s218 = sphi 0, %s218
      %s220 = sphi 0, %s218
      %s221 = sphi 0, %s220
      %s235 = sphi 0, %s221
      %s239 = sphi 0, %s239
      %s241 = sphi 0, %s239
      %s242 = sphi 0, %s241
      %s256 = sphi 0, %s242
      %s260 = sphi 0, %s260
      %s262 = sphi 0, %s260
      %s263 = sphi 0, %s262
      %s277 = sphi 0, %s263
      %s281 = sphi 0, %s281
      %s283 = sphi 0, %s281
      %s284 = sphi 0, %s283
      %s298 = sphi 0, %s284
      %s306 = sphi 0, %s308
      %s309 = sphi 0, %s306
      %s310 = sphi 0, %s309
      %s326 = sphi 0, %s310
    $region4: #{tpu_custom_call.1} parent=1 // loop_header_branch
      %26 = sbr.rel (%p24) target = $region8
    $region5: #{tpu_custom_call.1} parent=1 // loop_body
      %s28 = ssub.s32 %s23, 1
      %s29 = ssub.s32 %s23, 2
      %s36 = sadd.s32 1, %s31
      %p37 = scmp.ge.s32.totalorder %s36, 2
      %s38 = scalar_select %p37, 0, %s36
      %s39 = sadd.s32 1, %s30
      %s40 = scalar_select %p37, %s39, %s30
      %p41 = scmp.ge.s32.totalorder %s40, 2
      %s42 = scalar_select %p41, 0, %s40
      %s43 = ssub.s32 %s30, %s42
      %s44 = ssub.s32 %s31, %s38
      %s45 = sor.u32 %s43, %s44
      %p46 = scmp.eq.s32.totalorder %s45, 0
      %s48 = sadd.s32 %s47, 1
      %s49 = scalar_select %p46, %s47, %s48
      %p52 = pneg %p46
      %p53 = scmp.eq.s32.totalorder %s23, 3
      %p54 = por %p52, %p53
      %p55 = scmp.ne.s32.totalorder %s47, %s50
      %p56 = scmp.eq.s32.totalorder %s23, 0
      %p57 = por %p55, %p56
      %p58 = scmp.ne.s32.totalorder %s47, %s50
      %p59 = scmp.eq.s32.totalorder %s28, 3
      %p60 = por %p58, %p59
      %p61 = scmp.ne.s32.totalorder %s50, %s51
      %p62 = scmp.eq.s32.totalorder %s28, 0
      %p63 = por %p61, %p62
      %p64 = scmp.ne.s32.totalorder %s50, %s51
      %p65 = scmp.eq.s32.totalorder %s29, 3
      %p66 = por %p64, %p65
      %p68 = scmp.ne.s32.totalorder %s51, %s67
      %p69 = scmp.eq.s32.totalorder %s29, 0
      %p70 = por %p68, %p69
      %s72 = sadd.s32 %s71, 1
      %p75 = scmp.eq.s32.totalorder %s23, 3
      %p76 = scmp.ne.s32.totalorder %s71, %s73
      %p77 = scmp.eq.s32.totalorder %s23, 0
      %p78 = por %p76, %p77
      %p79 = scmp.ne.s32.totalorder %s71, %s73
      %p80 = scmp.eq.s32.totalorder %s28, 3
      %p81 = por %p79, %p80
      %p82 = scmp.ne.s32.totalorder %s73, %s74
      %p83 = scmp.eq.s32.totalorder %s28, 0
      %p84 = por %p82, %p83
      %p85 = scmp.ne.s32.totalorder %s73, %s74
      %p86 = scmp.eq.s32.totalorder %s29, 3
      %p87 = por %p85, %p86
      %p89 = scmp.ne.s32.totalorder %s74, %s88
      %p90 = scmp.eq.s32.totalorder %s29, 0
      %p91 = por %p89, %p90
      %s93 = sadd.s32 %s92, 1
      %p96 = scmp.eq.s32.totalorder %s23, 3
      %p97 = scmp.ne.s32.totalorder %s92, %s94
      %p98 = scmp.eq.s32.totalorder %s23, 0
      %p99 = por %p97, %p98
      %p100 = scmp.ne.s32.totalorder %s92, %s94
      %p101 = scmp.eq.s32.totalorder %s28, 3
      %p102 = por %p100, %p101
      %p103 = scmp.ne.s32.totalorder %s94, %s95
      %p104 = scmp.eq.s32.totalorder %s28, 0
      %p105 = por %p103, %p104
      %p106 = scmp.ne.s32.totalorder %s94, %s95
      %p107 = scmp.eq.s32.totalorder %s29, 3
      %p108 = por %p106, %p107
      %p110 = scmp.ne.s32.totalorder %s95, %s109
      %p111 = scmp.eq.s32.totalorder %s29, 0
      %p112 = por %p110, %p111
      %s114 = sadd.s32 %s113, 1
      %p117 = scmp.eq.s32.totalorder %s23, 3
      %p118 = scmp.ne.s32.totalorder %s113, %s115
      %p119 = scmp.eq.s32.totalorder %s23, 0
      %p120 = por %p118, %p119
      %p121 = scmp.ne.s32.totalorder %s113, %s115
      %p122 = scmp.eq.s32.totalorder %s28, 3
      %p123 = por %p121, %p122
      %p124 = scmp.ne.s32.totalorder %s115, %s116
      %p125 = scmp.eq.s32.totalorder %s28, 0
      %p126 = por %p124, %p125
      %p127 = scmp.ne.s32.totalorder %s115, %s116
      %p128 = scmp.eq.s32.totalorder %s29, 3
      %p129 = por %p127, %p128
      %p131 = scmp.ne.s32.totalorder %s116, %s130
      %p132 = scmp.eq.s32.totalorder %s29, 0
      %p133 = por %p131, %p132
      %s135 = sadd.s32 %s134, 1
      %p138 = scmp.eq.s32.totalorder %s23, 3
      %p139 = scmp.ne.s32.totalorder %s134, %s136
      %p140 = scmp.eq.s32.totalorder %s23, 0
      %p141 = por %p139, %p140
      %p142 = scmp.ne.s32.totalorder %s134, %s136
      %p143 = scmp.eq.s32.totalorder %s28, 3
      %p144 = por %p142, %p143
      %p145 = scmp.ne.s32.totalorder %s136, %s137
      %p146 = scmp.eq.s32.totalorder %s28, 0
      %p147 = por %p145, %p146
      %p148 = scmp.ne.s32.totalorder %s136, %s137
      %p149 = scmp.eq.s32.totalorder %s29, 3
      %p150 = por %p148, %p149
      %p152 = scmp.ne.s32.totalorder %s137, %s151
      %p153 = scmp.eq.s32.totalorder %s29, 0
      %p154 = por %p152, %p153
      %s156 = sadd.s32 %s155, 1
      %p159 = scmp.eq.s32.totalorder %s23, 3
      %p160 = scmp.ne.s32.totalorder %s155, %s157
      %p161 = scmp.eq.s32.totalorder %s23, 0
      %p162 = por %p160, %p161
      %p163 = scmp.ne.s32.totalorder %s155, %s157
      %p164 = scmp.eq.s32.totalorder %s28, 3
      %p165 = por %p163, %p164
      %p166 = scmp.ne.s32.totalorder %s157, %s158
      %p167 = scmp.eq.s32.totalorder %s28, 0
      %p168 = por %p166, %p167
      %p169 = scmp.ne.s32.totalorder %s157, %s158
      %p170 = scmp.eq.s32.totalorder %s29, 3
      %p171 = por %p169, %p170
      %p173 = scmp.ne.s32.totalorder %s158, %s172
      %p174 = scmp.eq.s32.totalorder %s29, 0
      %p175 = por %p173, %p174
      %s177 = sadd.s32 %s176, 1
      %p180 = scmp.eq.s32.totalorder %s23, 3
      %p181 = scmp.ne.s32.totalorder %s176, %s178
      %p182 = scmp.eq.s32.totalorder %s23, 0
      %p183 = por %p181, %p182
      %p184 = scmp.ne.s32.totalorder %s176, %s178
      %p185 = scmp.eq.s32.totalorder %s28, 3
      %p186 = por %p184, %p185
      %p187 = scmp.ne.s32.totalorder %s178, %s179
      %p188 = scmp.eq.s32.totalorder %s28, 0
      %p189 = por %p187, %p188
      %p190 = scmp.ne.s32.totalorder %s178, %s179
      %p191 = scmp.eq.s32.totalorder %s29, 3
      %p192 = por %p190, %p191
      %p194 = scmp.ne.s32.totalorder %s179, %s193
      %p195 = scmp.eq.s32.totalorder %s29, 0
      %p196 = por %p194, %p195
      %s198 = sadd.s32 %s197, 1
      %p201 = scmp.eq.s32.totalorder %s23, 3
      %p202 = scmp.ne.s32.totalorder %s197, %s199
      %p203 = scmp.eq.s32.totalorder %s23, 0
      %p204 = por %p202, %p203
      %p205 = scmp.ne.s32.totalorder %s197, %s199
      %p206 = scmp.eq.s32.totalorder %s28, 3
      %p207 = por %p205, %p206
      %p208 = scmp.ne.s32.totalorder %s199, %s200
      %p209 = scmp.eq.s32.totalorder %s28, 0
      %p210 = por %p208, %p209
      %p211 = scmp.ne.s32.totalorder %s199, %s200
      %p212 = scmp.eq.s32.totalorder %s29, 3
      %p213 = por %p211, %p212
      %p215 = scmp.ne.s32.totalorder %s200, %s214
      %p216 = scmp.eq.s32.totalorder %s29, 0
      %p217 = por %p215, %p216
      %s219 = sadd.s32 %s218, 1
      %p222 = scmp.eq.s32.totalorder %s23, 3
      %p223 = scmp.ne.s32.totalorder %s218, %s220
      %p224 = scmp.eq.s32.totalorder %s23, 0
      %p225 = por %p223, %p224
      %p226 = scmp.ne.s32.totalorder %s218, %s220
      %p227 = scmp.eq.s32.totalorder %s28, 3
      %p228 = por %p226, %p227
      %p229 = scmp.ne.s32.totalorder %s220, %s221
      %p230 = scmp.eq.s32.totalorder %s28, 0
      %p231 = por %p229, %p230
      %p232 = scmp.ne.s32.totalorder %s220, %s221
      %p233 = scmp.eq.s32.totalorder %s29, 3
      %p234 = por %p232, %p233
      %p236 = scmp.ne.s32.totalorder %s221, %s235
      %p237 = scmp.eq.s32.totalorder %s29, 0
      %p238 = por %p236, %p237
      %s240 = sadd.s32 %s239, 1
      %p243 = scmp.eq.s32.totalorder %s23, 3
      %p244 = scmp.ne.s32.totalorder %s239, %s241
      %p245 = scmp.eq.s32.totalorder %s23, 0
      %p246 = por %p244, %p245
      %p247 = scmp.ne.s32.totalorder %s239, %s241
      %p248 = scmp.eq.s32.totalorder %s28, 3
      %p249 = por %p247, %p248
      %p250 = scmp.ne.s32.totalorder %s241, %s242
      %p251 = scmp.eq.s32.totalorder %s28, 0
      %p252 = por %p250, %p251
      %p253 = scmp.ne.s32.totalorder %s241, %s242
      %p254 = scmp.eq.s32.totalorder %s29, 3
      %p255 = por %p253, %p254
      %p257 = scmp.ne.s32.totalorder %s242, %s256
      %p258 = scmp.eq.s32.totalorder %s29, 0
      %p259 = por %p257, %p258
      %s261 = sadd.s32 %s260, 1
      %p264 = scmp.eq.s32.totalorder %s23, 3
      %p265 = scmp.ne.s32.totalorder %s260, %s262
      %p266 = scmp.eq.s32.totalorder %s23, 0
      %p267 = por %p265, %p266
      %p268 = scmp.ne.s32.totalorder %s260, %s262
      %p269 = scmp.eq.s32.totalorder %s28, 3
      %p270 = por %p268, %p269
      %p271 = scmp.ne.s32.totalorder %s262, %s263
      %p272 = scmp.eq.s32.totalorder %s28, 0
      %p273 = por %p271, %p272
      %p274 = scmp.ne.s32.totalorder %s262, %s263
      %p275 = scmp.eq.s32.totalorder %s29, 3
      %p276 = por %p274, %p275
      %p278 = scmp.ne.s32.totalorder %s263, %s277
      %p279 = scmp.eq.s32.totalorder %s29, 0
      %p280 = por %p278, %p279
      %s282 = sadd.s32 %s281, 1
      %p285 = scmp.eq.s32.totalorder %s23, 3
      %p286 = scmp.ne.s32.totalorder %s281, %s283
      %p287 = scmp.eq.s32.totalorder %s23, 0
      %p288 = por %p286, %p287
      %p289 = scmp.ne.s32.totalorder %s281, %s283
      %p290 = scmp.eq.s32.totalorder %s28, 3
      %p291 = por %p289, %p290
      %p292 = scmp.ne.s32.totalorder %s283, %s284
      %p293 = scmp.eq.s32.totalorder %s28, 0
      %p294 = por %p292, %p293
      %p295 = scmp.ne.s32.totalorder %s283, %s284
      %p296 = scmp.eq.s32.totalorder %s29, 3
      %p297 = por %p295, %p296
      %p299 = scmp.ne.s32.totalorder %s284, %s298
      %p300 = scmp.eq.s32.totalorder %s29, 0
      %p301 = por %p299, %p300
      %s302 = ssub.s32 %s30, %s42
      %s303 = ssub.s32 %s31, %s38
      %s304 = sor.u32 %s302, %s303
      %p305 = scmp.eq.s32.totalorder %s304, 0
      %s307 = sadd.s32 %s306, 1
      %s308 = scalar_select %p305, %s306, %s307
      %p311 = pneg %p305
      %p312 = scmp.eq.s32.totalorder %s23, 3
      %p313 = por %p311, %p312
      %p314 = scmp.ne.s32.totalorder %s306, %s309
      %p315 = scmp.eq.s32.totalorder %s23, 0
      %p316 = por %p314, %p315
      %p317 = scmp.ne.s32.totalorder %s306, %s309
      %p318 = scmp.eq.s32.totalorder %s28, 3
      %p319 = por %p317, %p318
      %p320 = scmp.ne.s32.totalorder %s309, %s310
      %p321 = scmp.eq.s32.totalorder %s28, 0
      %p322 = por %p320, %p321
      %p323 = scmp.ne.s32.totalorder %s309, %s310
      %p324 = scmp.eq.s32.totalorder %s29, 3
      %p325 = por %p323, %p324
      %p327 = scmp.ne.s32.totalorder %s310, %s326
      %p328 = scmp.eq.s32.totalorder %s29, 0
      %p329 = por %p327, %p328
      %p330 = scmp.le.s32.totalorder 1, %s23
      %p331 = scmp.lt.s32.totalorder %s23, 5
      %p332 = pnand %p330, %p331
      %p333 = pneg %p332
      // Predicated region
      $region9: #{tpu_custom_call.1} parent=5 // pred_check
        _
      $region10: #{tpu_custom_call.1} parent=5 // pred_check_branch
        %335 = sbr.rel (%p332) target = $region12
      $region11: #{tpu_custom_call.1} parent=5 // pred_region
        %s336 = ssub.s32 %s23, 1
        // Predicated region
        $region13: #{tpu_custom_call.1} parent=11 // pred_check
          %p337 = pneg %p84
        $region14: #{tpu_custom_call.1} parent=11 // pred_check_branch
          %339 = sbr.rel (%p337) target = $region16
        $region15: #{tpu_custom_call.1} parent=11 // pred_region
          _
        $region16: #{tpu_custom_call.1} parent=11 // pred_fallthru
          _
        // Predicated region
        $region17: #{tpu_custom_call.1} parent=11 // pred_check
          %p340 = pneg %p105
        $region18: #{tpu_custom_call.1} parent=11 // pred_check_branch
          %342 = sbr.rel (%p340) target = $region20
        $region19: #{tpu_custom_call.1} parent=11 // pred_region
          _
        $region20: #{tpu_custom_call.1} parent=11 // pred_fallthru
          _
        // Predicated region
        $region21: #{tpu_custom_call.1} parent=11 // pred_check
          %p343 = pneg %p126
        $region22: #{tpu_custom_call.1} parent=11 // pred_check_branch
          %345 = sbr.rel (%p343) target = $region24
        $region23: #{tpu_custom_call.1} parent=11 // pred_region
          _
        $region24: #{tpu_custom_call.1} parent=11 // pred_fallthru
          _
        // Predicated region
        $region25: #{tpu_custom_call.1} parent=11 // pred_check
          %p346 = pneg %p147
        $region26: #{tpu_custom_call.1} parent=11 // pred_check_branch
          %348 = sbr.rel (%p346) target = $region28
        $region27: #{tpu_custom_call.1} parent=11 // pred_region
          %s350 = ssub.s32 256, 256
          %351 = vsyncadd [#allocation5], %s350
          %s352 = sshll.u32 [#allocation4], 4
          %s353 = int_to_ptr.vmem [resolvable:$true] %s352
          %358 = dma.hbm_to_vmem [thread:$0]  %s4, 256, %s353, [#allocation5], 64, 64, 4
        $region28: #{tpu_custom_call.1} parent=11 // pred_fallthru
          _
        // Predicated region
        $region29: #{tpu_custom_call.1} parent=11 // pred_check
          %p359 = pneg %p168
        $region30: #{tpu_custom_call.1} parent=11 // pred_check_branch
          %361 = sbr.rel (%p359) target = $region32
        $region31: #{tpu_custom_call.1} parent=11 // pred_region
          _
        $region32: #{tpu_custom_call.1} parent=11 // pred_fallthru
          _
        // Predicated region
        $region33: #{tpu_custom_call.1} parent=11 // pred_check
          %p362 = pneg %p189
        $region34: #{tpu_custom_call.1} parent=11 // pred_check_branch
          %364 = sbr.rel (%p362) target = $region36
        $region35: #{tpu_custom_call.1} parent=11 // pred_region
          _
        $region36: #{tpu_custom_call.1} parent=11 // pred_fallthru
          _
        // Predicated region
        $region37: #{tpu_custom_call.1} parent=11 // pred_check
          %p365 = pneg %p210
        $region38: #{tpu_custom_call.1} parent=11 // pred_check_branch
          %367 = sbr.rel (%p365) target = $region40
        $region39: #{tpu_custom_call.1} parent=11 // pred_region
          _
        $region40: #{tpu_custom_call.1} parent=11 // pred_fallthru
          _
        // Predicated region
        $region41: #{tpu_custom_call.1} parent=11 // pred_check
          %p368 = pneg %p231
        $region42: #{tpu_custom_call.1} parent=11 // pred_check_branch
          %370 = sbr.rel (%p368) target = $region44
        $region43: #{tpu_custom_call.1} parent=11 // pred_region
          %s372 = ssub.s32 256, 256
          %373 = vsyncadd [#allocation8], %s372
          %s374 = sshll.u32 [#allocation7], 4
          %s375 = int_to_ptr.vmem [resolvable:$true] %s374
          %380 = dma.hbm_to_vmem [thread:$0]  %s8, 256, %s375, [#allocation8], 64, 64, 4
        $region44: #{tpu_custom_call.1} parent=11 // pred_fallthru
          _
        // Predicated region
        $region45: #{tpu_custom_call.1} parent=11 // pred_check
          %p381 = pneg %p252
        $region46: #{tpu_custom_call.1} parent=11 // pred_check_branch
          %383 = sbr.rel (%p381) target = $region48
        $region47: #{tpu_custom_call.1} parent=11 // pred_region
          _
        $region48: #{tpu_custom_call.1} parent=11 // pred_fallthru
          _
        // Predicated region
        $region49: #{tpu_custom_call.1} parent=11 // pred_check
          %p384 = pneg %p273
        $region50: #{tpu_custom_call.1} parent=11 // pred_check_branch
          %386 = sbr.rel (%p384) target = $region52
        $region51: #{tpu_custom_call.1} parent=11 // pred_region
          _
        $region52: #{tpu_custom_call.1} parent=11 // pred_fallthru
          _
        // Predicated region
        $region53: #{tpu_custom_call.1} parent=11 // pred_check
          %p387 = pneg %p294
        $region54: #{tpu_custom_call.1} parent=11 // pred_check_branch
          %389 = sbr.rel (%p387) target = $region56
        $region55: #{tpu_custom_call.1} parent=11 // pred_region
          _
        $region56: #{tpu_custom_call.1} parent=11 // pred_fallthru
          _
      $region12: #{tpu_custom_call.1} parent=5 // pred_fallthru
        _
      %p390 = scmp.lt.s32.totalorder %s23, 4
      // Predicated region
      $region57: #{tpu_custom_call.1} parent=5 // pred_check
        %p391 = pneg %p390
      $region58: #{tpu_custom_call.1} parent=5 // pred_check_branch
        %393 = sbr.rel (%p391) target = $region60
      $region59: #{tpu_custom_call.1} parent=5 // pred_region
        // Predicated region
        $region61: #{tpu_custom_call.1} parent=59 // pred_check
          %p394 = pneg %p57
        $region62: #{tpu_custom_call.1} parent=59 // pred_check_branch
          %396 = sbr.rel (%p394) target = $region64
        $region63: #{tpu_custom_call.1} parent=59 // pred_region
          %s397 = smul.u32 2, %s31
          %p398 = scmp.lt.s32.totalorder %s30, 1
          %s399 = scalar_select %p398, %s30, 1
          %p400 = scmp.lt.s32.totalorder %s397, 3
          %s401 = scalar_select %p400, %s397, 3
          %s402 = smul.addr %s399, 4
          %s403 = sadd.s32 %s401, %s402
          %s404 = smul.addr %s403, 8
          %s405 = scalar_lea.vmem %s0, %s404
          %s406 = smul.u32 2, %s31
        $region64: #{tpu_custom_call.1} parent=59 // pred_fallthru
          _
      $region60: #{tpu_custom_call.1} parent=5 // pred_fallthru
        _
      %p407 = scmp.le.s32.totalorder 1, %s23
      %p408 = scmp.lt.s32.totalorder %s23, 5
      %p409 = pnand %p407, %p408
      %p410 = pneg %p409
      // Predicated region
      $region65: #{tpu_custom_call.1} parent=5 // pred_check
        _
      $region66: #{tpu_custom_call.1} parent=5 // pred_check_branch
        %412 = sbr.rel (%p409) target = $region68
      $region67: #{tpu_custom_call.1} parent=5 // pred_region
        %s413 = ssub.s32 %s23, 1
        // Predicated region
        $region69: #{tpu_custom_call.1} parent=67 // pred_check
          %p414 = pneg %p147
        $region70: #{tpu_custom_call.1} parent=67 // pred_check_branch
          %416 = sbr.rel (%p414) target = $region72
        $region71: #{tpu_custom_call.1} parent=67 // pred_region
          %417 = dma.done [#allocation5], 256
        $region72: #{tpu_custom_call.1} parent=67 // pred_fallthru
          _
        // Predicated region
        $region73: #{tpu_custom_call.1} parent=67 // pred_check
          %p418 = pneg %p231
        $region74: #{tpu_custom_call.1} parent=67 // pred_check_branch
          %420 = sbr.rel (%p418) target = $region76
        $region75: #{tpu_custom_call.1} parent=67 // pred_region
          %421 = dma.done [#allocation8], 256
        $region76: #{tpu_custom_call.1} parent=67 // pred_fallthru
          _
        %s422 = smul.u32 2, %s33
        %p423 = scmp.lt.s32.totalorder %s32, 1
        %s424 = scalar_select %p423, %s32, 1
        %p425 = scmp.lt.s32.totalorder %s422, 3
        %s426 = scalar_select %p425, %s422, 3
        %s427 = smul.addr %s424, 4
        %s428 = sadd.s32 %s426, %s427
        %s429 = smul.addr %s428, 8
        %s430 = scalar_lea.vmem %s0, %s429
        %p431 = pneg %p63
        %p432 = pneg %p60
        %p433 = pneg %p84
        %p434 = pneg %p81
        %p435 = pneg %p105
        %p436 = pneg %p102
        %p437 = pneg %p126
        %p438 = pneg %p123
        %p439 = pneg %p147
        %p440 = pneg %p144
        %p441 = pneg %p168
        %p442 = pneg %p165
        %p443 = pneg %p189
        %p444 = pneg %p186
        %p445 = pneg %p210
        %p446 = pneg %p207
        %p447 = pneg %p231
        %p448 = pneg %p228
        %p449 = pneg %p252
        %p450 = pneg %p249
        %p451 = pneg %p273
        %p452 = pneg %p270
        %p453 = pneg %p294
        %p454 = pneg %p291
        %p455 = pneg %p322
        %p456 = pneg %p319
        %s457 = sand.u32 %s309, 1
        %s458 = scalar_lea.sflag [#allocation6], %s457
        %s459 = sand.u32 %s309, 1
        %s460 = smul.addr %s459, 16
        %s461 = scalar_lea.vmem [#allocation9], %s460
        %s462 = smul.u32 2, %s33
        %p463 = scmp.lt.s32.totalorder %s32, 1
        %s464 = scalar_select %p463, %s32, 1
        %p465 = scmp.lt.s32.totalorder %s462, 3
        %s466 = scalar_select %p465, %s462, 3
        %s467 = smul.addr %s464, 4
        %s468 = sadd.s32 %s466, %s467
        %s469 = smul.addr %s468, 8
        %s470 = scalar_lea.vmem %s0, %s469
        %s471 = smul.u32 2, %s33
        %s472 = smul.u32 2, %s33
        %s474 = smul.u32 %s33, 16
        %v475 = vld [vmem:[%s470] sm:$0xff]
        %v476 = vld [vmem:[%s470 + $0x8] sm:$0xff]
        %v477 = vld [vmem:[%s1] sm:$0x1]
        %v478 = vld [vmem:[%s2] sm:$0x1]
        %vm479 = vcmask 261120
        %v480 = vsel %vm479, %v475, 0.0
        %481 = vadd.xlane.f32.xlu0 %v480
        %v482 = vpop.xlane.xlu0 %481
        %v483 = vsel %vm479, %v476, 0.0
        %484 = vadd.xlane.f32.xlu0 %v483
        %v485 = vpop.xlane.xlu0 %484
        %v486 = vrcp.pop 32.0
        %v487 = vmul.f32 %v482, %v486
        %v488 = vmul.f32 %v485, %v486
        %v489 = vsub.f32 %v475, %v487
        %v490 = vsub.f32 %v476, %v488
        %v491 = vmul.f32 %v489, %v489
        %v492 = vmul.f32 %v490, %v490
        %v493 = vsel %vm479, %v491, 0.0
        %494 = vadd.xlane.f32.xlu0 %v493
        %v495 = vpop.xlane.xlu0 %494
        %v496 = vsel %vm479, %v492, 0.0
        %497 = vadd.xlane.f32.xlu0 %v496
        %v498 = vpop.xlane.xlu0 %497
        %v499 = vmul.f32 %v495, %v486
        %v500 = vmul.f32 %v498, %v486
        %v501 = vadd.f32 %v499, 1e-05
        %v502 = vadd.f32 %v500, 1e-05
        %v503 = vrsqrt.pop %v501
        %v504 = vrsqrt.pop %v502
        %v505 = vmul.f32 %v489, %v503
        %v506 = vmul.f32 %v490, %v504
        %v508 = vlaneseq
        %v509 = vshrl.u32 %v508, 7
        %v510 = vsub.s32 0, %v509
        %v511 = vrot.slane %v477, %v510
        %v513 = vmul.f32 %v505, %v511
        %v514 = vmul.f32 %v506, %v511
        %v516 = vlaneseq
        %v517 = vshrl.u32 %v516, 7
        %v518 = vsub.s32 0, %v517
        %v519 = vrot.slane %v478, %v518
        %v521 = vadd.f32 %v513, %v519
        %v522 = vadd.f32 %v514, %v519
        %v523 = vpack.c.bf16 %v522, %v521
        %v524 = vld [vmem:[%s3] sm:$0xf]
        %v525 = vld [vmem:[%s3 + $0x4] sm:$0xf]
        %v526 = vld [vmem:[%s3 + $0x8] sm:$0xf]
        %v527 = vld [vmem:[%s3 + $0xc] sm:$0xf]
        %v532 = vunpack.c.l.b16 %v524
        %v533 = vunpack.c.l.b16 %v525
        %v534 = vunpack.c.l.b16 %v526
        %v535 = vunpack.c.l.b16 %v527
        %v536 = vpack.c.b16 %v533, %v532
        %v537 = vpack.c.b16 %v535, %v534
        %v541 = vsel %vm479, %v523, 0
        %543 = vmatprep.subr.bf16.mxu0 0
        %544 = vmatpush1.bf16.msra.mxu0 %v536
        %545 = vmatprep.subr.bf16.mxu0 0
        %546 = vmatpush1.bf16.msra.mxu0 %v537
        %547 = vmatprep.subr.bf16.mxu0 0
        %548 = vmatpush1.bf16.msra.mxu0 0
        %549 = vmatprep.subr.bf16.mxu0 0
        %550 = vmatpush1.bf16.msra.mxu0 0
        %551 = vmatprep.subr.bf16.mxu0 0
        %552 = vmatpush1.bf16.msra.mxu0 0
        %553 = vmatprep.subr.bf16.mxu0 0
        %554 = vmatpush1.bf16.msra.mxu0 0
        %555 = vmatprep.subr.bf16.mxu0 0
        %556 = vmatpush1.bf16.msra.mxu0 0
        %557 = vmatprep.subr.bf16.mxu0 0
        %558 = vmatpush1.bf16.msra.mxu0 0
        %559 = vmatprep.subr.bf16.mxu0 0
        %560 = vmatpush1.bf16.msra.mxu0 0
        %561 = vmatprep.subr.bf16.mxu0 0
        %562 = vmatpush1.bf16.msra.mxu0 0
        %563 = vmatprep.subr.bf16.mxu0 0
        %564 = vmatpush1.bf16.msra.mxu0 0
        %565 = vmatprep.subr.bf16.mxu0 0
        %566 = vmatpush1.bf16.msra.mxu0 0
        %567 = vmatprep.subr.bf16.mxu0 0
        %568 = vmatpush1.bf16.msra.mxu0 0
        %569 = vmatprep.subr.bf16.mxu0 0
        %570 = vmatpush1.bf16.msra.mxu0 0
        %571 = vmatprep.subr.bf16.mxu0 0
        %572 = vmatpush1.bf16.msra.mxu0 0
        %573 = vmatprep.subr.bf16.mxu0 0
        %574 = vmatpush1.bf16.msra.mxu0 0
        %575 = vmatprep.mubr.bf16.mxu0 0
        %576 = vmatmul.mubr.bf16.gmra.mrb[0].mxu0 %v541
        %v577 = vpop.f32.mrb[0].mxu0
        %v578 = vadd.f32 0.0, %v577
        %v579 = vpop.f32.mrb[0].mxu0
        %v580 = vpop.f32.mrb[0].mxu0
        %v581 = vadd.f32 0.0, %v580
        %v582 = vpop.f32.mrb[0].mxu0
        %583 = vdwg.mxu0
        %v584 = vpack.c.bf16 %v581, %v578
        %586 = vrot.lane.b32.xlu0 %v584, 96
        %v587 = vpop.permute.xlu0 %586
        %s589 = sshra.s32 %s474, 4
        %s590 = sand.u32 %s474, 15
        %s591 = smul.addr %s589, 8
        %s592 = scalar_lea.vmem [#allocation2], %s591
        %vm593 = vcmask 64512
        %594 = vst.msk [vmem:[%s592] sm:$0xff] %vm593, %v587
        %595 = vrot.lane.b32.xlu0 %v584, 64
        %v596 = vpop.permute.xlu0 %595
        %s598 = smul.addr %s589, 8
        %s599 = scalar_lea.vmem [#allocation3], %s598
        %600 = vst.msk [vmem:[%s599] sm:$0xff] %vm593, %v596
        %601 = vrot.lane.b32.xlu0 %v584, 88
        %v602 = vpop.permute.xlu0 %601
        %s604 = sadd.s32 %s589, 2
        %s605 = smul.addr %s604, 8
        %s606 = scalar_lea.vmem [#allocation2], %s605
        %607 = vst.msk [vmem:[%s606] sm:$0xff] %vm593, %v602
        %608 = vrot.lane.b32.xlu0 %v584, 56
        %v609 = vpop.permute.xlu0 %608
        %s611 = smul.addr %s604, 8
        %s612 = scalar_lea.vmem [#allocation3], %s611
        %613 = vst.msk [vmem:[%s612] sm:$0xff] %vm593, %v609
        %614 = vrot.lane.b32.xlu0 %v584, 80
        %v615 = vpop.permute.xlu0 %614
        %s617 = sadd.s32 %s589, 4
        %s618 = smul.addr %s617, 8
        %s619 = scalar_lea.vmem [#allocation2], %s618
        %620 = vst.msk [vmem:[%s619] sm:$0xff] %vm593, %v615
        %621 = vrot.lane.b32.xlu0 %v584, 48
        %v622 = vpop.permute.xlu0 %621
        %s624 = smul.addr %s617, 8
        %s625 = scalar_lea.vmem [#allocation3], %s624
        %626 = vst.msk [vmem:[%s625] sm:$0xff] %vm593, %v622
        %627 = vrot.lane.b32.xlu0 %v584, 72
        %v628 = vpop.permute.xlu0 %627
        %s630 = sadd.s32 %s589, 6
        %s631 = smul.addr %s630, 8
        %s632 = scalar_lea.vmem [#allocation2], %s631
        %633 = vst.msk [vmem:[%s632] sm:$0xff] %vm593, %v628
        %634 = vrot.lane.b32.xlu0 %v584, 40
        %v635 = vpop.permute.xlu0 %634
        %s637 = smul.addr %s630, 8
        %s638 = scalar_lea.vmem [#allocation3], %s637
        %639 = vst.msk [vmem:[%s638] sm:$0xff] %vm593, %v635
        %642 = vrot.lane.b32.xlu0 %v578, 120
        %v643 = vpop.permute.xlu0 %642
        %644 = vrot.lane.b32.xlu0 %v581, 120
        %v645 = vpop.permute.xlu0 %644
        %648 = vrot.lane.b32.xlu0 %v578, 112
        %v649 = vpop.permute.xlu0 %648
        %650 = vrot.lane.b32.xlu0 %v581, 112
        %v651 = vpop.permute.xlu0 %650
        %654 = vrot.lane.b32.xlu0 %v578, 104
        %v655 = vpop.permute.xlu0 %654
        %656 = vrot.lane.b32.xlu0 %v581, 104
        %v657 = vpop.permute.xlu0 %656
        %v660 = vpack.c.bf16 %v645, %v643
        %v661 = vpack.c.bf16 %v651, %v649
        %v662 = vpack.c.bf16 %v657, %v655
        %v663 = vlaneseq
        %v664 = vshrl.u32 %v663, 7
        %v665 = vadd.s32 %v664, 8
        %v666 = vlaneseq
        %v667 = vand.u32 %v666, 127
        %vm668 = vcmp.le.s32.totalorder %v667, %v664
        %vm669 = vcmp.le.s32.totalorder %v667, %v665
        %s670 = sadd.s32 %s33, 1
        // While loop
        $region77: #{tpu_custom_call.1} parent=67 // loop_pre_header
          _
        $region78: #{tpu_custom_call.1} parent=67 // loop_header
          %s672 = sphi 0, %s674
          %p673 = scmp.ge.s32.totalorder %s672, %s670
          %v677 = vphi -1e+30, %v947
          %v678 = vphi -1e+30, %v948
          %v679 = vphi -1e+30, %v949
          %v680 = vphi -1e+30, %v950
          %v681 = vphi -1e+30, %v951
          %v682 = vphi -1e+30, %v952
          %v683 = vphi -1e+30, %v953
          %v684 = vphi -1e+30, %v954
          %v685 = vphi 0.0, %v1035
          %v686 = vphi 0.0, %v1036
          %v687 = vphi 0.0, %v1037
          %v688 = vphi 0.0, %v1038
          %v689 = vphi 0.0, %v1039
          %v690 = vphi 0.0, %v1040
          %v691 = vphi 0.0, %v1041
          %v692 = vphi 0.0, %v1042
          %v693 = vphi 0.0, %v1231
          %v694 = vphi 0.0, %v1232
          %v695 = vphi 0.0, %v1233
          %v696 = vphi 0.0, %v1234
          %v697 = vphi 0.0, %v1235
          %v698 = vphi 0.0, %v1236
          %v699 = vphi 0.0, %v1237
          %v700 = vphi 0.0, %v1238
        $region79: #{tpu_custom_call.1} parent=67 // loop_header_branch
          %676 = sbr.rel (%p673) target = $region83
        $region80: #{tpu_custom_call.1} parent=67 // loop_body
          %s701 = smul.u32 %s672, 16
          %s702 = sshra.s32 %s701, 4
          %s703 = sand.u32 %s701, 15
          %s704 = smul.addr %s702, 8
          %s705 = scalar_lea.vmem [#allocation2], %s704
          %v706 = vld [vmem:[%s705] sm:$0xff]
          %v707 = vld [vmem:[%s705 + $0x10] sm:$0xff]
          %v708 = vld [vmem:[%s705 + $0x20] sm:$0xff]
          %v709 = vld [vmem:[%s705 + $0x30] sm:$0xff]
          %s710 = smul.addr %s702, 8
          %s711 = scalar_lea.vmem [#allocation3], %s710
          %v712 = vld [vmem:[%s711] sm:$0xff]
          %v713 = vld [vmem:[%s711 + $0x10] sm:$0xff]
          %v714 = vld [vmem:[%s711 + $0x20] sm:$0xff]
          %v715 = vld [vmem:[%s711 + $0x30] sm:$0xff]
          %v717 = vsel %vm593, %v584, 0
          %v720 = vsel %vm593, %v706, 0
          %722 = vmatprep.subr.bf16.mxu0 0
          %723 = vmatpush1.bf16.xpose.msra.mxu0 %v720
          %724 = vmatprep.subr.bf16.mxu0 0
          %725 = vmatpush1.bf16.xpose.msra.mxu0 0
          %726 = vmatprep.subr.bf16.mxu0 0
          %727 = vmatpush1.bf16.xpose.msra.mxu0 0
          %728 = vmatprep.subr.bf16.mxu0 0
          %729 = vmatpush1.bf16.xpose.msra.mxu0 0
          %730 = vmatprep.subr.bf16.mxu0 0
          %731 = vmatpush1.bf16.xpose.msra.mxu0 0
          %732 = vmatprep.subr.bf16.mxu0 0
          %733 = vmatpush1.bf16.xpose.msra.mxu0 0
          %734 = vmatprep.subr.bf16.mxu0 0
          %735 = vmatpush1.bf16.xpose.msra.mxu0 0
          %736 = vmatprep.subr.bf16.mxu0 0
          %737 = vmatpush1.bf16.xpose.msra.mxu0 0
          %738 = vmatprep.subr.bf16.mxu0 0
          %739 = vmatpush1.bf16.xpose.msra.mxu0 0
          %740 = vmatprep.subr.bf16.mxu0 0
          %741 = vmatpush1.bf16.xpose.msra.mxu0 0
          %742 = vmatprep.subr.bf16.mxu0 0
          %743 = vmatpush1.bf16.xpose.msra.mxu0 0
          %744 = vmatprep.subr.bf16.mxu0 0
          %745 = vmatpush1.bf16.xpose.msra.mxu0 0
          %746 = vmatprep.subr.bf16.mxu0 0
          %747 = vmatpush1.bf16.xpose.msra.mxu0 0
          %748 = vmatprep.subr.bf16.mxu0 0
          %749 = vmatpush1.bf16.xpose.msra.mxu0 0
          %750 = vmatprep.subr.bf16.mxu0 0
          %751 = vmatpush1.bf16.xpose.msra.mxu0 0
          %752 = vmatprep.subr.bf16.mxu0 0
          %753 = vmatpush1.bf16.xpose.msra.mxu0 0
          %754 = vmatprep.mubr.bf16.mxu0 0
          %755 = vmatmul.mubr.bf16.gmra.mrb[0].mxu0 %v717
          %v756 = vpop.f32.mrb[0].mxu0
          %v757 = vadd.f32 0.0, %v756
          %v758 = vpop.f32.mrb[0].mxu0
          %v759 = vpop.f32.mrb[0].mxu0
          %v760 = vadd.f32 0.0, %v759
          %v761 = vpop.f32.mrb[0].mxu0
          %762 = vdwg.mxu0
          %v764 = vsel %vm593, %v660, 0
          %v767 = vsel %vm593, %v707, 0
          %769 = vmatprep.subr.bf16.mxu0 0
          %770 = vmatpush1.bf16.xpose.msra.mxu0 %v767
          %771 = vmatprep.subr.bf16.mxu0 0
          %772 = vmatpush1.bf16.xpose.msra.mxu0 0
          %773 = vmatprep.subr.bf16.mxu0 0
          %774 = vmatpush1.bf16.xpose.msra.mxu0 0
          %775 = vmatprep.subr.bf16.mxu0 0
          %776 = vmatpush1.bf16.xpose.msra.mxu0 0
          %777 = vmatprep.subr.bf16.mxu0 0
          %778 = vmatpush1.bf16.xpose.msra.mxu0 0
          %779 = vmatprep.subr.bf16.mxu0 0
          %780 = vmatpush1.bf16.xpose.msra.mxu0 0
          %781 = vmatprep.subr.bf16.mxu0 0
          %782 = vmatpush1.bf16.xpose.msra.mxu0 0
          %783 = vmatprep.subr.bf16.mxu0 0
          %784 = vmatpush1.bf16.xpose.msra.mxu0 0
          %785 = vmatprep.subr.bf16.mxu0 0
          %786 = vmatpush1.bf16.xpose.msra.mxu0 0
          %787 = vmatprep.subr.bf16.mxu0 0
          %788 = vmatpush1.bf16.xpose.msra.mxu0 0
          %789 = vmatprep.subr.bf16.mxu0 0
          %790 = vmatpush1.bf16.xpose.msra.mxu0 0
          %791 = vmatprep.subr.bf16.mxu0 0
          %792 = vmatpush1.bf16.xpose.msra.mxu0 0
          %793 = vmatprep.subr.bf16.mxu0 0
          %794 = vmatpush1.bf16.xpose.msra.mxu0 0
          %795 = vmatprep.subr.bf16.mxu0 0
          %796 = vmatpush1.bf16.xpose.msra.mxu0 0
          %797 = vmatprep.subr.bf16.mxu0 0
          %798 = vmatpush1.bf16.xpose.msra.mxu0 0
          %799 = vmatprep.subr.bf16.mxu0 0
          %800 = vmatpush1.bf16.xpose.msra.mxu0 0
          %801 = vmatprep.mubr.bf16.mxu0 0
          %802 = vmatmul.mubr.bf16.gmra.mrb[0].mxu0 %v764
          %v803 = vpop.f32.mrb[0].mxu0
          %v804 = vadd.f32 0.0, %v803
          %v805 = vpop.f32.mrb[0].mxu0
          %v806 = vpop.f32.mrb[0].mxu0
          %v807 = vadd.f32 0.0, %v806
          %v808 = vpop.f32.mrb[0].mxu0
          %809 = vdwg.mxu0
          %v811 = vsel %vm593, %v661, 0
          %v814 = vsel %vm593, %v708, 0
          %816 = vmatprep.subr.bf16.mxu0 0
          %817 = vmatpush1.bf16.xpose.msra.mxu0 %v814
          %818 = vmatprep.subr.bf16.mxu0 0
          %819 = vmatpush1.bf16.xpose.msra.mxu0 0
          %820 = vmatprep.subr.bf16.mxu0 0
          %821 = vmatpush1.bf16.xpose.msra.mxu0 0
          %822 = vmatprep.subr.bf16.mxu0 0
          %823 = vmatpush1.bf16.xpose.msra.mxu0 0
          %824 = vmatprep.subr.bf16.mxu0 0
          %825 = vmatpush1.bf16.xpose.msra.mxu0 0
          %826 = vmatprep.subr.bf16.mxu0 0
          %827 = vmatpush1.bf16.xpose.msra.mxu0 0
          %828 = vmatprep.subr.bf16.mxu0 0
          %829 = vmatpush1.bf16.xpose.msra.mxu0 0
          %830 = vmatprep.subr.bf16.mxu0 0
          %831 = vmatpush1.bf16.xpose.msra.mxu0 0
          %832 = vmatprep.subr.bf16.mxu0 0
          %833 = vmatpush1.bf16.xpose.msra.mxu0 0
          %834 = vmatprep.subr.bf16.mxu0 0
          %835 = vmatpush1.bf16.xpose.msra.mxu0 0
          %836 = vmatprep.subr.bf16.mxu0 0
          %837 = vmatpush1.bf16.xpose.msra.mxu0 0
          %838 = vmatprep.subr.bf16.mxu0 0
          %839 = vmatpush1.bf16.xpose.msra.mxu0 0
          %840 = vmatprep.subr.bf16.mxu0 0
          %841 = vmatpush1.bf16.xpose.msra.mxu0 0
          %842 = vmatprep.subr.bf16.mxu0 0
          %843 = vmatpush1.bf16.xpose.msra.mxu0 0
          %844 = vmatprep.subr.bf16.mxu0 0
          %845 = vmatpush1.bf16.xpose.msra.mxu0 0
          %846 = vmatprep.subr.bf16.mxu0 0
          %847 = vmatpush1.bf16.xpose.msra.mxu0 0
          %848 = vmatprep.mubr.bf16.mxu0 0
          %849 = vmatmul.mubr.bf16.gmra.mrb[0].mxu0 %v811
          %v850 = vpop.f32.mrb[0].mxu0
          %v851 = vadd.f32 0.0, %v850
          %v852 = vpop.f32.mrb[0].mxu0
          %v853 = vpop.f32.mrb[0].mxu0
          %v854 = vadd.f32 0.0, %v853
          %v855 = vpop.f32.mrb[0].mxu0
          %856 = vdwg.mxu0
          %v858 = vsel %vm593, %v662, 0
          %v861 = vsel %vm593, %v709, 0
          %863 = vmatprep.subr.bf16.mxu0 0
          %864 = vmatpush1.bf16.xpose.msra.mxu0 %v861
          %865 = vmatprep.subr.bf16.mxu0 0
          %866 = vmatpush1.bf16.xpose.msra.mxu0 0
          %867 = vmatprep.subr.bf16.mxu0 0
          %868 = vmatpush1.bf16.xpose.msra.mxu0 0
          %869 = vmatprep.subr.bf16.mxu0 0
          %870 = vmatpush1.bf16.xpose.msra.mxu0 0
          %871 = vmatprep.subr.bf16.mxu0 0
          %872 = vmatpush1.bf16.xpose.msra.mxu0 0
          %873 = vmatprep.subr.bf16.mxu0 0
          %874 = vmatpush1.bf16.xpose.msra.mxu0 0
          %875 = vmatprep.subr.bf16.mxu0 0
          %876 = vmatpush1.bf16.xpose.msra.mxu0 0
          %877 = vmatprep.subr.bf16.mxu0 0
          %878 = vmatpush1.bf16.xpose.msra.mxu0 0
          %879 = vmatprep.subr.bf16.mxu0 0
          %880 = vmatpush1.bf16.xpose.msra.mxu0 0
          %881 = vmatprep.subr.bf16.mxu0 0
          %882 = vmatpush1.bf16.xpose.msra.mxu0 0
          %883 = vmatprep.subr.bf16.mxu0 0
          %884 = vmatpush1.bf16.xpose.msra.mxu0 0
          %885 = vmatprep.subr.bf16.mxu0 0
          %886 = vmatpush1.bf16.xpose.msra.mxu0 0
          %887 = vmatprep.subr.bf16.mxu0 0
          %888 = vmatpush1.bf16.xpose.msra.mxu0 0
          %889 = vmatprep.subr.bf16.mxu0 0
          %890 = vmatpush1.bf16.xpose.msra.mxu0 0
          %891 = vmatprep.subr.bf16.mxu0 0
          %892 = vmatpush1.bf16.xpose.msra.mxu0 0
          %893 = vmatprep.subr.bf16.mxu0 0
          %894 = vmatpush1.bf16.xpose.msra.mxu0 0
          %895 = vmatprep.mubr.bf16.mxu0 0
          %896 = vmatmul.mubr.bf16.gmra.mrb[0].mxu0 %v858
          %v897 = vpop.f32.mrb[0].mxu0
          %v898 = vadd.f32 0.0, %v897
          %v899 = vpop.f32.mrb[0].mxu0
          %v900 = vpop.f32.mrb[0].mxu0
          %v901 = vadd.f32 0.0, %v900
          %v902 = vpop.f32.mrb[0].mxu0
          %903 = vdwg.mxu0
          %p904 = scmp.lt.s32.totalorder %s672, %s33
          %s905 = scalar_select %p904, 1, 0
          %v906 = vstv %s905
          %vm907 = vcmp.eq.s32.totalorder %v906, 1
          %vm908 = vmor %vm668, %vm907
          %vm909 = vmor %vm669, %vm907
          %v910 = vsel %vm908, 1, 0
          %v911 = vsel %vm909, 1, 0
          %vm912 = vcmp.eq.s32.totalorder %v910, 1
          %vm913 = vcmp.eq.s32.totalorder %v911, 1
          %v914 = vsel %vm912, %v757, -1e+30
          %v915 = vsel %vm913, %v760, -1e+30
          %v916 = vsel %vm912, %v804, -1e+30
          %v917 = vsel %vm913, %v807, -1e+30
          %v918 = vsel %vm912, %v851, -1e+30
          %v919 = vsel %vm913, %v854, -1e+30
          %v920 = vsel %vm912, %v898, -1e+30
          %v921 = vsel %vm913, %v901, -1e+30
          %vm922 = vcmask 130048
          %v923 = vsel %vm922, %v914, -inf
          %924 = vmax.xlane.f32.xlu0 %v923
          %v925 = vpop.xlane.xlu0 %924
          %v926 = vsel %vm922, %v915, -inf
          %927 = vmax.xlane.f32.xlu0 %v926
          %v928 = vpop.xlane.xlu0 %927
          %v929 = vsel %vm922, %v916, -inf
          %930 = vmax.xlane.f32.xlu0 %v929
          %v931 = vpop.xlane.xlu0 %930
          %v932 = vsel %vm922, %v917, -inf
          %933 = vmax.xlane.f32.xlu0 %v932
          %v934 = vpop.xlane.xlu0 %933
          %v935 = vsel %vm922, %v918, -inf
          %936 = vmax.xlane.f32.xlu0 %v935
          %v937 = vpop.xlane.xlu0 %936
          %v938 = vsel %vm922, %v919, -inf
          %939 = vmax.xlane.f32.xlu0 %v938
          %v940 = vpop.xlane.xlu0 %939
          %v941 = vsel %vm922, %v920, -inf
          %942 = vmax.xlane.f32.xlu0 %v941
          %v943 = vpop.xlane.xlu0 %942
          %v944 = vsel %vm922, %v921, -inf
          %945 = vmax.xlane.f32.xlu0 %v944
          %v946 = vpop.xlane.xlu0 %945
          %v947 = vmax.f32 %v677, %v925
          %v948 = vmax.f32 %v678, %v928
          %v949 = vmax.f32 %v679, %v931
          %v950 = vmax.f32 %v680, %v934
          %v951 = vmax.f32 %v681, %v937
          %v952 = vmax.f32 %v682, %v940
          %v953 = vmax.f32 %v683, %v943
          %v954 = vmax.f32 %v684, %v946
          %v955 = vsub.f32 %v677, %v947
          %v956 = vsub.f32 %v678, %v948
          %v957 = vsub.f32 %v679, %v949
          %v958 = vsub.f32 %v680, %v950
          %v959 = vsub.f32 %v681, %v951
          %v960 = vsub.f32 %v682, %v952
          %v961 = vsub.f32 %v683, %v953
          %v962 = vsub.f32 %v684, %v954
          %v963 = vmul.f32 %v955, 1.442695
          %v964 = vpow.pop %v963
          %v965 = vmul.f32 %v956, 1.442695
          %v966 = vpow.pop %v965
          %v967 = vmul.f32 %v957, 1.442695
          %v968 = vpow.pop %v967
          %v969 = vmul.f32 %v958, 1.442695
          %v970 = vpow.pop %v969
          %v971 = vmul.f32 %v959, 1.442695
          %v972 = vpow.pop %v971
          %v973 = vmul.f32 %v960, 1.442695
          %v974 = vpow.pop %v973
          %v975 = vmul.f32 %v961, 1.442695
          %v976 = vpow.pop %v975
          %v977 = vmul.f32 %v962, 1.442695
          %v978 = vpow.pop %v977
          %v979 = vsub.f32 %v914, %v947
          %v980 = vsub.f32 %v915, %v948
          %v981 = vsub.f32 %v916, %v949
          %v982 = vsub.f32 %v917, %v950
          %v983 = vsub.f32 %v918, %v951
          %v984 = vsub.f32 %v919, %v952
          %v985 = vsub.f32 %v920, %v953
          %v986 = vsub.f32 %v921, %v954
          %v987 = vmul.f32 %v979, 1.442695
          %v988 = vpow.pop %v987
          %v989 = vmul.f32 %v980, 1.442695
          %v990 = vpow.pop %v989
          %v991 = vmul.f32 %v981, 1.442695
          %v992 = vpow.pop %v991
          %v993 = vmul.f32 %v982, 1.442695
          %v994 = vpow.pop %v993
          %v995 = vmul.f32 %v983, 1.442695
          %v996 = vpow.pop %v995
          %v997 = vmul.f32 %v984, 1.442695
          %v998 = vpow.pop %v997
          %v999 = vmul.f32 %v985, 1.442695
          %v1000 = vpow.pop %v999
          %v1001 = vmul.f32 %v986, 1.442695
          %v1002 = vpow.pop %v1001
          %v1003 = vmul.f32 %v964, %v685
          %v1004 = vmul.f32 %v966, %v686
          %v1005 = vmul.f32 %v968, %v687
          %v1006 = vmul.f32 %v970, %v688
          %v1007 = vmul.f32 %v972, %v689
          %v1008 = vmul.f32 %v974, %v690
          %v1009 = vmul.f32 %v976, %v691
          %v1010 = vmul.f32 %v978, %v692
          %v1011 = vsel %vm922, %v988, 0.0
          %1012 = vadd.xlane.f32.xlu0 %v1011
          %v1013 = vpop.xlane.xlu0 %1012
          %v1014 = vsel %vm922, %v990, 0.0
          %1015 = vadd.xlane.f32.xlu0 %v1014
          %v1016 = vpop.xlane.xlu0 %1015
          %v1017 = vsel %vm922, %v992, 0.0
          %1018 = vadd.xlane.f32.xlu0 %v1017
          %v1019 = vpop.xlane.xlu0 %1018
          %v1020 = vsel %vm922, %v994, 0.0
          %1021 = vadd.xlane.f32.xlu0 %v1020
          %v1022 = vpop.xlane.xlu0 %1021
          %v1023 = vsel %vm922, %v996, 0.0
          %1024 = vadd.xlane.f32.xlu0 %v1023
          %v1025 = vpop.xlane.xlu0 %1024
          %v1026 = vsel %vm922, %v998, 0.0
          %1027 = vadd.xlane.f32.xlu0 %v1026
          %v1028 = vpop.xlane.xlu0 %1027
          %v1029 = vsel %vm922, %v1000, 0.0
          %1030 = vadd.xlane.f32.xlu0 %v1029
          %v1031 = vpop.xlane.xlu0 %1030
          %v1032 = vsel %vm922, %v1002, 0.0
          %1033 = vadd.xlane.f32.xlu0 %v1032
          %v1034 = vpop.xlane.xlu0 %1033
          %v1035 = vadd.f32 %v1003, %v1013
          %v1036 = vadd.f32 %v1004, %v1016
          %v1037 = vadd.f32 %v1005, %v1019
          %v1038 = vadd.f32 %v1006, %v1022
          %v1039 = vadd.f32 %v1007, %v1025
          %v1040 = vadd.f32 %v1008, %v1028
          %v1041 = vadd.f32 %v1009, %v1031
          %v1042 = vadd.f32 %v1010, %v1034
          %v1043 = vmul.f32 %v964, %v693
          %v1044 = vmul.f32 %v966, %v694
          %v1045 = vmul.f32 %v968, %v695
          %v1046 = vmul.f32 %v970, %v696
          %v1047 = vmul.f32 %v972, %v697
          %v1048 = vmul.f32 %v974, %v698
          %v1049 = vmul.f32 %v976, %v699
          %v1050 = vmul.f32 %v978, %v700
          %v1051 = vpack.c.bf16 %v990, %v988
          %v1052 = vpack.c.bf16 %v994, %v992
          %v1053 = vpack.c.bf16 %v998, %v996
          %v1054 = vpack.c.bf16 %v1002, %v1000
          %v1056 = vsel %vm922, %v1051, 0
          %1058 = vmatprep.subr.bf16.mxu0 0
          %1059 = vmatpush1.bf16.msra.mxu0 %v712
          %1060 = vmatprep.subr.bf16.mxu0 0
          %1061 = vmatpush1.bf16.msra.mxu0 0
          %1062 = vmatprep.subr.bf16.mxu0 0
          %1063 = vmatpush1.bf16.msra.mxu0 0
          %1064 = vmatprep.subr.bf16.mxu0 0
          %1065 = vmatpush1.bf16.msra.mxu0 0
          %1066 = vmatprep.subr.bf16.mxu0 0
          %1067 = vmatpush1.bf16.msra.mxu0 0
          %1068 = vmatprep.subr.bf16.mxu0 0
          %1069 = vmatpush1.bf16.msra.mxu0 0
          %1070 = vmatprep.subr.bf16.mxu0 0
          %1071 = vmatpush1.bf16.msra.mxu0 0
          %1072 = vmatprep.subr.bf16.mxu0 0
          %1073 = vmatpush1.bf16.msra.mxu0 0
          %1074 = vmatprep.subr.bf16.mxu0 0
          %1075 = vmatpush1.bf16.msra.mxu0 0
          %1076 = vmatprep.subr.bf16.mxu0 0
          %1077 = vmatpush1.bf16.msra.mxu0 0
          %1078 = vmatprep.subr.bf16.mxu0 0
          %1079 = vmatpush1.bf16.msra.mxu0 0
          %1080 = vmatprep.subr.bf16.mxu0 0
          %1081 = vmatpush1.bf16.msra.mxu0 0
          %1082 = vmatprep.subr.bf16.mxu0 0
          %1083 = vmatpush1.bf16.msra.mxu0 0
          %1084 = vmatprep.subr.bf16.mxu0 0
          %1085 = vmatpush1.bf16.msra.mxu0 0
          %1086 = vmatprep.subr.bf16.mxu0 0
          %1087 = vmatpush1.bf16.msra.mxu0 0
          %1088 = vmatprep.subr.bf16.mxu0 0
          %1089 = vmatpush1.bf16.msra.mxu0 0
          %1090 = vmatprep.mubr.bf16.mxu0 0
          %1091 = vmatmul.mubr.bf16.gmra.mrb[0].mxu0 %v1056
          %v1092 = vpop.f32.mrb[0].mxu0
          %v1093 = vadd.f32 0.0, %v1092
          %v1094 = vpop.f32.mrb[0].mxu0
          %v1095 = vpop.f32.mrb[0].mxu0
          %v1096 = vadd.f32 0.0, %v1095
          %v1097 = vpop.f32.mrb[0].mxu0
          %1098 = vdwg.mxu0
          %v1100 = vsel %vm922, %v1052, 0
          %1102 = vmatprep.subr.bf16.mxu0 0
          %1103 = vmatpush1.bf16.msra.mxu0 %v713
          %1104 = vmatprep.subr.bf16.mxu0 0
          %1105 = vmatpush1.bf16.msra.mxu0 0
          %1106 = vmatprep.subr.bf16.mxu0 0
          %1107 = vmatpush1.bf16.msra.mxu0 0
          %1108 = vmatprep.subr.bf16.mxu0 0
          %1109 = vmatpush1.bf16.msra.mxu0 0
          %1110 = vmatprep.subr.bf16.mxu0 0
          %1111 = vmatpush1.bf16.msra.mxu0 0
          %1112 = vmatprep.subr.bf16.mxu0 0
          %1113 = vmatpush1.bf16.msra.mxu0 0
          %1114 = vmatprep.subr.bf16.mxu0 0
          %1115 = vmatpush1.bf16.msra.mxu0 0
          %1116 = vmatprep.subr.bf16.mxu0 0
          %1117 = vmatpush1.bf16.msra.mxu0 0
          %1118 = vmatprep.subr.bf16.mxu0 0
          %1119 = vmatpush1.bf16.msra.mxu0 0
          %1120 = vmatprep.subr.bf16.mxu0 0
          %1121 = vmatpush1.bf16.msra.mxu0 0
          %1122 = vmatprep.subr.bf16.mxu0 0
          %1123 = vmatpush1.bf16.msra.mxu0 0
          %1124 = vmatprep.subr.bf16.mxu0 0
          %1125 = vmatpush1.bf16.msra.mxu0 0
          %1126 = vmatprep.subr.bf16.mxu0 0
          %1127 = vmatpush1.bf16.msra.mxu0 0
          %1128 = vmatprep.subr.bf16.mxu0 0
          %1129 = vmatpush1.bf16.msra.mxu0 0
          %1130 = vmatprep.subr.bf16.mxu0 0
          %1131 = vmatpush1.bf16.msra.mxu0 0
          %1132 = vmatprep.subr.bf16.mxu0 0
          %1133 = vmatpush1.bf16.msra.mxu0 0
          %1134 = vmatprep.mubr.bf16.mxu0 0
          %1135 = vmatmul.mubr.bf16.gmra.mrb[0].mxu0 %v1100
          %v1136 = vpop.f32.mrb[0].mxu0
          %v1137 = vadd.f32 0.0, %v1136
          %v1138 = vpop.f32.mrb[0].mxu0
          %v1139 = vpop.f32.mrb[0].mxu0
          %v1140 = vadd.f32 0.0, %v1139
          %v1141 = vpop.f32.mrb[0].mxu0
          %1142 = vdwg.mxu0
          %v1144 = vsel %vm922, %v1053, 0
          %1146 = vmatprep.subr.bf16.mxu0 0
          %1147 = vmatpush1.bf16.msra.mxu0 %v714
          %1148 = vmatprep.subr.bf16.mxu0 0
          %1149 = vmatpush1.bf16.msra.mxu0 0
          %1150 = vmatprep.subr.bf16.mxu0 0
          %1151 = vmatpush1.bf16.msra.mxu0 0
          %1152 = vmatprep.subr.bf16.mxu0 0
          %1153 = vmatpush1.bf16.msra.mxu0 0
          %1154 = vmatprep.subr.bf16.mxu0 0
          %1155 = vmatpush1.bf16.msra.mxu0 0
          %1156 = vmatprep.subr.bf16.mxu0 0
          %1157 = vmatpush1.bf16.msra.mxu0 0
          %1158 = vmatprep.subr.bf16.mxu0 0
          %1159 = vmatpush1.bf16.msra.mxu0 0
          %1160 = vmatprep.subr.bf16.mxu0 0
          %1161 = vmatpush1.bf16.msra.mxu0 0
          %1162 = vmatprep.subr.bf16.mxu0 0
          %1163 = vmatpush1.bf16.msra.mxu0 0
          %1164 = vmatprep.subr.bf16.mxu0 0
          %1165 = vmatpush1.bf16.msra.mxu0 0
          %1166 = vmatprep.subr.bf16.mxu0 0
          %1167 = vmatpush1.bf16.msra.mxu0 0
          %1168 = vmatprep.subr.bf16.mxu0 0
          %1169 = vmatpush1.bf16.msra.mxu0 0
          %1170 = vmatprep.subr.bf16.mxu0 0
          %1171 = vmatpush1.bf16.msra.mxu0 0
          %1172 = vmatprep.subr.bf16.mxu0 0
          %1173 = vmatpush1.bf16.msra.mxu0 0
          %1174 = vmatprep.subr.bf16.mxu0 0
          %1175 = vmatpush1.bf16.msra.mxu0 0
          %1176 = vmatprep.subr.bf16.mxu0 0
          %1177 = vmatpush1.bf16.msra.mxu0 0
          %1178 = vmatprep.mubr.bf16.mxu0 0
          %1179 = vmatmul.mubr.bf16.gmra.mrb[0].mxu0 %v1144
          %v1180 = vpop.f32.mrb[0].mxu0
          %v1181 = vadd.f32 0.0, %v1180
          %v1182 = vpop.f32.mrb[0].mxu0
          %v1183 = vpop.f32.mrb[0].mxu0
          %v1184 = vadd.f32 0.0, %v1183
          %v1185 = vpop.f32.mrb[0].mxu0
          %1186 = vdwg.mxu0
          %v1188 = vsel %vm922, %v1054, 0
          %1190 = vmatprep.subr.bf16.mxu0 0
          %1191 = vmatpush1.bf16.msra.mxu0 %v715
          %1192 = vmatprep.subr.bf16.mxu0 0
          %1193 = vmatpush1.bf16.msra.mxu0 0
          %1194 = vmatprep.subr.bf16.mxu0 0
          %1195 = vmatpush1.bf16.msra.mxu0 0
          %1196 = vmatprep.subr.bf16.mxu0 0
          %1197 = vmatpush1.bf16.msra.mxu0 0
          %1198 = vmatprep.subr.bf16.mxu0 0
          %1199 = vmatpush1.bf16.msra.mxu0 0
          %1200 = vmatprep.subr.bf16.mxu0 0
          %1201 = vmatpush1.bf16.msra.mxu0 0
          %1202 = vmatprep.subr.bf16.mxu0 0
          %1203 = vmatpush1.bf16.msra.mxu0 0
          %1204 = vmatprep.subr.bf16.mxu0 0
          %1205 = vmatpush1.bf16.msra.mxu0 0
          %1206 = vmatprep.subr.bf16.mxu0 0
          %1207 = vmatpush1.bf16.msra.mxu0 0
          %1208 = vmatprep.subr.bf16.mxu0 0
          %1209 = vmatpush1.bf16.msra.mxu0 0
          %1210 = vmatprep.subr.bf16.mxu0 0
          %1211 = vmatpush1.bf16.msra.mxu0 0
          %1212 = vmatprep.subr.bf16.mxu0 0
          %1213 = vmatpush1.bf16.msra.mxu0 0
          %1214 = vmatprep.subr.bf16.mxu0 0
          %1215 = vmatpush1.bf16.msra.mxu0 0
          %1216 = vmatprep.subr.bf16.mxu0 0
          %1217 = vmatpush1.bf16.msra.mxu0 0
          %1218 = vmatprep.subr.bf16.mxu0 0
          %1219 = vmatpush1.bf16.msra.mxu0 0
          %1220 = vmatprep.subr.bf16.mxu0 0
          %1221 = vmatpush1.bf16.msra.mxu0 0
          %1222 = vmatprep.mubr.bf16.mxu0 0
          %1223 = vmatmul.mubr.bf16.gmra.mrb[0].mxu0 %v1188
          %v1224 = vpop.f32.mrb[0].mxu0
          %v1225 = vadd.f32 0.0, %v1224
          %v1226 = vpop.f32.mrb[0].mxu0
          %v1227 = vpop.f32.mrb[0].mxu0
          %v1228 = vadd.f32 0.0, %v1227
          %v1229 = vpop.f32.mrb[0].mxu0
          %1230 = vdwg.mxu0
          %v1231 = vadd.f32 %v1043, %v1093
          %v1232 = vadd.f32 %v1044, %v1096
          %v1233 = vadd.f32 %v1045, %v1137
          %v1234 = vadd.f32 %v1046, %v1140
          %v1235 = vadd.f32 %v1047, %v1181
          %v1236 = vadd.f32 %v1048, %v1184
          %v1237 = vadd.f32 %v1049, %v1225
          %v1238 = vadd.f32 %v1050, %v1228
        $region81: #{tpu_custom_call.1} parent=67 // loop_footer
          %s674 = sadd.s32 %s672, 1
        $region82: #{tpu_custom_call.1} parent=67 // loop_footer_branch
          %671 = sbr.rel target = $region78
        $region83: #{tpu_custom_call.1} parent=67 // loop_exit
          _
        %v1239 = vrcp.pop %v685
        %v1240 = vrcp.pop %v686
        %v1241 = vrcp.pop %v687
        %v1242 = vrcp.pop %v688
        %v1243 = vrcp.pop %v689
        %v1244 = vrcp.pop %v690
        %v1245 = vrcp.pop %v691
        %v1246 = vrcp.pop %v692
        %v1247 = vmul.f32 %v693, %v1239
        %v1248 = vmul.f32 %v694, %v1240
        %v1249 = vmul.f32 %v695, %v1241
        %v1250 = vmul.f32 %v696, %v1242
        %v1251 = vmul.f32 %v697, %v1243
        %v1252 = vmul.f32 %v698, %v1244
        %v1253 = vmul.f32 %v699, %v1245
        %v1254 = vmul.f32 %v700, %v1246
        %1257 = vrot.lane.b32.xlu0 %v1249, 8
        %v1258 = vpop.permute.xlu0 %1257
        %1259 = vrot.lane.b32.xlu0 %v1250, 8
        %v1260 = vpop.permute.xlu0 %1259
        %1265 = vrot.lane.b32.xlu0 %v1251, 16
        %v1266 = vpop.permute.xlu0 %1265
        %1267 = vrot.lane.b32.xlu0 %v1252, 16
        %v1268 = vpop.permute.xlu0 %1267
        %1273 = vrot.lane.b32.xlu0 %v1253, 24
        %v1274 = vpop.permute.xlu0 %1273
        %1275 = vrot.lane.b32.xlu0 %v1254, 24
        %v1276 = vpop.permute.xlu0 %1275
        %v1279 = vsel %vm593, %v1247, %v1258
        %v1280 = vsel %vm593, %v1248, %v1260
        %vm1281 = vcmask 130048
        %v1282 = vsel %vm1281, %v1279, %v1266
        %v1283 = vsel %vm1281, %v1280, %v1268
        %vm1284 = vcmask 195584
        %v1285 = vsel %vm1284, %v1282, %v1274
        %v1286 = vsel %vm1284, %v1283, %v1276
        %v1287 = vpack.c.bf16 %v1286, %v1285
        %v1288 = vld [vmem:[#allocation4] sm:$0xf]
        %v1289 = vld [vmem:[#allocation4 + $0x4] sm:$0xf]
        %v1290 = vld [vmem:[#allocation4 + $0x8] sm:$0xf]
        %v1291 = vld [vmem:[#allocation4 + $0xc] sm:$0xf]
        %v1292 = vld [vmem:[%s5] sm:$0x1]
        %v1294 = vlaneseq
        %v1295 = vshrl.u32 %v1294, 7
        %v1296 = vsub.s32 0, %v1295
        %v1297 = vrot.slane %v1292, %v1296
        %v1303 = vunpack.c.l.b16 %v1288
        %v1304 = vunpack.c.l.b16 %v1289
        %v1305 = vunpack.c.l.b16 %v1290
        %v1306 = vunpack.c.l.b16 %v1291
        %v1307 = vpack.c.b16 %v1304, %v1303
        %v1308 = vpack.c.b16 %v1306, %v1305
        %v1312 = vsel %vm479, %v1287, 0
        %1314 = vmatprep.subr.bf16.mxu0 0
        %1315 = vmatpush1.bf16.msra.mxu0 %v1307
        %1316 = vmatprep.subr.bf16.mxu0 0
        %1317 = vmatpush1.bf16.msra.mxu0 %v1308
        %1318 = vmatprep.subr.bf16.mxu0 0
        %1319 = vmatpush1.bf16.msra.mxu0 0
        %1320 = vmatprep.subr.bf16.mxu0 0
        %1321 = vmatpush1.bf16.msra.mxu0 0
        %1322 = vmatprep.subr.bf16.mxu0 0
        %1323 = vmatpush1.bf16.msra.mxu0 0
        %1324 = vmatprep.subr.bf16.mxu0 0
        %1325 = vmatpush1.bf16.msra.mxu0 0
        %1326 = vmatprep.subr.bf16.mxu0 0
        %1327 = vmatpush1.bf16.msra.mxu0 0
        %1328 = vmatprep.subr.bf16.mxu0 0
        %1329 = vmatpush1.bf16.msra.mxu0 0
        %1330 = vmatprep.subr.bf16.mxu0 0
        %1331 = vmatpush1.bf16.msra.mxu0 0
        %1332 = vmatprep.subr.bf16.mxu0 0
        %1333 = vmatpush1.bf16.msra.mxu0 0
        %1334 = vmatprep.subr.bf16.mxu0 0
        %1335 = vmatpush1.bf16.msra.mxu0 0
        %1336 = vmatprep.subr.bf16.mxu0 0
        %1337 = vmatpush1.bf16.msra.mxu0 0
        %1338 = vmatprep.subr.bf16.mxu0 0
        %1339 = vmatpush1.bf16.msra.mxu0 0
        %1340 = vmatprep.subr.bf16.mxu0 0
        %1341 = vmatpush1.bf16.msra.mxu0 0
        %1342 = vmatprep.subr.bf16.mxu0 0
        %1343 = vmatpush1.bf16.msra.mxu0 0
        %1344 = vmatprep.subr.bf16.mxu0 0
        %1345 = vmatpush1.bf16.msra.mxu0 0
        %1346 = vmatprep.mubr.bf16.mxu0 0
        %1347 = vmatmul.mubr.bf16.gmra.mrb[0].mxu0 %v1312
        %v1348 = vpop.f32.mrb[0].mxu0
        %v1349 = vadd.f32 %v1297, %v1348
        %v1350 = vpop.f32.mrb[0].mxu0
        %v1351 = vpop.f32.mrb[0].mxu0
        %v1352 = vadd.f32 %v1297, %v1351
        %v1353 = vpop.f32.mrb[0].mxu0
        %1354 = vdwg.mxu0
        %v1355 = vadd.f32 %v475, %v1349
        %v1356 = vadd.f32 %v476, %v1352
        %v1357 = vld [vmem:[%s6] sm:$0x1]
        %v1358 = vld [vmem:[%s7] sm:$0x1]
        %v1359 = vsel %vm479, %v1355, 0.0
        %1360 = vadd.xlane.f32.xlu0 %v1359
        %v1361 = vpop.xlane.xlu0 %1360
        %v1362 = vsel %vm479, %v1356, 0.0
        %1363 = vadd.xlane.f32.xlu0 %v1362
        %v1364 = vpop.xlane.xlu0 %1363
        %v1365 = vmul.f32 %v1361, %v486
        %v1366 = vmul.f32 %v1364, %v486
        %v1367 = vsub.f32 %v1355, %v1365
        %v1368 = vsub.f32 %v1356, %v1366
        %v1369 = vmul.f32 %v1367, %v1367
        %v1370 = vmul.f32 %v1368, %v1368
        %v1371 = vsel %vm479, %v1369, 0.0
        %1372 = vadd.xlane.f32.xlu0 %v1371
        %v1373 = vpop.xlane.xlu0 %1372
        %v1374 = vsel %vm479, %v1370, 0.0
        %1375 = vadd.xlane.f32.xlu0 %v1374
        %v1376 = vpop.xlane.xlu0 %1375
        %v1377 = vmul.f32 %v1373, %v486
        %v1378 = vmul.f32 %v1376, %v486
        %v1379 = vadd.f32 %v1377, 1e-05
        %v1380 = vadd.f32 %v1378, 1e-05
        %v1381 = vrsqrt.pop %v1379
        %v1382 = vrsqrt.pop %v1380
        %v1383 = vmul.f32 %v1367, %v1381
        %v1384 = vmul.f32 %v1368, %v1382
        %v1386 = vlaneseq
        %v1387 = vshrl.u32 %v1386, 7
        %v1388 = vsub.s32 0, %v1387
        %v1389 = vrot.slane %v1357, %v1388
        %v1391 = vmul.f32 %v1383, %v1389
        %v1392 = vmul.f32 %v1384, %v1389
        %v1394 = vlaneseq
        %v1395 = vshrl.u32 %v1394, 7
        %v1396 = vsub.s32 0, %v1395
        %v1397 = vrot.slane %v1358, %v1396
        %v1399 = vadd.f32 %v1391, %v1397
        %v1400 = vadd.f32 %v1392, %v1397
        %v1401 = vpack.c.bf16 %v1400, %v1399
        %v1402 = vld [vmem:[#allocation7] sm:$0xf]
        %v1403 = vld [vmem:[#allocation7 + $0x4] sm:$0xf]
        %v1404 = vld [vmem:[#allocation7 + $0x8] sm:$0xf]
        %v1405 = vld [vmem:[#allocation7 + $0xc] sm:$0xf]
        %v1406 = vld [vmem:[%s9] sm:$0x1]
        %v1408 = vlaneseq
        %v1409 = vshrl.u32 %v1408, 7
        %v1410 = vsub.s32 0, %v1409
        %v1411 = vrot.slane %v1406, %v1410
        %v1417 = vunpack.c.l.b16 %v1402
        %v1418 = vunpack.c.l.b16 %v1403
        %v1419 = vunpack.c.l.b16 %v1404
        %v1420 = vunpack.c.l.b16 %v1405
        %v1421 = vpack.c.b16 %v1418, %v1417
        %v1422 = vpack.c.b16 %v1420, %v1419
        %v1426 = vsel %vm479, %v1401, 0
        %1428 = vmatprep.subr.bf16.mxu0 0
        %1429 = vmatpush1.bf16.msra.mxu0 %v1421
        %1430 = vmatprep.subr.bf16.mxu0 0
        %1431 = vmatpush1.bf16.msra.mxu0 %v1422
        %1432 = vmatprep.subr.bf16.mxu0 0
        %1433 = vmatpush1.bf16.msra.mxu0 0
        %1434 = vmatprep.subr.bf16.mxu0 0
        %1435 = vmatpush1.bf16.msra.mxu0 0
        %1436 = vmatprep.subr.bf16.mxu0 0
        %1437 = vmatpush1.bf16.msra.mxu0 0
        %1438 = vmatprep.subr.bf16.mxu0 0
        %1439 = vmatpush1.bf16.msra.mxu0 0
        %1440 = vmatprep.subr.bf16.mxu0 0
        %1441 = vmatpush1.bf16.msra.mxu0 0
        %1442 = vmatprep.subr.bf16.mxu0 0
        %1443 = vmatpush1.bf16.msra.mxu0 0
        %1444 = vmatprep.subr.bf16.mxu0 0
        %1445 = vmatpush1.bf16.msra.mxu0 0
        %1446 = vmatprep.subr.bf16.mxu0 0
        %1447 = vmatpush1.bf16.msra.mxu0 0
        %1448 = vmatprep.subr.bf16.mxu0 0
        %1449 = vmatpush1.bf16.msra.mxu0 0
        %1450 = vmatprep.subr.bf16.mxu0 0
        %1451 = vmatpush1.bf16.msra.mxu0 0
        %1452 = vmatprep.subr.bf16.mxu0 0
        %1453 = vmatpush1.bf16.msra.mxu0 0
        %1454 = vmatprep.subr.bf16.mxu0 0
        %1455 = vmatpush1.bf16.msra.mxu0 0
        %1456 = vmatprep.subr.bf16.mxu0 0
        %1457 = vmatpush1.bf16.msra.mxu0 0
        %1458 = vmatprep.subr.bf16.mxu0 0
        %1459 = vmatpush1.bf16.msra.mxu0 0
        %1460 = vmatprep.mubr.bf16.mxu0 0
        %1461 = vmatmul.mubr.bf16.gmra.mrb[0].mxu0 %v1426
        %v1462 = vpop.f32.mrb[0].mxu0
        %v1463 = vadd.f32 %v1411, %v1462
        %v1464 = vpop.f32.mrb[0].mxu0
        %v1465 = vpop.f32.mrb[0].mxu0
        %v1466 = vadd.f32 %v1411, %v1465
        %v1467 = vpop.f32.mrb[0].mxu0
        %1468 = vdwg.mxu0
        %v1469 = vmax.f32 %v1463, 0.0
        %v1470 = vmax.f32 %v1466, 0.0
        %v1471 = vpack.c.bf16 %v1470, %v1469
        %v1472 = vld [vmem:[%s10] sm:$0xf]
        %v1473 = vld [vmem:[%s10 + $0x4] sm:$0xf]
        %v1474 = vld [vmem:[%s10 + $0x8] sm:$0xf]
        %v1475 = vld [vmem:[%s10 + $0xc] sm:$0xf]
        %v1476 = vld [vmem:[%s10 + $0x10] sm:$0xf]
        %v1477 = vld [vmem:[%s10 + $0x14] sm:$0xf]
        %v1478 = vld [vmem:[%s10 + $0x18] sm:$0xf]
        %v1479 = vld [vmem:[%s10 + $0x1c] sm:$0xf]
        %v1480 = vld [vmem:[%s10 + $0x20] sm:$0xf]
        %v1481 = vld [vmem:[%s10 + $0x24] sm:$0xf]
        %v1482 = vld [vmem:[%s10 + $0x28] sm:$0xf]
        %v1483 = vld [vmem:[%s10 + $0x2c] sm:$0xf]
        %v1484 = vld [vmem:[%s10 + $0x30] sm:$0xf]
        %v1485 = vld [vmem:[%s10 + $0x34] sm:$0xf]
        %v1486 = vld [vmem:[%s10 + $0x38] sm:$0xf]
        %v1487 = vld [vmem:[%s10 + $0x3c] sm:$0xf]
        %v1488 = vld [vmem:[%s11] sm:$0x1]
        %v1490 = vlaneseq
        %v1491 = vshrl.u32 %v1490, 7
        %v1492 = vsub.s32 0, %v1491
        %v1493 = vrot.slane %v1488, %v1492
        %v1511 = vunpack.c.l.b16 %v1472
        %v1512 = vunpack.c.l.b16 %v1473
        %v1513 = vunpack.c.l.b16 %v1474
        %v1514 = vunpack.c.l.b16 %v1475
        %v1515 = vunpack.c.l.b16 %v1476
        %v1516 = vunpack.c.l.b16 %v1477
        %v1517 = vunpack.c.l.b16 %v1478
        %v1518 = vunpack.c.l.b16 %v1479
        %v1519 = vunpack.c.l.b16 %v1480
        %v1520 = vunpack.c.l.b16 %v1481
        %v1521 = vunpack.c.l.b16 %v1482
        %v1522 = vunpack.c.l.b16 %v1483
        %v1523 = vunpack.c.l.b16 %v1484
        %v1524 = vunpack.c.l.b16 %v1485
        %v1525 = vunpack.c.l.b16 %v1486
        %v1526 = vunpack.c.l.b16 %v1487
        %v1527 = vpack.c.b16 %v1512, %v1511
        %v1528 = vpack.c.b16 %v1514, %v1513
        %v1529 = vpack.c.b16 %v1516, %v1515
        %v1530 = vpack.c.b16 %v1518, %v1517
        %v1531 = vpack.c.b16 %v1520, %v1519
        %v1532 = vpack.c.b16 %v1522, %v1521
        %v1533 = vpack.c.b16 %v1524, %v1523
        %v1534 = vpack.c.b16 %v1526, %v1525
        %1543 = vmatprep.subr.bf16.mxu0 0
        %1544 = vmatpush1.bf16.msra.mxu0 %v1527
        %1545 = vmatprep.subr.bf16.mxu0 0
        %1546 = vmatpush1.bf16.msra.mxu0 %v1528
        %1547 = vmatprep.subr.bf16.mxu0 0
        %1548 = vmatpush1.bf16.msra.mxu0 %v1529
        %1549 = vmatprep.subr.bf16.mxu0 0
        %1550 = vmatpush1.bf16.msra.mxu0 %v1530
        %1551 = vmatprep.subr.bf16.mxu0 0
        %1552 = vmatpush1.bf16.msra.mxu0 %v1531
        %1553 = vmatprep.subr.bf16.mxu0 0
        %1554 = vmatpush1.bf16.msra.mxu0 %v1532
        %1555 = vmatprep.subr.bf16.mxu0 0
        %1556 = vmatpush1.bf16.msra.mxu0 %v1533
        %1557 = vmatprep.subr.bf16.mxu0 0
        %1558 = vmatpush1.bf16.msra.mxu0 %v1534
        %1559 = vmatprep.subr.bf16.mxu0 0
        %1560 = vmatpush1.bf16.msra.mxu0 0
        %1561 = vmatprep.subr.bf16.mxu0 0
        %1562 = vmatpush1.bf16.msra.mxu0 0
        %1563 = vmatprep.subr.bf16.mxu0 0
        %1564 = vmatpush1.bf16.msra.mxu0 0
        %1565 = vmatprep.subr.bf16.mxu0 0
        %1566 = vmatpush1.bf16.msra.mxu0 0
        %1567 = vmatprep.subr.bf16.mxu0 0
        %1568 = vmatpush1.bf16.msra.mxu0 0
        %1569 = vmatprep.subr.bf16.mxu0 0
        %1570 = vmatpush1.bf16.msra.mxu0 0
        %1571 = vmatprep.subr.bf16.mxu0 0
        %1572 = vmatpush1.bf16.msra.mxu0 0
        %1573 = vmatprep.subr.bf16.mxu0 0
        %1574 = vmatpush1.bf16.msra.mxu0 0
        %1575 = vmatprep.mubr.bf16.mxu0 0
        %1576 = vmatmul.mubr.bf16.gmra.mrb[0].mxu0 %v1471
        %v1577 = vpop.f32.mrb[0].mxu0
        %v1578 = vadd.f32 %v1493, %v1577
        %v1579 = vpop.f32.mrb[0].mxu0
        %v1580 = vpop.f32.mrb[0].mxu0
        %v1581 = vadd.f32 %v1493, %v1580
        %v1582 = vpop.f32.mrb[0].mxu0
        %1583 = vdwg.mxu0
        %v1584 = vadd.f32 %v1355, %v1578
        %v1585 = vadd.f32 %v1356, %v1581
        %1586 = vst.msk [vmem:[%s461] sm:$0xff] %vm479, %v1584
        %1587 = vst.msk [vmem:[%s461 + $0x8] sm:$0xff] %vm479, %v1585
        %s1588 = sand.u32 %s309, 1
        %s1589 = scalar_lea.sflag [#allocation6], %s1588
        %s1590 = sand.u32 %s309, 1
        %s1591 = smul.addr %s1590, 16
        %s1592 = scalar_lea.vmem [#allocation9], %s1591
        // Predicated region
        $region84: #{tpu_custom_call.1} parent=67 // pred_check
          %p1593 = pneg %p319
        $region85: #{tpu_custom_call.1} parent=67 // pred_check_branch
          %1595 = sbr.rel (%p1593) target = $region87
        $region86: #{tpu_custom_call.1} parent=67 // pred_region
          %s1596 = smul.u32 2, %s33
          %s1598 = ssub.s32 256, 256
          %1599 = vsyncadd %s1589, %s1598
          %s1600 = smul.addr %s32, 4
          %s1601 = sadd.s32 %s1596, %s1600
          %s1602 = smul.addr %s1601, 128
          %s1603 = scalar_lea.hbm %s12, %s1602
          %s1604 = sshll.u32 %s1592, 4
          %s1605 = int_to_ptr.vmem [resolvable:$true] %s1604
          %1610 = dma.vmem_to_hbm [thread:$0]  %s1605, 256, %s1603, %s1589, 128, 128, 8
        $region87: #{tpu_custom_call.1} parent=67 // pred_fallthru
          _
      $region68: #{tpu_custom_call.1} parent=5 // pred_fallthru
        _
      %p1611 = scmp.le.s32.totalorder 2, %s23
      // Predicated region
      $region88: #{tpu_custom_call.1} parent=5 // pred_check
        %p1612 = pneg %p1611
      $region89: #{tpu_custom_call.1} parent=5 // pred_check_branch
        %1614 = sbr.rel (%p1612) target = $region91
      $region90: #{tpu_custom_call.1} parent=5 // pred_region
        %s1615 = ssub.s32 %s23, 2
        // Predicated region
        $region92: #{tpu_custom_call.1} parent=90 // pred_check
          %p1616 = pneg %p325
        $region93: #{tpu_custom_call.1} parent=90 // pred_check_branch
          %1618 = sbr.rel (%p1616) target = $region95
        $region94: #{tpu_custom_call.1} parent=90 // pred_region
          %s1619 = sand.u32 %s310, 1
          %s1620 = scalar_lea.sflag [#allocation6], %s1619
          %s1621 = sand.u32 %s310, 1
          %s1622 = smul.addr %s1621, 16
          %s1623 = scalar_lea.vmem [#allocation9], %s1622
          %1624 = dma.done %s1620, 256
        $region95: #{tpu_custom_call.1} parent=90 // pred_fallthru
          _
      $region91: #{tpu_custom_call.1} parent=5 // pred_fallthru
        _
    $region6: #{tpu_custom_call.1} parent=1 // loop_footer
      %s27 = sadd.s32 1, %s23
    $region7: #{tpu_custom_call.1} parent=1 // loop_footer_branch
      %22 = sbr.rel target = $region3
    $region8: #{tpu_custom_call.1} parent=1 // loop_exit
      _
    %1625 = vsyncpa [#allocation5], 1
    %s1626 = scalar_lea.sflag [#allocation5], 1
    %1627 = vsyncpa %s1626, 1
    %1628 = vsyncpa [#allocation8], 1
    %1629 = vsyncpa [#allocation6], 1
    %s1630 = scalar_lea.sflag [#allocation6], 1
    %1631 = vsyncpa %s1630, 1

</llo_original>
